<compile_context>
chip_gen: v5e
topology: v5e:2x2
jax: 0.10.0
libtpu: 0.0.40
codegen_flags: <defaults>
</compile_context>

<pallas_src>
import functools

import jax
import jax.numpy as jnp
from jax import lax
from jax.experimental import pallas as pl
from jax.experimental.pallas import tpu as pltpu


def _round_up(x, m):
    return ((x + m - 1) // m) * m


def _tpu_vmem_capacity_bytes(default=64 << 20):
    """Physical VMEM per core; falls back to the most conservative value."""
    try:
        cap = getattr(pltpu.get_tpu_info(), "vmem_capacity_bytes", None)
        if cap:
            return int(cap)
    except Exception:
        pass
    return default


def _con_loss_kernel(q_ref, k_ref, out_ref, qn_bf16_ref, pos_ref, s_ref, *,
                     inv_t, tile, n_valid, needs_mask):
    qt = pl.program_id(1)
    kt = pl.program_id(2)
    inv_t_f = jnp.float32(inv_t)
    # |<qn, kn>| <= 1 for L1-normalized vectors, so logits/T <= 1/T: use that
    # static bound as the logsumexp max (no running max / rescale needed).
    m_static = inv_t_f

    # --- per-query-tile init (first key stripe): normalize q once, fold in
    #     1/T, cache the bf16 copy fed to the MXU on every key stripe. -------
    @pl.when(kt == 0)
    def _():
        q = q_ref[0].astype(jnp.float32)                           # (T, C)
        inv_norm = inv_t_f / jnp.maximum(
            jnp.sum(jnp.abs(q), axis=-1, keepdims=True), 1e-12)
        qn_bf16_ref[...] = (q * inv_norm).astype(jnp.bfloat16)
        s_ref[...] = jnp.zeros_like(s_ref)
        pos_ref[...] = jnp.zeros_like(pos_ref)

    # --- L1-normalize the streamed key stripe (f32) --------------------------
    k = k_ref[0].astype(jnp.float32)                               # (T, C)
    kn = k * (1.0 / jnp.maximum(
        jnp.sum(jnp.abs(k), axis=-1, keepdims=True), 1e-12))

    # --- exact-f32 positive logits (pos / T) for this query tile's rows ------
    @pl.when(kt == qt)
    def _():
        q = q_ref[0].astype(jnp.float32)
        inv_norm = inv_t_f / jnp.maximum(
            jnp.sum(jnp.abs(q), axis=-1, keepdims=True), 1e-12)
        pos_ref[...] = jnp.sum((q * inv_norm) * kn, axis=-1, keepdims=True)

    # --- (T, T) logits stripe on the MXU: bf16 in, f32 acc, already / T ------
    logits = lax.dot_general(
        qn_bf16_ref[...], kn.astype(jnp.bfloat16),
        dimension_numbers=(((1,), (1,)), ((), ())),
        preferred_element_type=jnp.float32)

    if needs_mask:
        col = kt * tile + lax.broadcasted_iota(jnp.int32, (1, tile), 1)
        logits = jnp.where(col < n_valid, logits, jnp.float32(-1e30))

    # Unmasked diagonal == l_pos (the reference's prepended positive column);
    # the masked "-10" slot is re-added at finalization.
    s_ref[...] += jnp.sum(jnp.exp(logits - m_static), axis=-1, keepdims=True)

    # --- finalize on the last key stripe --------------------------------------
    @pl.when(kt == pl.num_programs(2) - 1)
    def _():
        s = s_ref[...] + jnp.exp(jnp.float32(-10.0) * inv_t_f - m_static)
        row_loss = (m_static + jnp.log(s)) - pos_ref[...]          # (T, 1)
        if needs_mask:
            row = qt * tile + lax.broadcasted_iota(jnp.int32, (tile, 1), 0)
            row_loss = jnp.where(row < n_valid, row_loss, 0.0)
        out_ref[...] = jnp.sum(row_loss, keepdims=True).reshape(1, 1, 1)


def final_con_loss(feat_q, feat_k, temperature=0.07, tile=None):
    """feat_q, feat_k: (B, dim, H, W) — NCHW like the PyTorch module.

    Inputs may be f32 or bf16; normalization and accumulation are f32 inside
    the kernel, the (T, T) logits stripes use bf16 MXU operands.
    """
    assert feat_q.shape == feat_k.shape, (feat_q.shape, feat_k.shape)
    # The static logsumexp bound m = 1/T needs exp(pos/T - 1/T) >= exp(-2/T)
    # to stay in f32 range; true for any temperature >= ~0.03.
    assert temperature >= 0.03, "static-bound online softmax assumes T >= 0.03"

    B, C = int(feat_q.shape[0]), int(feat_q.shape[1])
    N = 1
    for d in feat_q.shape[2:]:
        N *= int(d)

    # NCHW -> (B, N, C): feature axis on lanes.
    # TODO(synk): upstream producers should emit channel-last so this HBM
    # transpose of q and k disappears (perf-review item 6).
    q = feat_q.reshape(B, C, N).transpose(0, 2, 1)
    k = feat_k.reshape(B, C, N).transpose(0, 2, 1)

    # Query/key tile: 128-aligned, capped at 512 so the f32 logits/exp
    # temporaries stay ~2 MiB and the 256x256 MXU sees no partial tiles.
    n128 = _round_up(N, 128)
    if tile is None:
        tile = min(512, n128)
    tile = min(_round_up(int(tile), 128), n128)

    np_ = _round_up(N, tile)          # padded patch count
    needs_mask = np_ != N
    if needs_mask:
        q = jnp.pad(q, ((0, 0), (0, np_ - N), (0, 0)))
        k = jnp.pad(k, ((0, 0), (0, np_ - N), (0, 0)))
    nt = np_ // tile

    # VMEM footprint model (item 5): double-buffered q/k blocks + bf16 qn
    # scratch + lane-padded (tile,1) f32 scratches + f32 logits/exp temps.
    in_bytes = jnp.dtype(q.dtype).itemsize
    est = (4 * tile * C * in_bytes          # q + k blocks, double-buffered
           + tile * C * 2                   # bf16 qn scratch
           + 2 * tile * 128 * 4             # pos / s scratch, lane-padded
           + 2 * tile * tile * 4)           # logits + exp temporaries
    vmem_cap = _tpu_vmem_capacity_bytes()
    vmem_limit = min(int(0.9 * vmem_cap), max(2 * est, 32 << 20))

    kernel = functools.partial(
        _con_loss_kernel, inv_t=1.0 / float(temperature), tile=tile,
        n_valid=N, needs_mask=needs_mask)

    partials = pl.pallas_call(
        kernel,
        out_shape=jax.ShapeDtypeStruct((B * nt, 1, 1), jnp.float32),
        grid_spec=pltpu.PrefetchScalarGridSpec(
            num_scalar_prefetch=0,
            grid=(B, nt, nt),
            in_specs=[
                # q tile resident across the key-stripe (reduction) axis.
                pl.BlockSpec((1, tile, C), lambda b, qt, kt: (b, qt, 0)),
                # k stripes stream along the reduction axis.
                pl.BlockSpec((1, tile, C), lambda b, qt, kt: (b, kt, 0)),
            ],
            out_specs=pl.BlockSpec((1, 1, 1),
                                   lambda b, qt, kt: (b * nt + qt, 0, 0)),
            scratch_shapes=[
                pltpu.VMEM((tile, C), jnp.bfloat16),  # L1-normed, 1/T-scaled q
                pltpu.VMEM((tile, 1), jnp.float32),   # exact pos/T per row
                pltpu.VMEM((tile, 1), jnp.float32),   # running sum of exp
            ],
        ),
        compiler_params=pltpu.CompilerParams(
            dimension_semantics=("parallel", "parallel", "arbitrary"),
            vmem_limit_bytes=vmem_limit,
        ),
        cost_estimate=pl.CostEstimate(
            flops=2 * B * np_ * np_ * C,
            transcendentals=B * np_ * np_,
            bytes_accessed=2 * B * np_ * C * in_bytes + B * nt * 4,
        ),
    )(q, k)

    # CrossEntropyLoss default reduction: mean over the B*N (real) rows.
    return jnp.sum(partials) / jnp.float32(B * N)


def _reference_loss(feat_q, feat_k, temperature=0.07):
    """Pure-JAX (f32) reference mirroring the PyTorch forward."""
    B, C = feat_q.shape[0], feat_q.shape[1]
    N = 1
    for d in feat_q.shape[2:]:
        N *= int(d)
    q = feat_q.reshape(B, C, N).transpose(0, 2, 1).astype(jnp.float32)
    k = feat_k.reshape(B, C, N).transpose(0, 2, 1).astype(jnp.float32)
    q = q / jnp.maximum(jnp.sum(jnp.abs(q), axis=-1, keepdims=True), 1e-12)
    k = k / jnp.maximum(jnp.sum(jnp.abs(k), axis=-1, keepdims=True), 1e-12)
    l_pos = jnp.sum(q * k, axis=-1).reshape(-1, 1)              # (B*N, 1)
    l_neg = jnp.einsum("bnd,bmd->bnm", q, k)                    # (B, N, N)
    eye = jnp.eye(N, dtype=bool)[None]
    l_neg = jnp.where(eye, -10.0, l_neg).reshape(-1, N)         # (B*N, N)
    out = jnp.concatenate([l_pos, l_neg], axis=1) / temperature
    return jnp.mean(jax.nn.logsumexp(out, axis=1) - out[:, 0])


if __name__ == "__main__":
    root = jax.random.PRNGKey(0)
    cases = [
        # (shape NCHW, forced tile)
        ((2, 32, 16, 16), None),   # N=256, tile=256 -> single tile per batch
        ((2, 32, 16, 16), 128),    # N=256, tile=128 -> 2x2 tiles (qt != kt)
        ((2, 32, 10, 10), None),   # N=100 -> padded to 128, masked rows/keys
        ((2, 32, 12, 15), 128),    # N=180 -> padded to 256, 2x2 tiles + mask
    ]
    for i, (shape, tile) in enumerate(cases):
        kq, kk = jax.random.split(jax.random.fold_in(root, i))
        feat_q = jax.random.normal(kq, shape, dtype=jnp.float32)
        feat_k = jax.random.normal(kk, shape, dtype=jnp.float32)

        ref = _reference_loss(feat_q, feat_k, temperature=0.07)
        loss = final_con_loss(feat_q, feat_k, temperature=0.07, tile=tile)
        loss = jax.block_until_ready(loss)
        # bf16 MXU operands (f32 accumulation) introduce ~1e-4-level error.
        assert jnp.allclose(loss, ref, atol=2e-3, rtol=2e-3), (
            shape, tile, float(loss), float(ref))
    print("KERNEL_OK")
</pallas_src>

<mosaic_0001>
module attributes {stable_mosaic.version = 11 : i64} {
  func.func @_con_loss_kernel(%arg0: i32, %arg1: i32, %arg2: i32, %arg3: memref<1x256x32xf32, #tpu.memory_space<vmem>>, %arg4: memref<1x256x32xf32, #tpu.memory_space<vmem>>, %arg5: memref<1x1x1xf32, #tpu.memory_space<vmem>>, %arg6: memref<256x32xbf16, #tpu.memory_space<vmem>>, %arg7: memref<256x1xf32, #tpu.memory_space<vmem>>, %arg8: memref<256x1xf32, #tpu.memory_space<vmem>>) attributes {dimension_semantics = [#tpu.dimension_semantics<parallel>, #tpu.dimension_semantics<parallel>, #tpu.dimension_semantics<arbitrary>], iteration_bounds = array<i64: 2, 1, 1>, scalar_prefetch = 0 : i64, scratch_operands = 3 : i64, tpu.core_type = #tpu.core_type<tc>, window_params = [{transform_indices = @transform_0, window_bounds = array<i64: 1, 256, 32>}, {transform_indices = @transform_1, window_bounds = array<i64: 1, 256, 32>}, {transform_indices = @transform_2, window_bounds = array<i64: 1, 1, 1>}]} {
    %c0_i32 = arith.constant 0 : i32
    %0 = arith.cmpi eq, %arg2, %c0_i32 : i32
    %1 = arith.extui %0 : i1 to i32
    %cst = arith.constant 14.2857141 : f32
    %c0_i32_0 = arith.constant 0 : i32
    %2 = arith.cmpi ne, %1, %c0_i32_0 : i32
    scf.if %2 {
      %c0_20 = arith.constant 0 : index
      %c0_21 = arith.constant 0 : index
      %c0_22 = arith.constant 0 : index
      %31 = vector.load %arg3[%c0_20, %c0_21, %c0_22] : memref<1x256x32xf32, #tpu.memory_space<vmem>>, vector<1x256x32xf32>
      %32 = vector.shape_cast %31 : vector<1x256x32xf32> to vector<256x32xf32>
      %33 = math.absf %32 : vector<256x32xf32>
      %cst_23 = arith.constant dense<0.000000e+00> : vector<256xf32>
      %34 = vector.multi_reduction <add>, %33, %cst_23 [1] : vector<256x32xf32> to vector<256xf32>
      %35 = vector.shape_cast %34 : vector<256xf32> to vector<256x1xf32>
      %cst_24 = arith.constant 9.99999996E-13 : f32
      %36 = vector.broadcast %cst_24 : f32 to vector<256x1xf32>
      %37 = arith.maximumf %35, %36 : vector<256x1xf32>
      %38 = vector.broadcast %cst : f32 to vector<256x1xf32>
      %39 = arith.divf %38, %37 : vector<256x1xf32>
      %40 = vector.broadcast %39 : vector<256x1xf32> to vector<256x32xf32>
      %41 = arith.mulf %32, %40 : vector<256x32xf32>
      %42 = arith.truncf %41 : vector<256x32xf32> to vector<256x32xbf16>
      %c0_25 = arith.constant 0 : index
      %c0_26 = arith.constant 0 : index
      %43 = vector.load %arg6[%c0_25, %c0_26] : memref<256x32xbf16, #tpu.memory_space<vmem>>, vector<256x32xbf16>
      tpu.vector_store %arg6[%c0_25, %c0_26], %42 {strides = array<i32>} : memref<256x32xbf16, #tpu.memory_space<vmem>>, vector<256x32xbf16>,
      %cst_27 = arith.constant 0.000000e+00 : f32
      %44 = vector.broadcast %cst_27 : f32 to vector<256x1xf32>
      %c0_28 = arith.constant 0 : index
      %c0_29 = arith.constant 0 : index
      %45 = vector.load %arg8[%c0_28, %c0_29] : memref<256x1xf32, #tpu.memory_space<vmem>>, vector<256x1xf32>
      tpu.vector_store %arg8[%c0_28, %c0_29], %44 {strides = array<i32>} : memref<256x1xf32, #tpu.memory_space<vmem>>, vector<256x1xf32>,
      %cst_30 = arith.constant 0.000000e+00 : f32
      %46 = vector.broadcast %cst_30 : f32 to vector<256x1xf32>
      %c0_31 = arith.constant 0 : index
      %c0_32 = arith.constant 0 : index
      %47 = vector.load %arg7[%c0_31, %c0_32] : memref<256x1xf32, #tpu.memory_space<vmem>>, vector<256x1xf32>
      tpu.vector_store %arg7[%c0_31, %c0_32], %46 {strides = array<i32>} : memref<256x1xf32, #tpu.memory_space<vmem>>, vector<256x1xf32>,
    } else {
    }
    %c0 = arith.constant 0 : index
    %c0_1 = arith.constant 0 : index
    %c0_2 = arith.constant 0 : index
    %3 = vector.load %arg4[%c0, %c0_1, %c0_2] : memref<1x256x32xf32, #tpu.memory_space<vmem>>, vector<1x256x32xf32>
    %4 = vector.shape_cast %3 : vector<1x256x32xf32> to vector<256x32xf32>
    %5 = math.absf %4 : vector<256x32xf32>
    %cst_3 = arith.constant dense<0.000000e+00> : vector<256xf32>
    %6 = vector.multi_reduction <add>, %5, %cst_3 [1] : vector<256x32xf32> to vector<256xf32>
    %7 = vector.shape_cast %6 : vector<256xf32> to vector<256x1xf32>
    %cst_4 = arith.constant 9.99999996E-13 : f32
    %8 = vector.broadcast %cst_4 : f32 to vector<256x1xf32>
    %9 = arith.maximumf %7, %8 : vector<256x1xf32>
    %cst_5 = arith.constant 1.000000e+00 : f32
    %10 = vector.broadcast %cst_5 : f32 to vector<256x1xf32>
    %11 = arith.divf %10, %9 : vector<256x1xf32>
    %12 = vector.broadcast %11 : vector<256x1xf32> to vector<256x32xf32>
    %13 = arith.mulf %4, %12 : vector<256x32xf32>
    %14 = arith.cmpi eq, %arg2, %arg1 : i32
    %15 = arith.extui %14 : i1 to i32
    %cst_6 = arith.constant 14.2857141 : f32
    %c0_i32_7 = arith.constant 0 : i32
    %16 = arith.cmpi ne, %15, %c0_i32_7 : i32
    scf.if %16 {
      %c0_20 = arith.constant 0 : index
      %c0_21 = arith.constant 0 : index
      %c0_22 = arith.constant 0 : index
      %31 = vector.load %arg3[%c0_20, %c0_21, %c0_22] : memref<1x256x32xf32, #tpu.memory_space<vmem>>, vector<1x256x32xf32>
      %32 = vector.shape_cast %31 : vector<1x256x32xf32> to vector<256x32xf32>
      %33 = math.absf %32 : vector<256x32xf32>
      %cst_23 = arith.constant dense<0.000000e+00> : vector<256xf32>
      %34 = vector.multi_reduction <add>, %33, %cst_23 [1] : vector<256x32xf32> to vector<256xf32>
      %35 = vector.shape_cast %34 : vector<256xf32> to vector<256x1xf32>
      %cst_24 = arith.constant 9.99999996E-13 : f32
      %36 = vector.broadcast %cst_24 : f32 to vector<256x1xf32>
      %37 = arith.maximumf %35, %36 : vector<256x1xf32>
      %38 = vector.broadcast %cst_6 : f32 to vector<256x1xf32>
      %39 = arith.divf %38, %37 : vector<256x1xf32>
      %40 = vector.broadcast %39 : vector<256x1xf32> to vector<256x32xf32>
      %41 = arith.mulf %32, %40 : vector<256x32xf32>
      %42 = arith.mulf %41, %13 : vector<256x32xf32>
      %cst_25 = arith.constant dense<0.000000e+00> : vector<256xf32>
      %43 = vector.multi_reduction <add>, %42, %cst_25 [1] : vector<256x32xf32> to vector<256xf32>
      %44 = vector.shape_cast %43 : vector<256xf32> to vector<256x1xf32>
      %c0_26 = arith.constant 0 : index
      %c0_27 = arith.constant 0 : index
      %45 = vector.load %arg7[%c0_26, %c0_27] : memref<256x1xf32, #tpu.memory_space<vmem>>, vector<256x1xf32>
      tpu.vector_store %arg7[%c0_26, %c0_27], %44 {strides = array<i32>} : memref<256x1xf32, #tpu.memory_space<vmem>>, vector<256x1xf32>,
    } else {
    }
    %c0_8 = arith.constant 0 : index
    %c0_9 = arith.constant 0 : index
    %17 = vector.load %arg6[%c0_8, %c0_9] : memref<256x32xbf16, #tpu.memory_space<vmem>>, vector<256x32xbf16>
    %18 = arith.truncf %13 : vector<256x32xf32> to vector<256x32xbf16>
    %cst_10 = arith.constant dense<0.000000e+00> : vector<256x256xf32>
    %19 = tpu.matmul %17, %18, %cst_10 {dimension_numbers = #tpu.dot_dimension_numbers<[1], [1], [0], [0], [0, 0, 1, 0], [], []>} : vector<256x32xbf16>, vector<256x32xbf16>, vector<256x256xf32> -> vector<256x256xf32>
    %c0_11 = arith.constant 0 : index
    %c0_12 = arith.constant 0 : index
    %20 = vector.load %arg8[%c0_11, %c0_12] : memref<256x1xf32, #tpu.memory_space<vmem>>, vector<256x1xf32>
    %cst_13 = arith.constant 14.2857141 : f32
    %21 = vector.broadcast %cst_13 : f32 to vector<256x256xf32>
    %22 = arith.subf %19, %21 : vector<256x256xf32>
    %23 = math.exp %22 : vector<256x256xf32>
    %cst_14 = arith.constant dense<0.000000e+00> : vector<256xf32>
    %24 = vector.multi_reduction <add>, %23, %cst_14 [1] : vector<256x256xf32> to vector<256xf32>
    %25 = vector.shape_cast %24 : vector<256xf32> to vector<256x1xf32>
    %26 = arith.addf %20, %25 : vector<256x1xf32>
    %c0_15 = arith.constant 0 : index
    %c0_16 = arith.constant 0 : index
    %27 = vector.load %arg8[%c0_15, %c0_16] : memref<256x1xf32, #tpu.memory_space<vmem>>, vector<256x1xf32>
    tpu.vector_store %arg8[%c0_15, %c0_16], %26 {strides = array<i32>} : memref<256x1xf32, #tpu.memory_space<vmem>>, vector<256x1xf32>,
    %c0_i32_17 = arith.constant 0 : i32
    %28 = arith.cmpi eq, %arg2, %c0_i32_17 : i32
    %29 = arith.extui %28 : i1 to i32
    %cst_18 = arith.constant 14.2857141 : f32
    %c0_i32_19 = arith.constant 0 : i32
    %30 = arith.cmpi ne, %29, %c0_i32_19 : i32
    scf.if %30 {
      %c0_20 = arith.constant 0 : index
      %c0_21 = arith.constant 0 : index
      %31 = vector.load %arg8[%c0_20, %c0_21] : memref<256x1xf32, #tpu.memory_space<vmem>>, vector<256x1xf32>
      %cst_22 = arith.constant -1.000000e+01 : f32
      %32 = arith.mulf %cst_22, %cst_18 : f32
      %33 = arith.subf %32, %cst_18 : f32
      %34 = math.exp %33 : f32
      %35 = vector.broadcast %34 : f32 to vector<256x1xf32>
      %36 = arith.addf %31, %35 : vector<256x1xf32>
      %37 = math.log %36 : vector<256x1xf32>
      %38 = vector.broadcast %cst_18 : f32 to vector<256x1xf32>
      %39 = arith.addf %38, %37 : vector<256x1xf32>
      %c0_23 = arith.constant 0 : index
      %c0_24 = arith.constant 0 : index
      %40 = vector.load %arg7[%c0_23, %c0_24] : memref<256x1xf32, #tpu.memory_space<vmem>>, vector<256x1xf32>
      %41 = arith.subf %39, %40 : vector<256x1xf32>
      %42 = vector.shape_cast %41 : vector<256x1xf32> to vector<1x256x1xf32>
      %cst_25 = arith.constant dense<0.000000e+00> : vector<1xf32>
      %43 = vector.multi_reduction <add>, %42, %cst_25 [1, 2] : vector<1x256x1xf32> to vector<1xf32>
      %44 = vector.shape_cast %43 : vector<1xf32> to vector<1x1x1xf32>
      %45 = vector.extract %44[0, 0, 0] : f32 from vector<1x1x1xf32>
      %46 = vector.broadcast %45 : f32 to vector<1x1xf32>
      %47 = vector.shape_cast %46 : vector<1x1xf32> to vector<1x1x1xf32>
      %c0_26 = arith.constant 0 : index
      %c0_27 = arith.constant 0 : index
      %c0_28 = arith.constant 0 : index
      %48 = vector.load %arg5[%c0_26, %c0_27, %c0_28] : memref<1x1x1xf32, #tpu.memory_space<vmem>>, vector<1x1x1xf32>
      tpu.vector_store %arg5[%c0_26, %c0_27, %c0_28], %47 {strides = array<i32>} : memref<1x1x1xf32, #tpu.memory_space<vmem>>, vector<1x1x1xf32>,
    } else {
    }
    return
  }
  func.func @transform_0(%arg0: i32, %arg1: i32, %arg2: i32) -> (i32, i32, i32) {
    %c0_i32 = arith.constant 0 : i32
    %c0_i32_0 = arith.constant 0 : i32
    return %arg0, %arg1, %c0_i32 : i32, i32, i32
  }
  func.func @transform_1(%arg0: i32, %arg1: i32, %arg2: i32) -> (i32, i32, i32) {
    %c0_i32 = arith.constant 0 : i32
    %c0_i32_0 = arith.constant 0 : i32
    return %arg0, %arg2, %c0_i32 : i32, i32, i32
  }
  func.func @transform_2(%arg0: i32, %arg1: i32, %arg2: i32) -> (i32, i32, i32) {
    %c1_i32 = arith.constant 1 : i32
    %0 = arith.muli %arg0, %c1_i32 : i32
    %1 = arith.addi %0, %arg1 : i32
    %c0_i32 = arith.constant 0 : i32
    %c0_i32_0 = arith.constant 0 : i32
    %c0_i32_1 = arith.constant 0 : i32
    return %1, %c0_i32, %c0_i32_0 : i32, i32, i32
  }
}

</mosaic_0001>

<llo_original>
// kernel: tpu_custom_call.1
$region0: #{tpu_custom_call.1}
  #allocation0 [shape = 'u32[]', space=smem, size = 0x4, offset = 0x4, fixed_abs, tag = 'smem constant byte address 0x4 - core index']
  #allocation1 [shape = 'u32[72,128]{1,0:T(1,128)}', space=vmem, size = 0x9000, scoped, tag = 'internal scratch']
  #allocation2 [shape = 'bf16[256,32]{1,0:T(8,128)(2,1)}', space=vmem, size = 0x10000, scoped, tag = 'scratch operand']
  #allocation3 [shape = 'f32[256,1]{1,0:T(8,128)}', space=vmem, size = 0x20000, scoped, tag = 'scratch operand']
  #allocation4 [shape = 'f32[256,1]{1,0:T(8,128)}', space=vmem, size = 0x20000, scoped, tag = 'scratch operand']
  %s0 = inlined_call_operand.vmem [shape: f32[2,256,32], index: 0, kind: input, shape index: {}]
  %s1 = inlined_call_operand.vmem [shape: f32[2,256,32], index: 1, kind: input, shape index: {}]
  %s2 = inlined_call_operand.vmem [shape: f32[2,1,1], index: 2, kind: output, shape index: {}]
  %s3 = sld [smem:[#allocation0]]
  $region53: #{tpu_custom_call.1} parent=0
    _
  %s5 = ssub.s32 1, %s3
  %s6 = scalar_select 0, %s5, %s3
  loop: start=0, step=1, limit=4
  $region2: #{tpu_custom_call.1} parent=0 // loop_pre_header
    _
  $region3: #{tpu_custom_call.1} parent=0 // loop_header
    %s8 = sphi 0, %s12
    %p9 = scmp.ge.s32.totalorder %s8, 4
    %s15 = sphi 0, %s34
    %s16 = sphi 0, %s30
    %s17 = sphi 0, %s26
    %s18 = sphi 0, %s15
    %s19 = sphi 0, %s16
    %s20 = sphi 0, %s17
    %s21 = sphi 0, %s18
    %s22 = sphi 0, %s19
    %s23 = sphi 0, %s20
    %s39 = sphi 0, %s41
    %s42 = sphi 0, %s39
    %s43 = sphi 0, %s42
    %s59 = sphi 0, %s43
    %s67 = sphi 0, %s69
    %s70 = sphi 0, %s67
    %s71 = sphi 0, %s70
    %s87 = sphi 0, %s71
    %s95 = sphi 0, %s97
    %s98 = sphi 0, %s95
    %s99 = sphi 0, %s98
    %s115 = sphi 0, %s99
  $region4: #{tpu_custom_call.1} parent=0 // loop_header_branch
    %11 = sbr.rel (%p9) target = $region8
  $region5: #{tpu_custom_call.1} parent=0 // loop_body
    %s13 = ssub.s32 %s8, 1
    %s14 = ssub.s32 %s8, 2
    %s24 = sadd.s32 1, %s17
    %p25 = scmp.ge.s32.totalorder %s24, 1
    %s26 = scalar_select %p25, 0, %s24
    %s27 = sadd.s32 1, %s16
    %s28 = scalar_select %p25, %s27, %s16
    %p29 = scmp.ge.s32.totalorder %s28, 1
    %s30 = scalar_select %p29, 0, %s28
    %s31 = sadd.s32 1, %s15
    %s32 = scalar_select %p29, %s31, %s15
    %p33 = scmp.ge.s32.totalorder %s32, 2
    %s34 = scalar_select %p33, 0, %s32
    %s35 = ssub.s32 %s15, %s34
    %s36 = ssub.s32 %s16, %s30
    %s37 = sor.u32 %s35, %s36
    %p38 = scmp.eq.s32.totalorder %s37, 0
    %s40 = sadd.s32 %s39, 1
    %s41 = scalar_select %p38, %s39, %s40
    %p44 = pneg %p38
    %p45 = scmp.eq.s32.totalorder %s8, 1
    %p46 = por %p44, %p45
    %p47 = scmp.ne.s32.totalorder %s39, %s42
    %p48 = scmp.eq.s32.totalorder %s8, 0
    %p49 = por %p47, %p48
    %p50 = scmp.ne.s32.totalorder %s39, %s42
    %p51 = scmp.eq.s32.totalorder %s13, 1
    %p52 = por %p50, %p51
    %p53 = scmp.ne.s32.totalorder %s42, %s43
    %p54 = scmp.eq.s32.totalorder %s13, 0
    %p55 = por %p53, %p54
    %p56 = scmp.ne.s32.totalorder %s42, %s43
    %p57 = scmp.eq.s32.totalorder %s14, 1
    %p58 = por %p56, %p57
    %p60 = scmp.ne.s32.totalorder %s43, %s59
    %p61 = scmp.eq.s32.totalorder %s14, 0
    %p62 = por %p60, %p61
    %s63 = ssub.s32 %s15, %s34
    %s64 = ssub.s32 %s17, %s26
    %s65 = sor.u32 %s63, %s64
    %p66 = scmp.eq.s32.totalorder %s65, 0
    %s68 = sadd.s32 %s67, 1
    %s69 = scalar_select %p66, %s67, %s68
    %p72 = pneg %p66
    %p73 = scmp.eq.s32.totalorder %s8, 1
    %p74 = por %p72, %p73
    %p75 = scmp.ne.s32.totalorder %s67, %s70
    %p76 = scmp.eq.s32.totalorder %s8, 0
    %p77 = por %p75, %p76
    %p78 = scmp.ne.s32.totalorder %s67, %s70
    %p79 = scmp.eq.s32.totalorder %s13, 1
    %p80 = por %p78, %p79
    %p81 = scmp.ne.s32.totalorder %s70, %s71
    %p82 = scmp.eq.s32.totalorder %s13, 0
    %p83 = por %p81, %p82
    %p84 = scmp.ne.s32.totalorder %s70, %s71
    %p85 = scmp.eq.s32.totalorder %s14, 1
    %p86 = por %p84, %p85
    %p88 = scmp.ne.s32.totalorder %s71, %s87
    %p89 = scmp.eq.s32.totalorder %s14, 0
    %p90 = por %p88, %p89
    %s91 = sadd.s32 %s15, %s16
    %s92 = sadd.s32 %s34, %s30
    %s93 = ssub.s32 %s91, %s92
    %p94 = scmp.eq.s32.totalorder %s93, 0
    %s96 = sadd.s32 %s95, 1
    %s97 = scalar_select %p94, %s95, %s96
    %p100 = pneg %p94
    %p101 = scmp.eq.s32.totalorder %s8, 1
    %p102 = por %p100, %p101
    %p103 = scmp.ne.s32.totalorder %s95, %s98
    %p104 = scmp.eq.s32.totalorder %s8, 0
    %p105 = por %p103, %p104
    %p106 = scmp.ne.s32.totalorder %s95, %s98
    %p107 = scmp.eq.s32.totalorder %s13, 1
    %p108 = por %p106, %p107
    %p109 = scmp.ne.s32.totalorder %s98, %s99
    %p110 = scmp.eq.s32.totalorder %s13, 0
    %p111 = por %p109, %p110
    %p112 = scmp.ne.s32.totalorder %s98, %s99
    %p113 = scmp.eq.s32.totalorder %s14, 1
    %p114 = por %p112, %p113
    %p116 = scmp.ne.s32.totalorder %s99, %s115
    %p117 = scmp.eq.s32.totalorder %s14, 0
    %p118 = por %p116, %p117
    %p119 = scmp.le.s32.totalorder 1, %s8
    %p120 = scmp.lt.s32.totalorder %s8, 3
    %p121 = pnand %p119, %p120
    %p122 = pneg %p121
    // Predicated region
    $region9: #{tpu_custom_call.1} parent=5 // pred_check
      _
    $region10: #{tpu_custom_call.1} parent=5 // pred_check_branch
      %124 = sbr.rel (%p121) target = $region12
    $region11: #{tpu_custom_call.1} parent=5 // pred_region
      %s125 = ssub.s32 %s8, 1
    $region12: #{tpu_custom_call.1} parent=5 // pred_fallthru
      _
    %p126 = scmp.lt.s32.totalorder %s8, 2
    // Predicated region
    $region13: #{tpu_custom_call.1} parent=5 // pred_check
      %p127 = pneg %p126
    $region14: #{tpu_custom_call.1} parent=5 // pred_check_branch
      %129 = sbr.rel (%p127) target = $region16
    $region15: #{tpu_custom_call.1} parent=5 // pred_region
      // Predicated region
      $region17: #{tpu_custom_call.1} parent=15 // pred_check
        %p130 = pneg %p49
      $region18: #{tpu_custom_call.1} parent=15 // pred_check_branch
        %132 = sbr.rel (%p130) target = $region20
      $region19: #{tpu_custom_call.1} parent=15 // pred_region
        %s133 = smul.u32 32, %s16
        %p134 = scmp.lt.s32.totalorder %s15, 1
        %s135 = scalar_select %p134, %s15, 1
        %p136 = scmp.lt.s32.totalorder %s133, 31
        %s137 = scalar_select %p136, %s133, 31
        %s138 = smul.addr %s135, 32
        %s139 = sadd.s32 %s137, %s138
        %s140 = smul.addr %s139, 8
        %s141 = scalar_lea.vmem %s0, %s140
        %s142 = smul.u32 32, %s16
      $region20: #{tpu_custom_call.1} parent=15 // pred_fallthru
        _
      // Predicated region
      $region21: #{tpu_custom_call.1} parent=15 // pred_check
        %p143 = pneg %p77
      $region22: #{tpu_custom_call.1} parent=15 // pred_check_branch
        %145 = sbr.rel (%p143) target = $region24
      $region23: #{tpu_custom_call.1} parent=15 // pred_region
        %s146 = smul.u32 32, %s17
        %p147 = scmp.lt.s32.totalorder %s15, 1
        %s148 = scalar_select %p147, %s15, 1
        %p149 = scmp.lt.s32.totalorder %s146, 31
        %s150 = scalar_select %p149, %s146, 31
        %s151 = smul.addr %s148, 32
        %s152 = sadd.s32 %s150, %s151
        %s153 = smul.addr %s152, 8
        %s154 = scalar_lea.vmem %s1, %s153
        %s155 = smul.u32 32, %s17
      $region24: #{tpu_custom_call.1} parent=15 // pred_fallthru
        _
    $region16: #{tpu_custom_call.1} parent=5 // pred_fallthru
      _
    %p156 = scmp.le.s32.totalorder 1, %s8
    %p157 = scmp.lt.s32.totalorder %s8, 3
    %p158 = pnand %p156, %p157
    %p159 = pneg %p158
    // Predicated region
    $region25: #{tpu_custom_call.1} parent=5 // pred_check
      _
    $region26: #{tpu_custom_call.1} parent=5 // pred_check_branch
      %161 = sbr.rel (%p158) target = $region28
    $region27: #{tpu_custom_call.1} parent=5 // pred_region
      %s162 = ssub.s32 %s8, 1
      %s163 = smul.u32 32, %s19
      %p164 = scmp.lt.s32.totalorder %s18, 1
      %s165 = scalar_select %p164, %s18, 1
      %p166 = scmp.lt.s32.totalorder %s163, 31
      %s167 = scalar_select %p166, %s163, 31
      %s168 = smul.addr %s165, 32
      %s169 = sadd.s32 %s167, %s168
      %s170 = smul.addr %s169, 8
      %s171 = scalar_lea.vmem %s0, %s170
      %p172 = pneg %p55
      %p173 = pneg %p52
      %s174 = smul.u32 32, %s20
      %p175 = scmp.lt.s32.totalorder %s18, 1
      %s176 = scalar_select %p175, %s18, 1
      %p177 = scmp.lt.s32.totalorder %s174, 31
      %s178 = scalar_select %p177, %s174, 31
      %s179 = smul.addr %s176, 32
      %s180 = sadd.s32 %s178, %s179
      %s181 = smul.addr %s180, 8
      %s182 = scalar_lea.vmem %s1, %s181
      %p183 = pneg %p83
      %p184 = pneg %p80
      %p185 = pneg %p111
      %p186 = pneg %p108
      %s187 = sadd.s32 %s18, %s19
      %p188 = scmp.lt.s32.totalorder %s187, 1
      %s189 = scalar_select %p188, %s187, 1
      %s190 = scalar_lea.vmem %s2, %s189
      %s191 = smul.u32 32, %s19
      %p192 = scmp.lt.s32.totalorder %s18, 1
      %s193 = scalar_select %p192, %s18, 1
      %p194 = scmp.lt.s32.totalorder %s191, 31
      %s195 = scalar_select %p194, %s191, 31
      %s196 = smul.addr %s193, 32
      %s197 = sadd.s32 %s195, %s196
      %s198 = smul.addr %s197, 8
      %s199 = scalar_lea.vmem %s0, %s198
      %s200 = smul.u32 32, %s19
      %s201 = smul.u32 32, %s20
      %p202 = scmp.lt.s32.totalorder %s18, 1
      %s203 = scalar_select %p202, %s18, 1
      %p204 = scmp.lt.s32.totalorder %s201, 31
      %s205 = scalar_select %p204, %s201, 31
      %s206 = smul.addr %s203, 32
      %s207 = sadd.s32 %s205, %s206
      %s208 = smul.addr %s207, 8
      %s209 = scalar_lea.vmem %s1, %s208
      %s210 = smul.u32 32, %s20
      %s211 = sadd.s32 %s18, %s19
      %p212 = scmp.lt.s32.totalorder %s211, 1
      %s213 = scalar_select %p212, %s211, 1
      %s214 = scalar_lea.vmem %s2, %s213
      %s215 = sadd.s32 %s18, %s19
      %p216 = scmp.eq.s32.totalorder %s20, 0
      // Predicated region
      $region29: #{tpu_custom_call.1} parent=27 // pred_check
        %p217 = pneg %p216
      $region30: #{tpu_custom_call.1} parent=27 // pred_check_branch
        %219 = sbr.rel (%p217) target = $region32
      $region31: #{tpu_custom_call.1} parent=27 // pred_region
        %v220 = vld [vmem:[%s199] sm:$0xff]
        %v221 = vld [vmem:[%s199 + $0x8] sm:$0xff]
        %v222 = vld [vmem:[%s199 + $0x10] sm:$0xff]
        %v223 = vld [vmem:[%s199 + $0x18] sm:$0xff]
        %v224 = vld [vmem:[%s199 + $0x20] sm:$0xff]
        %v225 = vld [vmem:[%s199 + $0x28] sm:$0xff]
        %v226 = vld [vmem:[%s199 + $0x30] sm:$0xff]
        %v227 = vld [vmem:[%s199 + $0x38] sm:$0xff]
        %v228 = vld [vmem:[%s199 + $0x40] sm:$0xff]
        %v229 = vld [vmem:[%s199 + $0x48] sm:$0xff]
        %v230 = vld [vmem:[%s199 + $0x50] sm:$0xff]
        %v231 = vld [vmem:[%s199 + $0x58] sm:$0xff]
        %v232 = vld [vmem:[%s199 + $0x60] sm:$0xff]
        %v233 = vld [vmem:[%s199 + $0x68] sm:$0xff]
        %v234 = vld [vmem:[%s199 + $0x70] sm:$0xff]
        %v235 = vld [vmem:[%s199 + $0x78] sm:$0xff]
        %v236 = vld [vmem:[%s199 + $0x80] sm:$0xff]
        %v237 = vld [vmem:[%s199 + $0x88] sm:$0xff]
        %v238 = vld [vmem:[%s199 + $0x90] sm:$0xff]
        %v239 = vld [vmem:[%s199 + $0x98] sm:$0xff]
        %v240 = vld [vmem:[%s199 + $0xa0] sm:$0xff]
        %v241 = vld [vmem:[%s199 + $0xa8] sm:$0xff]
        %v242 = vld [vmem:[%s199 + $0xb0] sm:$0xff]
        %v243 = vld [vmem:[%s199 + $0xb8] sm:$0xff]
        %v244 = vld [vmem:[%s199 + $0xc0] sm:$0xff]
        %v245 = vld [vmem:[%s199 + $0xc8] sm:$0xff]
        %v246 = vld [vmem:[%s199 + $0xd0] sm:$0xff]
        %v247 = vld [vmem:[%s199 + $0xd8] sm:$0xff]
        %v248 = vld [vmem:[%s199 + $0xe0] sm:$0xff]
        %v249 = vld [vmem:[%s199 + $0xe8] sm:$0xff]
        %v250 = vld [vmem:[%s199 + $0xf0] sm:$0xff]
        %v251 = vld [vmem:[%s199 + $0xf8] sm:$0xff]
        %v252 = vand.u32 2147483647, %v220
        %v253 = vand.u32 2147483647, %v221
        %v254 = vand.u32 2147483647, %v222
        %v255 = vand.u32 2147483647, %v223
        %v256 = vand.u32 2147483647, %v224
        %v257 = vand.u32 2147483647, %v225
        %v258 = vand.u32 2147483647, %v226
        %v259 = vand.u32 2147483647, %v227
        %v260 = vand.u32 2147483647, %v228
        %v261 = vand.u32 2147483647, %v229
        %v262 = vand.u32 2147483647, %v230
        %v263 = vand.u32 2147483647, %v231
        %v264 = vand.u32 2147483647, %v232
        %v265 = vand.u32 2147483647, %v233
        %v266 = vand.u32 2147483647, %v234
        %v267 = vand.u32 2147483647, %v235
        %v268 = vand.u32 2147483647, %v236
        %v269 = vand.u32 2147483647, %v237
        %v270 = vand.u32 2147483647, %v238
        %v271 = vand.u32 2147483647, %v239
        %v272 = vand.u32 2147483647, %v240
        %v273 = vand.u32 2147483647, %v241
        %v274 = vand.u32 2147483647, %v242
        %v275 = vand.u32 2147483647, %v243
        %v276 = vand.u32 2147483647, %v244
        %v277 = vand.u32 2147483647, %v245
        %v278 = vand.u32 2147483647, %v246
        %v279 = vand.u32 2147483647, %v247
        %v280 = vand.u32 2147483647, %v248
        %v281 = vand.u32 2147483647, %v249
        %v282 = vand.u32 2147483647, %v250
        %v283 = vand.u32 2147483647, %v251
        %vm284 = vcmask 261120
        %v285 = vsel %vm284, %v252, 0.0
        %286 = vadd.xlane.f32.xlu0 %v285
        %v287 = vpop.xlane.xlu0 %286
        %v288 = vsel %vm284, %v253, 0.0
        %289 = vadd.xlane.f32.xlu0 %v288
        %v290 = vpop.xlane.xlu0 %289
        %v291 = vsel %vm284, %v254, 0.0
        %292 = vadd.xlane.f32.xlu0 %v291
        %v293 = vpop.xlane.xlu0 %292
        %v294 = vsel %vm284, %v255, 0.0
        %295 = vadd.xlane.f32.xlu0 %v294
        %v296 = vpop.xlane.xlu0 %295
        %v297 = vsel %vm284, %v256, 0.0
        %298 = vadd.xlane.f32.xlu0 %v297
        %v299 = vpop.xlane.xlu0 %298
        %v300 = vsel %vm284, %v257, 0.0
        %301 = vadd.xlane.f32.xlu0 %v300
        %v302 = vpop.xlane.xlu0 %301
        %v303 = vsel %vm284, %v258, 0.0
        %304 = vadd.xlane.f32.xlu0 %v303
        %v305 = vpop.xlane.xlu0 %304
        %v306 = vsel %vm284, %v259, 0.0
        %307 = vadd.xlane.f32.xlu0 %v306
        %v308 = vpop.xlane.xlu0 %307
        %v309 = vsel %vm284, %v260, 0.0
        %310 = vadd.xlane.f32.xlu0 %v309
        %v311 = vpop.xlane.xlu0 %310
        %v312 = vsel %vm284, %v261, 0.0
        %313 = vadd.xlane.f32.xlu0 %v312
        %v314 = vpop.xlane.xlu0 %313
        %v315 = vsel %vm284, %v262, 0.0
        %316 = vadd.xlane.f32.xlu0 %v315
        %v317 = vpop.xlane.xlu0 %316
        %v318 = vsel %vm284, %v263, 0.0
        %319 = vadd.xlane.f32.xlu0 %v318
        %v320 = vpop.xlane.xlu0 %319
        %v321 = vsel %vm284, %v264, 0.0
        %322 = vadd.xlane.f32.xlu0 %v321
        %v323 = vpop.xlane.xlu0 %322
        %v324 = vsel %vm284, %v265, 0.0
        %325 = vadd.xlane.f32.xlu0 %v324
        %v326 = vpop.xlane.xlu0 %325
        %v327 = vsel %vm284, %v266, 0.0
        %328 = vadd.xlane.f32.xlu0 %v327
        %v329 = vpop.xlane.xlu0 %328
        %v330 = vsel %vm284, %v267, 0.0
        %331 = vadd.xlane.f32.xlu0 %v330
        %v332 = vpop.xlane.xlu0 %331
        %v333 = vsel %vm284, %v268, 0.0
        %334 = vadd.xlane.f32.xlu0 %v333
        %v335 = vpop.xlane.xlu0 %334
        %v336 = vsel %vm284, %v269, 0.0
        %337 = vadd.xlane.f32.xlu0 %v336
        %v338 = vpop.xlane.xlu0 %337
        %v339 = vsel %vm284, %v270, 0.0
        %340 = vadd.xlane.f32.xlu0 %v339
        %v341 = vpop.xlane.xlu0 %340
        %v342 = vsel %vm284, %v271, 0.0
        %343 = vadd.xlane.f32.xlu0 %v342
        %v344 = vpop.xlane.xlu0 %343
        %v345 = vsel %vm284, %v272, 0.0
        %346 = vadd.xlane.f32.xlu0 %v345
        %v347 = vpop.xlane.xlu0 %346
        %v348 = vsel %vm284, %v273, 0.0
        %349 = vadd.xlane.f32.xlu0 %v348
        %v350 = vpop.xlane.xlu0 %349
        %v351 = vsel %vm284, %v274, 0.0
        %352 = vadd.xlane.f32.xlu0 %v351
        %v353 = vpop.xlane.xlu0 %352
        %v354 = vsel %vm284, %v275, 0.0
        %355 = vadd.xlane.f32.xlu0 %v354
        %v356 = vpop.xlane.xlu0 %355
        %v357 = vsel %vm284, %v276, 0.0
        %358 = vadd.xlane.f32.xlu0 %v357
        %v359 = vpop.xlane.xlu0 %358
        %v360 = vsel %vm284, %v277, 0.0
        %361 = vadd.xlane.f32.xlu0 %v360
        %v362 = vpop.xlane.xlu0 %361
        %v363 = vsel %vm284, %v278, 0.0
        %364 = vadd.xlane.f32.xlu0 %v363
        %v365 = vpop.xlane.xlu0 %364
        %v366 = vsel %vm284, %v279, 0.0
        %367 = vadd.xlane.f32.xlu0 %v366
        %v368 = vpop.xlane.xlu0 %367
        %v369 = vsel %vm284, %v280, 0.0
        %370 = vadd.xlane.f32.xlu0 %v369
        %v371 = vpop.xlane.xlu0 %370
        %v372 = vsel %vm284, %v281, 0.0
        %373 = vadd.xlane.f32.xlu0 %v372
        %v374 = vpop.xlane.xlu0 %373
        %v375 = vsel %vm284, %v282, 0.0
        %376 = vadd.xlane.f32.xlu0 %v375
        %v377 = vpop.xlane.xlu0 %376
        %v378 = vsel %vm284, %v283, 0.0
        %379 = vadd.xlane.f32.xlu0 %v378
        %v380 = vpop.xlane.xlu0 %379
        %v381 = vmax.f32 %v287, 1e-12
        %v382 = vmax.f32 %v290, 1e-12
        %v383 = vmax.f32 %v293, 1e-12
        %v384 = vmax.f32 %v296, 1e-12
        %v385 = vmax.f32 %v299, 1e-12
        %v386 = vmax.f32 %v302, 1e-12
        %v387 = vmax.f32 %v305, 1e-12
        %v388 = vmax.f32 %v308, 1e-12
        %v389 = vmax.f32 %v311, 1e-12
        %v390 = vmax.f32 %v314, 1e-12
        %v391 = vmax.f32 %v317, 1e-12
        %v392 = vmax.f32 %v320, 1e-12
        %v393 = vmax.f32 %v323, 1e-12
        %v394 = vmax.f32 %v326, 1e-12
        %v395 = vmax.f32 %v329, 1e-12
        %v396 = vmax.f32 %v332, 1e-12
        %v397 = vmax.f32 %v335, 1e-12
        %v398 = vmax.f32 %v338, 1e-12
        %v399 = vmax.f32 %v341, 1e-12
        %v400 = vmax.f32 %v344, 1e-12
        %v401 = vmax.f32 %v347, 1e-12
        %v402 = vmax.f32 %v350, 1e-12
        %v403 = vmax.f32 %v353, 1e-12
        %v404 = vmax.f32 %v356, 1e-12
        %v405 = vmax.f32 %v359, 1e-12
        %v406 = vmax.f32 %v362, 1e-12
        %v407 = vmax.f32 %v365, 1e-12
        %v408 = vmax.f32 %v368, 1e-12
        %v409 = vmax.f32 %v371, 1e-12
        %v410 = vmax.f32 %v374, 1e-12
        %v411 = vmax.f32 %v377, 1e-12
        %v412 = vmax.f32 %v380, 1e-12
        %v413 = vrcp.pop %v381
        %v414 = vmul.f32 %v381, %v413
        %v415 = vsub.f32 1.0, %v414
        %v416 = vmul.f32 %v413, %v415
        %v417 = vadd.f32 %v413, %v416
        %vm418 = vweird.f32 %v381
        %vm419 = vweird.f32 %v413
        %vm420 = vmor %vm418, %vm419
        %v421 = vsel %vm420, %v413, %v417
        %v422 = vand.u32 2147483647, %v381
        %vm423 = vcmp.eq.f32.partialorder %v422, 8.507059e+37
        %v424 = vand.u32 %v381, 2147483648
        %v425 = vor.u32 1.1754944e-38, %v424
        %v426 = vsel %vm423, %v425, %v421
        %v427 = vmul.f32 14.285714, %v426
        %v428 = vrcp.pop %v382
        %v429 = vmul.f32 %v382, %v428
        %v430 = vsub.f32 1.0, %v429
        %v431 = vmul.f32 %v428, %v430
        %v432 = vadd.f32 %v428, %v431
        %vm433 = vweird.f32 %v382
        %vm434 = vweird.f32 %v428
        %vm435 = vmor %vm433, %vm434
        %v436 = vsel %vm435, %v428, %v432
        %v437 = vand.u32 2147483647, %v382
        %vm438 = vcmp.eq.f32.partialorder %v437, 8.507059e+37
        %v439 = vand.u32 %v382, 2147483648
        %v440 = vor.u32 1.1754944e-38, %v439
        %v441 = vsel %vm438, %v440, %v436
        %v442 = vmul.f32 14.285714, %v441
        %v443 = vrcp.pop %v383
        %v444 = vmul.f32 %v383, %v443
        %v445 = vsub.f32 1.0, %v444
        %v446 = vmul.f32 %v443, %v445
        %v447 = vadd.f32 %v443, %v446
        %vm448 = vweird.f32 %v383
        %vm449 = vweird.f32 %v443
        %vm450 = vmor %vm448, %vm449
        %v451 = vsel %vm450, %v443, %v447
        %v452 = vand.u32 2147483647, %v383
        %vm453 = vcmp.eq.f32.partialorder %v452, 8.507059e+37
        %v454 = vand.u32 %v383, 2147483648
        %v455 = vor.u32 1.1754944e-38, %v454
        %v456 = vsel %vm453, %v455, %v451
        %v457 = vmul.f32 14.285714, %v456
        %v458 = vrcp.pop %v384
        %v459 = vmul.f32 %v384, %v458
        %v460 = vsub.f32 1.0, %v459
        %v461 = vmul.f32 %v458, %v460
        %v462 = vadd.f32 %v458, %v461
        %vm463 = vweird.f32 %v384
        %vm464 = vweird.f32 %v458
        %vm465 = vmor %vm463, %vm464
        %v466 = vsel %vm465, %v458, %v462
        %v467 = vand.u32 2147483647, %v384
        %vm468 = vcmp.eq.f32.partialorder %v467, 8.507059e+37
        %v469 = vand.u32 %v384, 2147483648
        %v470 = vor.u32 1.1754944e-38, %v469
        %v471 = vsel %vm468, %v470, %v466
        %v472 = vmul.f32 14.285714, %v471
        %v473 = vrcp.pop %v385
        %v474 = vmul.f32 %v385, %v473
        %v475 = vsub.f32 1.0, %v474
        %v476 = vmul.f32 %v473, %v475
        %v477 = vadd.f32 %v473, %v476
        %vm478 = vweird.f32 %v385
        %vm479 = vweird.f32 %v473
        %vm480 = vmor %vm478, %vm479
        %v481 = vsel %vm480, %v473, %v477
        %v482 = vand.u32 2147483647, %v385
        %vm483 = vcmp.eq.f32.partialorder %v482, 8.507059e+37
        %v484 = vand.u32 %v385, 2147483648
        %v485 = vor.u32 1.1754944e-38, %v484
        %v486 = vsel %vm483, %v485, %v481
        %v487 = vmul.f32 14.285714, %v486
        %v488 = vrcp.pop %v386
        %v489 = vmul.f32 %v386, %v488
        %v490 = vsub.f32 1.0, %v489
        %v491 = vmul.f32 %v488, %v490
        %v492 = vadd.f32 %v488, %v491
        %vm493 = vweird.f32 %v386
        %vm494 = vweird.f32 %v488
        %vm495 = vmor %vm493, %vm494
        %v496 = vsel %vm495, %v488, %v492
        %v497 = vand.u32 2147483647, %v386
        %vm498 = vcmp.eq.f32.partialorder %v497, 8.507059e+37
        %v499 = vand.u32 %v386, 2147483648
        %v500 = vor.u32 1.1754944e-38, %v499
        %v501 = vsel %vm498, %v500, %v496
        %v502 = vmul.f32 14.285714, %v501
        %v503 = vrcp.pop %v387
        %v504 = vmul.f32 %v387, %v503
        %v505 = vsub.f32 1.0, %v504
        %v506 = vmul.f32 %v503, %v505
        %v507 = vadd.f32 %v503, %v506
        %vm508 = vweird.f32 %v387
        %vm509 = vweird.f32 %v503
        %vm510 = vmor %vm508, %vm509
        %v511 = vsel %vm510, %v503, %v507
        %v512 = vand.u32 2147483647, %v387
        %vm513 = vcmp.eq.f32.partialorder %v512, 8.507059e+37
        %v514 = vand.u32 %v387, 2147483648
        %v515 = vor.u32 1.1754944e-38, %v514
        %v516 = vsel %vm513, %v515, %v511
        %v517 = vmul.f32 14.285714, %v516
        %v518 = vrcp.pop %v388
        %v519 = vmul.f32 %v388, %v518
        %v520 = vsub.f32 1.0, %v519
        %v521 = vmul.f32 %v518, %v520
        %v522 = vadd.f32 %v518, %v521
        %vm523 = vweird.f32 %v388
        %vm524 = vweird.f32 %v518
        %vm525 = vmor %vm523, %vm524
        %v526 = vsel %vm525, %v518, %v522
        %v527 = vand.u32 2147483647, %v388
        %vm528 = vcmp.eq.f32.partialorder %v527, 8.507059e+37
        %v529 = vand.u32 %v388, 2147483648
        %v530 = vor.u32 1.1754944e-38, %v529
        %v531 = vsel %vm528, %v530, %v526
        %v532 = vmul.f32 14.285714, %v531
        %v533 = vrcp.pop %v389
        %v534 = vmul.f32 %v389, %v533
        %v535 = vsub.f32 1.0, %v534
        %v536 = vmul.f32 %v533, %v535
        %v537 = vadd.f32 %v533, %v536
        %vm538 = vweird.f32 %v389
        %vm539 = vweird.f32 %v533
        %vm540 = vmor %vm538, %vm539
        %v541 = vsel %vm540, %v533, %v537
        %v542 = vand.u32 2147483647, %v389
        %vm543 = vcmp.eq.f32.partialorder %v542, 8.507059e+37
        %v544 = vand.u32 %v389, 2147483648
        %v545 = vor.u32 1.1754944e-38, %v544
        %v546 = vsel %vm543, %v545, %v541
        %v547 = vmul.f32 14.285714, %v546
        %v548 = vrcp.pop %v390
        %v549 = vmul.f32 %v390, %v548
        %v550 = vsub.f32 1.0, %v549
        %v551 = vmul.f32 %v548, %v550
        %v552 = vadd.f32 %v548, %v551
        %vm553 = vweird.f32 %v390
        %vm554 = vweird.f32 %v548
        %vm555 = vmor %vm553, %vm554
        %v556 = vsel %vm555, %v548, %v552
        %v557 = vand.u32 2147483647, %v390
        %vm558 = vcmp.eq.f32.partialorder %v557, 8.507059e+37
        %v559 = vand.u32 %v390, 2147483648
        %v560 = vor.u32 1.1754944e-38, %v559
        %v561 = vsel %vm558, %v560, %v556
        %v562 = vmul.f32 14.285714, %v561
        %v563 = vrcp.pop %v391
        %v564 = vmul.f32 %v391, %v563
        %v565 = vsub.f32 1.0, %v564
        %v566 = vmul.f32 %v563, %v565
        %v567 = vadd.f32 %v563, %v566
        %vm568 = vweird.f32 %v391
        %vm569 = vweird.f32 %v563
        %vm570 = vmor %vm568, %vm569
        %v571 = vsel %vm570, %v563, %v567
        %v572 = vand.u32 2147483647, %v391
        %vm573 = vcmp.eq.f32.partialorder %v572, 8.507059e+37
        %v574 = vand.u32 %v391, 2147483648
        %v575 = vor.u32 1.1754944e-38, %v574
        %v576 = vsel %vm573, %v575, %v571
        %v577 = vmul.f32 14.285714, %v576
        %v578 = vrcp.pop %v392
        %v579 = vmul.f32 %v392, %v578
        %v580 = vsub.f32 1.0, %v579
        %v581 = vmul.f32 %v578, %v580
        %v582 = vadd.f32 %v578, %v581
        %vm583 = vweird.f32 %v392
        %vm584 = vweird.f32 %v578
        %vm585 = vmor %vm583, %vm584
        %v586 = vsel %vm585, %v578, %v582
        %v587 = vand.u32 2147483647, %v392
        %vm588 = vcmp.eq.f32.partialorder %v587, 8.507059e+37
        %v589 = vand.u32 %v392, 2147483648
        %v590 = vor.u32 1.1754944e-38, %v589
        %v591 = vsel %vm588, %v590, %v586
        %v592 = vmul.f32 14.285714, %v591
        %v593 = vrcp.pop %v393
        %v594 = vmul.f32 %v393, %v593
        %v595 = vsub.f32 1.0, %v594
        %v596 = vmul.f32 %v593, %v595
        %v597 = vadd.f32 %v593, %v596
        %vm598 = vweird.f32 %v393
        %vm599 = vweird.f32 %v593
        %vm600 = vmor %vm598, %vm599
        %v601 = vsel %vm600, %v593, %v597
        %v602 = vand.u32 2147483647, %v393
        %vm603 = vcmp.eq.f32.partialorder %v602, 8.507059e+37
        %v604 = vand.u32 %v393, 2147483648
        %v605 = vor.u32 1.1754944e-38, %v604
        %v606 = vsel %vm603, %v605, %v601
        %v607 = vmul.f32 14.285714, %v606
        %v608 = vrcp.pop %v394
        %v609 = vmul.f32 %v394, %v608
        %v610 = vsub.f32 1.0, %v609
        %v611 = vmul.f32 %v608, %v610
        %v612 = vadd.f32 %v608, %v611
        %vm613 = vweird.f32 %v394
        %vm614 = vweird.f32 %v608
        %vm615 = vmor %vm613, %vm614
        %v616 = vsel %vm615, %v608, %v612
        %v617 = vand.u32 2147483647, %v394
        %vm618 = vcmp.eq.f32.partialorder %v617, 8.507059e+37
        %v619 = vand.u32 %v394, 2147483648
        %v620 = vor.u32 1.1754944e-38, %v619
        %v621 = vsel %vm618, %v620, %v616
        %v622 = vmul.f32 14.285714, %v621
        %v623 = vrcp.pop %v395
        %v624 = vmul.f32 %v395, %v623
        %v625 = vsub.f32 1.0, %v624
        %v626 = vmul.f32 %v623, %v625
        %v627 = vadd.f32 %v623, %v626
        %vm628 = vweird.f32 %v395
        %vm629 = vweird.f32 %v623
        %vm630 = vmor %vm628, %vm629
        %v631 = vsel %vm630, %v623, %v627
        %v632 = vand.u32 2147483647, %v395
        %vm633 = vcmp.eq.f32.partialorder %v632, 8.507059e+37
        %v634 = vand.u32 %v395, 2147483648
        %v635 = vor.u32 1.1754944e-38, %v634
        %v636 = vsel %vm633, %v635, %v631
        %v637 = vmul.f32 14.285714, %v636
        %v638 = vrcp.pop %v396
        %v639 = vmul.f32 %v396, %v638
        %v640 = vsub.f32 1.0, %v639
        %v641 = vmul.f32 %v638, %v640
        %v642 = vadd.f32 %v638, %v641
        %vm643 = vweird.f32 %v396
        %vm644 = vweird.f32 %v638
        %vm645 = vmor %vm643, %vm644
        %v646 = vsel %vm645, %v638, %v642
        %v647 = vand.u32 2147483647, %v396
        %vm648 = vcmp.eq.f32.partialorder %v647, 8.507059e+37
        %v649 = vand.u32 %v396, 2147483648
        %v650 = vor.u32 1.1754944e-38, %v649
        %v651 = vsel %vm648, %v650, %v646
        %v652 = vmul.f32 14.285714, %v651
        %v653 = vrcp.pop %v397
        %v654 = vmul.f32 %v397, %v653
        %v655 = vsub.f32 1.0, %v654
        %v656 = vmul.f32 %v653, %v655
        %v657 = vadd.f32 %v653, %v656
        %vm658 = vweird.f32 %v397
        %vm659 = vweird.f32 %v653
        %vm660 = vmor %vm658, %vm659
        %v661 = vsel %vm660, %v653, %v657
        %v662 = vand.u32 2147483647, %v397
        %vm663 = vcmp.eq.f32.partialorder %v662, 8.507059e+37
        %v664 = vand.u32 %v397, 2147483648
        %v665 = vor.u32 1.1754944e-38, %v664
        %v666 = vsel %vm663, %v665, %v661
        %v667 = vmul.f32 14.285714, %v666
        %v668 = vrcp.pop %v398
        %v669 = vmul.f32 %v398, %v668
        %v670 = vsub.f32 1.0, %v669
        %v671 = vmul.f32 %v668, %v670
        %v672 = vadd.f32 %v668, %v671
        %vm673 = vweird.f32 %v398
        %vm674 = vweird.f32 %v668
        %vm675 = vmor %vm673, %vm674
        %v676 = vsel %vm675, %v668, %v672
        %v677 = vand.u32 2147483647, %v398
        %vm678 = vcmp.eq.f32.partialorder %v677, 8.507059e+37
        %v679 = vand.u32 %v398, 2147483648
        %v680 = vor.u32 1.1754944e-38, %v679
        %v681 = vsel %vm678, %v680, %v676
        %v682 = vmul.f32 14.285714, %v681
        %v683 = vrcp.pop %v399
        %v684 = vmul.f32 %v399, %v683
        %v685 = vsub.f32 1.0, %v684
        %v686 = vmul.f32 %v683, %v685
        %v687 = vadd.f32 %v683, %v686
        %vm688 = vweird.f32 %v399
        %vm689 = vweird.f32 %v683
        %vm690 = vmor %vm688, %vm689
        %v691 = vsel %vm690, %v683, %v687
        %v692 = vand.u32 2147483647, %v399
        %vm693 = vcmp.eq.f32.partialorder %v692, 8.507059e+37
        %v694 = vand.u32 %v399, 2147483648
        %v695 = vor.u32 1.1754944e-38, %v694
        %v696 = vsel %vm693, %v695, %v691
        %v697 = vmul.f32 14.285714, %v696
        %v698 = vrcp.pop %v400
        %v699 = vmul.f32 %v400, %v698
        %v700 = vsub.f32 1.0, %v699
        %v701 = vmul.f32 %v698, %v700
        %v702 = vadd.f32 %v698, %v701
        %vm703 = vweird.f32 %v400
        %vm704 = vweird.f32 %v698
        %vm705 = vmor %vm703, %vm704
        %v706 = vsel %vm705, %v698, %v702
        %v707 = vand.u32 2147483647, %v400
        %vm708 = vcmp.eq.f32.partialorder %v707, 8.507059e+37
        %v709 = vand.u32 %v400, 2147483648
        %v710 = vor.u32 1.1754944e-38, %v709
        %v711 = vsel %vm708, %v710, %v706
        %v712 = vmul.f32 14.285714, %v711
        %v713 = vrcp.pop %v401
        %v714 = vmul.f32 %v401, %v713
        %v715 = vsub.f32 1.0, %v714
        %v716 = vmul.f32 %v713, %v715
        %v717 = vadd.f32 %v713, %v716
        %vm718 = vweird.f32 %v401
        %vm719 = vweird.f32 %v713
        %vm720 = vmor %vm718, %vm719
        %v721 = vsel %vm720, %v713, %v717
        %v722 = vand.u32 2147483647, %v401
        %vm723 = vcmp.eq.f32.partialorder %v722, 8.507059e+37
        %v724 = vand.u32 %v401, 2147483648
        %v725 = vor.u32 1.1754944e-38, %v724
        %v726 = vsel %vm723, %v725, %v721
        %v727 = vmul.f32 14.285714, %v726
        %v728 = vrcp.pop %v402
        %v729 = vmul.f32 %v402, %v728
        %v730 = vsub.f32 1.0, %v729
        %v731 = vmul.f32 %v728, %v730
        %v732 = vadd.f32 %v728, %v731
        %vm733 = vweird.f32 %v402
        %vm734 = vweird.f32 %v728
        %vm735 = vmor %vm733, %vm734
        %v736 = vsel %vm735, %v728, %v732
        %v737 = vand.u32 2147483647, %v402
        %vm738 = vcmp.eq.f32.partialorder %v737, 8.507059e+37
        %v739 = vand.u32 %v402, 2147483648
        %v740 = vor.u32 1.1754944e-38, %v739
        %v741 = vsel %vm738, %v740, %v736
        %v742 = vmul.f32 14.285714, %v741
        %v743 = vrcp.pop %v403
        %v744 = vmul.f32 %v403, %v743
        %v745 = vsub.f32 1.0, %v744
        %v746 = vmul.f32 %v743, %v745
        %v747 = vadd.f32 %v743, %v746
        %vm748 = vweird.f32 %v403
        %vm749 = vweird.f32 %v743
        %vm750 = vmor %vm748, %vm749
        %v751 = vsel %vm750, %v743, %v747
        %v752 = vand.u32 2147483647, %v403
        %vm753 = vcmp.eq.f32.partialorder %v752, 8.507059e+37
        %v754 = vand.u32 %v403, 2147483648
        %v755 = vor.u32 1.1754944e-38, %v754
        %v756 = vsel %vm753, %v755, %v751
        %v757 = vmul.f32 14.285714, %v756
        %v758 = vrcp.pop %v404
        %v759 = vmul.f32 %v404, %v758
        %v760 = vsub.f32 1.0, %v759
        %v761 = vmul.f32 %v758, %v760
        %v762 = vadd.f32 %v758, %v761
        %vm763 = vweird.f32 %v404
        %vm764 = vweird.f32 %v758
        %vm765 = vmor %vm763, %vm764
        %v766 = vsel %vm765, %v758, %v762
        %v767 = vand.u32 2147483647, %v404
        %vm768 = vcmp.eq.f32.partialorder %v767, 8.507059e+37
        %v769 = vand.u32 %v404, 2147483648
        %v770 = vor.u32 1.1754944e-38, %v769
        %v771 = vsel %vm768, %v770, %v766
        %v772 = vmul.f32 14.285714, %v771
        %v773 = vrcp.pop %v405
        %v774 = vmul.f32 %v405, %v773
        %v775 = vsub.f32 1.0, %v774
        %v776 = vmul.f32 %v773, %v775
        %v777 = vadd.f32 %v773, %v776
        %vm778 = vweird.f32 %v405
        %vm779 = vweird.f32 %v773
        %vm780 = vmor %vm778, %vm779
        %v781 = vsel %vm780, %v773, %v777
        %v782 = vand.u32 2147483647, %v405
        %vm783 = vcmp.eq.f32.partialorder %v782, 8.507059e+37
        %v784 = vand.u32 %v405, 2147483648
        %v785 = vor.u32 1.1754944e-38, %v784
        %v786 = vsel %vm783, %v785, %v781
        %v787 = vmul.f32 14.285714, %v786
        %v788 = vrcp.pop %v406
        %v789 = vmul.f32 %v406, %v788
        %v790 = vsub.f32 1.0, %v789
        %v791 = vmul.f32 %v788, %v790
        %v792 = vadd.f32 %v788, %v791
        %vm793 = vweird.f32 %v406
        %vm794 = vweird.f32 %v788
        %vm795 = vmor %vm793, %vm794
        %v796 = vsel %vm795, %v788, %v792
        %v797 = vand.u32 2147483647, %v406
        %vm798 = vcmp.eq.f32.partialorder %v797, 8.507059e+37
        %v799 = vand.u32 %v406, 2147483648
        %v800 = vor.u32 1.1754944e-38, %v799
        %v801 = vsel %vm798, %v800, %v796
        %v802 = vmul.f32 14.285714, %v801
        %v803 = vrcp.pop %v407
        %v804 = vmul.f32 %v407, %v803
        %v805 = vsub.f32 1.0, %v804
        %v806 = vmul.f32 %v803, %v805
        %v807 = vadd.f32 %v803, %v806
        %vm808 = vweird.f32 %v407
        %vm809 = vweird.f32 %v803
        %vm810 = vmor %vm808, %vm809
        %v811 = vsel %vm810, %v803, %v807
        %v812 = vand.u32 2147483647, %v407
        %vm813 = vcmp.eq.f32.partialorder %v812, 8.507059e+37
        %v814 = vand.u32 %v407, 2147483648
        %v815 = vor.u32 1.1754944e-38, %v814
        %v816 = vsel %vm813, %v815, %v811
        %v817 = vmul.f32 14.285714, %v816
        %v818 = vrcp.pop %v408
        %v819 = vmul.f32 %v408, %v818
        %v820 = vsub.f32 1.0, %v819
        %v821 = vmul.f32 %v818, %v820
        %v822 = vadd.f32 %v818, %v821
        %vm823 = vweird.f32 %v408
        %vm824 = vweird.f32 %v818
        %vm825 = vmor %vm823, %vm824
        %v826 = vsel %vm825, %v818, %v822
        %v827 = vand.u32 2147483647, %v408
        %vm828 = vcmp.eq.f32.partialorder %v827, 8.507059e+37
        %v829 = vand.u32 %v408, 2147483648
        %v830 = vor.u32 1.1754944e-38, %v829
        %v831 = vsel %vm828, %v830, %v826
        %v832 = vmul.f32 14.285714, %v831
        %v833 = vrcp.pop %v409
        %v834 = vmul.f32 %v409, %v833
        %v835 = vsub.f32 1.0, %v834
        %v836 = vmul.f32 %v833, %v835
        %v837 = vadd.f32 %v833, %v836
        %vm838 = vweird.f32 %v409
        %vm839 = vweird.f32 %v833
        %vm840 = vmor %vm838, %vm839
        %v841 = vsel %vm840, %v833, %v837
        %v842 = vand.u32 2147483647, %v409
        %vm843 = vcmp.eq.f32.partialorder %v842, 8.507059e+37
        %v844 = vand.u32 %v409, 2147483648
        %v845 = vor.u32 1.1754944e-38, %v844
        %v846 = vsel %vm843, %v845, %v841
        %v847 = vmul.f32 14.285714, %v846
        %v848 = vrcp.pop %v410
        %v849 = vmul.f32 %v410, %v848
        %v850 = vsub.f32 1.0, %v849
        %v851 = vmul.f32 %v848, %v850
        %v852 = vadd.f32 %v848, %v851
        %vm853 = vweird.f32 %v410
        %vm854 = vweird.f32 %v848
        %vm855 = vmor %vm853, %vm854
        %v856 = vsel %vm855, %v848, %v852
        %v857 = vand.u32 2147483647, %v410
        %vm858 = vcmp.eq.f32.partialorder %v857, 8.507059e+37
        %v859 = vand.u32 %v410, 2147483648
        %v860 = vor.u32 1.1754944e-38, %v859
        %v861 = vsel %vm858, %v860, %v856
        %v862 = vmul.f32 14.285714, %v861
        %v863 = vrcp.pop %v411
        %v864 = vmul.f32 %v411, %v863
        %v865 = vsub.f32 1.0, %v864
        %v866 = vmul.f32 %v863, %v865
        %v867 = vadd.f32 %v863, %v866
        %vm868 = vweird.f32 %v411
        %vm869 = vweird.f32 %v863
        %vm870 = vmor %vm868, %vm869
        %v871 = vsel %vm870, %v863, %v867
        %v872 = vand.u32 2147483647, %v411
        %vm873 = vcmp.eq.f32.partialorder %v872, 8.507059e+37
        %v874 = vand.u32 %v411, 2147483648
        %v875 = vor.u32 1.1754944e-38, %v874
        %v876 = vsel %vm873, %v875, %v871
        %v877 = vmul.f32 14.285714, %v876
        %v878 = vrcp.pop %v412
        %v879 = vmul.f32 %v412, %v878
        %v880 = vsub.f32 1.0, %v879
        %v881 = vmul.f32 %v878, %v880
        %v882 = vadd.f32 %v878, %v881
        %vm883 = vweird.f32 %v412
        %vm884 = vweird.f32 %v878
        %vm885 = vmor %vm883, %vm884
        %v886 = vsel %vm885, %v878, %v882
        %v887 = vand.u32 2147483647, %v412
        %vm888 = vcmp.eq.f32.partialorder %v887, 8.507059e+37
        %v889 = vand.u32 %v412, 2147483648
        %v890 = vor.u32 1.1754944e-38, %v889
        %v891 = vsel %vm888, %v890, %v886
        %v892 = vmul.f32 14.285714, %v891
        %v893 = vmul.f32 %v220, %v427
        %v894 = vmul.f32 %v221, %v442
        %v895 = vmul.f32 %v222, %v457
        %v896 = vmul.f32 %v223, %v472
        %v897 = vmul.f32 %v224, %v487
        %v898 = vmul.f32 %v225, %v502
        %v899 = vmul.f32 %v226, %v517
        %v900 = vmul.f32 %v227, %v532
        %v901 = vmul.f32 %v228, %v547
        %v902 = vmul.f32 %v229, %v562
        %v903 = vmul.f32 %v230, %v577
        %v904 = vmul.f32 %v231, %v592
        %v905 = vmul.f32 %v232, %v607
        %v906 = vmul.f32 %v233, %v622
        %v907 = vmul.f32 %v234, %v637
        %v908 = vmul.f32 %v235, %v652
        %v909 = vmul.f32 %v236, %v667
        %v910 = vmul.f32 %v237, %v682
        %v911 = vmul.f32 %v238, %v697
        %v912 = vmul.f32 %v239, %v712
        %v913 = vmul.f32 %v240, %v727
        %v914 = vmul.f32 %v241, %v742
        %v915 = vmul.f32 %v242, %v757
        %v916 = vmul.f32 %v243, %v772
        %v917 = vmul.f32 %v244, %v787
        %v918 = vmul.f32 %v245, %v802
        %v919 = vmul.f32 %v246, %v817
        %v920 = vmul.f32 %v247, %v832
        %v921 = vmul.f32 %v248, %v847
        %v922 = vmul.f32 %v249, %v862
        %v923 = vmul.f32 %v250, %v877
        %v924 = vmul.f32 %v251, %v892
        %v925 = vpack.c.bf16 %v893, %v893
        %v926 = vpack.c.bf16 %v894, %v894
        %v927 = vpack.c.bf16 %v895, %v895
        %v928 = vpack.c.bf16 %v896, %v896
        %v929 = vpack.c.bf16 %v897, %v897
        %v930 = vpack.c.bf16 %v898, %v898
        %v931 = vpack.c.bf16 %v899, %v899
        %v932 = vpack.c.bf16 %v900, %v900
        %v933 = vpack.c.bf16 %v901, %v901
        %v934 = vpack.c.bf16 %v902, %v902
        %v935 = vpack.c.bf16 %v903, %v903
        %v936 = vpack.c.bf16 %v904, %v904
        %v937 = vpack.c.bf16 %v905, %v905
        %v938 = vpack.c.bf16 %v906, %v906
        %v939 = vpack.c.bf16 %v907, %v907
        %v940 = vpack.c.bf16 %v908, %v908
        %v941 = vpack.c.bf16 %v909, %v909
        %v942 = vpack.c.bf16 %v910, %v910
        %v943 = vpack.c.bf16 %v911, %v911
        %v944 = vpack.c.bf16 %v912, %v912
        %v945 = vpack.c.bf16 %v913, %v913
        %v946 = vpack.c.bf16 %v914, %v914
        %v947 = vpack.c.bf16 %v915, %v915
        %v948 = vpack.c.bf16 %v916, %v916
        %v949 = vpack.c.bf16 %v917, %v917
        %v950 = vpack.c.bf16 %v918, %v918
        %v951 = vpack.c.bf16 %v919, %v919
        %v952 = vpack.c.bf16 %v920, %v920
        %v953 = vpack.c.bf16 %v921, %v921
        %v954 = vpack.c.bf16 %v922, %v922
        %v955 = vpack.c.bf16 %v923, %v923
        %v956 = vpack.c.bf16 %v924, %v924
        %vm957 = vcmask 257024
        %958 = vst.msk [vmem:[#allocation2] sm:$0xf] %vm957, %v925
        %959 = vst.msk [vmem:[#allocation2 + $0x4] sm:$0xf] %vm957, %v926
        %960 = vst.msk [vmem:[#allocation2 + $0x8] sm:$0xf] %vm957, %v927
        %961 = vst.msk [vmem:[#allocation2 + $0xc] sm:$0xf] %vm957, %v928
        %962 = vst.msk [vmem:[#allocation2 + $0x10] sm:$0xf] %vm957, %v929
        %963 = vst.msk [vmem:[#allocation2 + $0x14] sm:$0xf] %vm957, %v930
        %964 = vst.msk [vmem:[#allocation2 + $0x18] sm:$0xf] %vm957, %v931
        %965 = vst.msk [vmem:[#allocation2 + $0x1c] sm:$0xf] %vm957, %v932
        %966 = vst.msk [vmem:[#allocation2 + $0x20] sm:$0xf] %vm957, %v933
        %967 = vst.msk [vmem:[#allocation2 + $0x24] sm:$0xf] %vm957, %v934
        %968 = vst.msk [vmem:[#allocation2 + $0x28] sm:$0xf] %vm957, %v935
        %969 = vst.msk [vmem:[#allocation2 + $0x2c] sm:$0xf] %vm957, %v936
        %970 = vst.msk [vmem:[#allocation2 + $0x30] sm:$0xf] %vm957, %v937
        %971 = vst.msk [vmem:[#allocation2 + $0x34] sm:$0xf] %vm957, %v938
        %972 = vst.msk [vmem:[#allocation2 + $0x38] sm:$0xf] %vm957, %v939
        %973 = vst.msk [vmem:[#allocation2 + $0x3c] sm:$0xf] %vm957, %v940
        %974 = vst.msk [vmem:[#allocation2 + $0x40] sm:$0xf] %vm957, %v941
        %975 = vst.msk [vmem:[#allocation2 + $0x44] sm:$0xf] %vm957, %v942
        %976 = vst.msk [vmem:[#allocation2 + $0x48] sm:$0xf] %vm957, %v943
        %977 = vst.msk [vmem:[#allocation2 + $0x4c] sm:$0xf] %vm957, %v944
        %978 = vst.msk [vmem:[#allocation2 + $0x50] sm:$0xf] %vm957, %v945
        %979 = vst.msk [vmem:[#allocation2 + $0x54] sm:$0xf] %vm957, %v946
        %980 = vst.msk [vmem:[#allocation2 + $0x58] sm:$0xf] %vm957, %v947
        %981 = vst.msk [vmem:[#allocation2 + $0x5c] sm:$0xf] %vm957, %v948
        %982 = vst.msk [vmem:[#allocation2 + $0x60] sm:$0xf] %vm957, %v949
        %983 = vst.msk [vmem:[#allocation2 + $0x64] sm:$0xf] %vm957, %v950
        %984 = vst.msk [vmem:[#allocation2 + $0x68] sm:$0xf] %vm957, %v951
        %985 = vst.msk [vmem:[#allocation2 + $0x6c] sm:$0xf] %vm957, %v952
        %986 = vst.msk [vmem:[#allocation2 + $0x70] sm:$0xf] %vm957, %v953
        %987 = vst.msk [vmem:[#allocation2 + $0x74] sm:$0xf] %vm957, %v954
        %988 = vst.msk [vmem:[#allocation2 + $0x78] sm:$0xf] %vm957, %v955
        %989 = vst.msk [vmem:[#allocation2 + $0x7c] sm:$0xf] %vm957, %v956
        %vm990 = vcmask 7168
        %991 = vst.msk [vmem:[#allocation4] sm:$0xff] %vm990, 0.0
        %992 = vst.msk [vmem:[#allocation4 + $0x8] sm:$0xff] %vm990, 0.0
        %993 = vst.msk [vmem:[#allocation4 + $0x10] sm:$0xff] %vm990, 0.0
        %994 = vst.msk [vmem:[#allocation4 + $0x18] sm:$0xff] %vm990, 0.0
        %995 = vst.msk [vmem:[#allocation4 + $0x20] sm:$0xff] %vm990, 0.0
        %996 = vst.msk [vmem:[#allocation4 + $0x28] sm:$0xff] %vm990, 0.0
        %997 = vst.msk [vmem:[#allocation4 + $0x30] sm:$0xff] %vm990, 0.0
        %998 = vst.msk [vmem:[#allocation4 + $0x38] sm:$0xff] %vm990, 0.0
        %999 = vst.msk [vmem:[#allocation4 + $0x40] sm:$0xff] %vm990, 0.0
        %1000 = vst.msk [vmem:[#allocation4 + $0x48] sm:$0xff] %vm990, 0.0
        %1001 = vst.msk [vmem:[#allocation4 + $0x50] sm:$0xff] %vm990, 0.0
        %1002 = vst.msk [vmem:[#allocation4 + $0x58] sm:$0xff] %vm990, 0.0
        %1003 = vst.msk [vmem:[#allocation4 + $0x60] sm:$0xff] %vm990, 0.0
        %1004 = vst.msk [vmem:[#allocation4 + $0x68] sm:$0xff] %vm990, 0.0
        %1005 = vst.msk [vmem:[#allocation4 + $0x70] sm:$0xff] %vm990, 0.0
        %1006 = vst.msk [vmem:[#allocation4 + $0x78] sm:$0xff] %vm990, 0.0
        %1007 = vst.msk [vmem:[#allocation4 + $0x80] sm:$0xff] %vm990, 0.0
        %1008 = vst.msk [vmem:[#allocation4 + $0x88] sm:$0xff] %vm990, 0.0
        %1009 = vst.msk [vmem:[#allocation4 + $0x90] sm:$0xff] %vm990, 0.0
        %1010 = vst.msk [vmem:[#allocation4 + $0x98] sm:$0xff] %vm990, 0.0
        %1011 = vst.msk [vmem:[#allocation4 + $0xa0] sm:$0xff] %vm990, 0.0
        %1012 = vst.msk [vmem:[#allocation4 + $0xa8] sm:$0xff] %vm990, 0.0
        %1013 = vst.msk [vmem:[#allocation4 + $0xb0] sm:$0xff] %vm990, 0.0
        %1014 = vst.msk [vmem:[#allocation4 + $0xb8] sm:$0xff] %vm990, 0.0
        %1015 = vst.msk [vmem:[#allocation4 + $0xc0] sm:$0xff] %vm990, 0.0
        %1016 = vst.msk [vmem:[#allocation4 + $0xc8] sm:$0xff] %vm990, 0.0
        %1017 = vst.msk [vmem:[#allocation4 + $0xd0] sm:$0xff] %vm990, 0.0
        %1018 = vst.msk [vmem:[#allocation4 + $0xd8] sm:$0xff] %vm990, 0.0
        %1019 = vst.msk [vmem:[#allocation4 + $0xe0] sm:$0xff] %vm990, 0.0
        %1020 = vst.msk [vmem:[#allocation4 + $0xe8] sm:$0xff] %vm990, 0.0
        %1021 = vst.msk [vmem:[#allocation4 + $0xf0] sm:$0xff] %vm990, 0.0
        %1022 = vst.msk [vmem:[#allocation4 + $0xf8] sm:$0xff] %vm990, 0.0
        %1023 = vst.msk [vmem:[#allocation3] sm:$0xff] %vm990, 0.0
        %1024 = vst.msk [vmem:[#allocation3 + $0x8] sm:$0xff] %vm990, 0.0
        %1025 = vst.msk [vmem:[#allocation3 + $0x10] sm:$0xff] %vm990, 0.0
        %1026 = vst.msk [vmem:[#allocation3 + $0x18] sm:$0xff] %vm990, 0.0
        %1027 = vst.msk [vmem:[#allocation3 + $0x20] sm:$0xff] %vm990, 0.0
        %1028 = vst.msk [vmem:[#allocation3 + $0x28] sm:$0xff] %vm990, 0.0
        %1029 = vst.msk [vmem:[#allocation3 + $0x30] sm:$0xff] %vm990, 0.0
        %1030 = vst.msk [vmem:[#allocation3 + $0x38] sm:$0xff] %vm990, 0.0
        %1031 = vst.msk [vmem:[#allocation3 + $0x40] sm:$0xff] %vm990, 0.0
        %1032 = vst.msk [vmem:[#allocation3 + $0x48] sm:$0xff] %vm990, 0.0
        %1033 = vst.msk [vmem:[#allocation3 + $0x50] sm:$0xff] %vm990, 0.0
        %1034 = vst.msk [vmem:[#allocation3 + $0x58] sm:$0xff] %vm990, 0.0
        %1035 = vst.msk [vmem:[#allocation3 + $0x60] sm:$0xff] %vm990, 0.0
        %1036 = vst.msk [vmem:[#allocation3 + $0x68] sm:$0xff] %vm990, 0.0
        %1037 = vst.msk [vmem:[#allocation3 + $0x70] sm:$0xff] %vm990, 0.0
        %1038 = vst.msk [vmem:[#allocation3 + $0x78] sm:$0xff] %vm990, 0.0
        %1039 = vst.msk [vmem:[#allocation3 + $0x80] sm:$0xff] %vm990, 0.0
        %1040 = vst.msk [vmem:[#allocation3 + $0x88] sm:$0xff] %vm990, 0.0
        %1041 = vst.msk [vmem:[#allocation3 + $0x90] sm:$0xff] %vm990, 0.0
        %1042 = vst.msk [vmem:[#allocation3 + $0x98] sm:$0xff] %vm990, 0.0
        %1043 = vst.msk [vmem:[#allocation3 + $0xa0] sm:$0xff] %vm990, 0.0
        %1044 = vst.msk [vmem:[#allocation3 + $0xa8] sm:$0xff] %vm990, 0.0
        %1045 = vst.msk [vmem:[#allocation3 + $0xb0] sm:$0xff] %vm990, 0.0
        %1046 = vst.msk [vmem:[#allocation3 + $0xb8] sm:$0xff] %vm990, 0.0
        %1047 = vst.msk [vmem:[#allocation3 + $0xc0] sm:$0xff] %vm990, 0.0
        %1048 = vst.msk [vmem:[#allocation3 + $0xc8] sm:$0xff] %vm990, 0.0
        %1049 = vst.msk [vmem:[#allocation3 + $0xd0] sm:$0xff] %vm990, 0.0
        %1050 = vst.msk [vmem:[#allocation3 + $0xd8] sm:$0xff] %vm990, 0.0
        %1051 = vst.msk [vmem:[#allocation3 + $0xe0] sm:$0xff] %vm990, 0.0
        %1052 = vst.msk [vmem:[#allocation3 + $0xe8] sm:$0xff] %vm990, 0.0
        %1053 = vst.msk [vmem:[#allocation3 + $0xf0] sm:$0xff] %vm990, 0.0
        %1054 = vst.msk [vmem:[#allocation3 + $0xf8] sm:$0xff] %vm990, 0.0
      $region32: #{tpu_custom_call.1} parent=27 // pred_fallthru
        _
      %v1055 = vld [vmem:[%s209] sm:$0xff]
      %v1056 = vld [vmem:[%s209 + $0x8] sm:$0xff]
      %v1057 = vld [vmem:[%s209 + $0x10] sm:$0xff]
      %v1058 = vld [vmem:[%s209 + $0x18] sm:$0xff]
      %v1059 = vld [vmem:[%s209 + $0x20] sm:$0xff]
      %v1060 = vld [vmem:[%s209 + $0x28] sm:$0xff]
      %v1061 = vld [vmem:[%s209 + $0x30] sm:$0xff]
      %v1062 = vld [vmem:[%s209 + $0x38] sm:$0xff]
      %v1063 = vld [vmem:[%s209 + $0x40] sm:$0xff]
      %v1064 = vld [vmem:[%s209 + $0x48] sm:$0xff]
      %v1065 = vld [vmem:[%s209 + $0x50] sm:$0xff]
      %v1066 = vld [vmem:[%s209 + $0x58] sm:$0xff]
      %v1067 = vld [vmem:[%s209 + $0x60] sm:$0xff]
      %v1068 = vld [vmem:[%s209 + $0x68] sm:$0xff]
      %v1069 = vld [vmem:[%s209 + $0x70] sm:$0xff]
      %v1070 = vld [vmem:[%s209 + $0x78] sm:$0xff]
      %v1071 = vld [vmem:[%s209 + $0x80] sm:$0xff]
      %v1072 = vld [vmem:[%s209 + $0x88] sm:$0xff]
      %v1073 = vld [vmem:[%s209 + $0x90] sm:$0xff]
      %v1074 = vld [vmem:[%s209 + $0x98] sm:$0xff]
      %v1075 = vld [vmem:[%s209 + $0xa0] sm:$0xff]
      %v1076 = vld [vmem:[%s209 + $0xa8] sm:$0xff]
      %v1077 = vld [vmem:[%s209 + $0xb0] sm:$0xff]
      %v1078 = vld [vmem:[%s209 + $0xb8] sm:$0xff]
      %v1079 = vld [vmem:[%s209 + $0xc0] sm:$0xff]
      %v1080 = vld [vmem:[%s209 + $0xc8] sm:$0xff]
      %v1081 = vld [vmem:[%s209 + $0xd0] sm:$0xff]
      %v1082 = vld [vmem:[%s209 + $0xd8] sm:$0xff]
      %v1083 = vld [vmem:[%s209 + $0xe0] sm:$0xff]
      %v1084 = vld [vmem:[%s209 + $0xe8] sm:$0xff]
      %v1085 = vld [vmem:[%s209 + $0xf0] sm:$0xff]
      %v1086 = vld [vmem:[%s209 + $0xf8] sm:$0xff]
      %v1087 = vand.u32 2147483647, %v1055
      %v1088 = vand.u32 2147483647, %v1056
      %v1089 = vand.u32 2147483647, %v1057
      %v1090 = vand.u32 2147483647, %v1058
      %v1091 = vand.u32 2147483647, %v1059
      %v1092 = vand.u32 2147483647, %v1060
      %v1093 = vand.u32 2147483647, %v1061
      %v1094 = vand.u32 2147483647, %v1062
      %v1095 = vand.u32 2147483647, %v1063
      %v1096 = vand.u32 2147483647, %v1064
      %v1097 = vand.u32 2147483647, %v1065
      %v1098 = vand.u32 2147483647, %v1066
      %v1099 = vand.u32 2147483647, %v1067
      %v1100 = vand.u32 2147483647, %v1068
      %v1101 = vand.u32 2147483647, %v1069
      %v1102 = vand.u32 2147483647, %v1070
      %v1103 = vand.u32 2147483647, %v1071
      %v1104 = vand.u32 2147483647, %v1072
      %v1105 = vand.u32 2147483647, %v1073
      %v1106 = vand.u32 2147483647, %v1074
      %v1107 = vand.u32 2147483647, %v1075
      %v1108 = vand.u32 2147483647, %v1076
      %v1109 = vand.u32 2147483647, %v1077
      %v1110 = vand.u32 2147483647, %v1078
      %v1111 = vand.u32 2147483647, %v1079
      %v1112 = vand.u32 2147483647, %v1080
      %v1113 = vand.u32 2147483647, %v1081
      %v1114 = vand.u32 2147483647, %v1082
      %v1115 = vand.u32 2147483647, %v1083
      %v1116 = vand.u32 2147483647, %v1084
      %v1117 = vand.u32 2147483647, %v1085
      %v1118 = vand.u32 2147483647, %v1086
      %vm1119 = vcmask 261120
      %v1120 = vsel %vm1119, %v1087, 0.0
      %1121 = vadd.xlane.f32.xlu0 %v1120
      %v1122 = vpop.xlane.xlu0 %1121
      %v1123 = vsel %vm1119, %v1088, 0.0
      %1124 = vadd.xlane.f32.xlu0 %v1123
      %v1125 = vpop.xlane.xlu0 %1124
      %v1126 = vsel %vm1119, %v1089, 0.0
      %1127 = vadd.xlane.f32.xlu0 %v1126
      %v1128 = vpop.xlane.xlu0 %1127
      %v1129 = vsel %vm1119, %v1090, 0.0
      %1130 = vadd.xlane.f32.xlu0 %v1129
      %v1131 = vpop.xlane.xlu0 %1130
      %v1132 = vsel %vm1119, %v1091, 0.0
      %1133 = vadd.xlane.f32.xlu0 %v1132
      %v1134 = vpop.xlane.xlu0 %1133
      %v1135 = vsel %vm1119, %v1092, 0.0
      %1136 = vadd.xlane.f32.xlu0 %v1135
      %v1137 = vpop.xlane.xlu0 %1136
      %v1138 = vsel %vm1119, %v1093, 0.0
      %1139 = vadd.xlane.f32.xlu0 %v1138
      %v1140 = vpop.xlane.xlu0 %1139
      %v1141 = vsel %vm1119, %v1094, 0.0
      %1142 = vadd.xlane.f32.xlu0 %v1141
      %v1143 = vpop.xlane.xlu0 %1142
      %v1144 = vsel %vm1119, %v1095, 0.0
      %1145 = vadd.xlane.f32.xlu0 %v1144
      %v1146 = vpop.xlane.xlu0 %1145
      %v1147 = vsel %vm1119, %v1096, 0.0
      %1148 = vadd.xlane.f32.xlu0 %v1147
      %v1149 = vpop.xlane.xlu0 %1148
      %v1150 = vsel %vm1119, %v1097, 0.0
      %1151 = vadd.xlane.f32.xlu0 %v1150
      %v1152 = vpop.xlane.xlu0 %1151
      %v1153 = vsel %vm1119, %v1098, 0.0
      %1154 = vadd.xlane.f32.xlu0 %v1153
      %v1155 = vpop.xlane.xlu0 %1154
      %v1156 = vsel %vm1119, %v1099, 0.0
      %1157 = vadd.xlane.f32.xlu0 %v1156
      %v1158 = vpop.xlane.xlu0 %1157
      %v1159 = vsel %vm1119, %v1100, 0.0
      %1160 = vadd.xlane.f32.xlu0 %v1159
      %v1161 = vpop.xlane.xlu0 %1160
      %v1162 = vsel %vm1119, %v1101, 0.0
      %1163 = vadd.xlane.f32.xlu0 %v1162
      %v1164 = vpop.xlane.xlu0 %1163
      %v1165 = vsel %vm1119, %v1102, 0.0
      %1166 = vadd.xlane.f32.xlu0 %v1165
      %v1167 = vpop.xlane.xlu0 %1166
      %v1168 = vsel %vm1119, %v1103, 0.0
      %1169 = vadd.xlane.f32.xlu0 %v1168
      %v1170 = vpop.xlane.xlu0 %1169
      %v1171 = vsel %vm1119, %v1104, 0.0
      %1172 = vadd.xlane.f32.xlu0 %v1171
      %v1173 = vpop.xlane.xlu0 %1172
      %v1174 = vsel %vm1119, %v1105, 0.0
      %1175 = vadd.xlane.f32.xlu0 %v1174
      %v1176 = vpop.xlane.xlu0 %1175
      %v1177 = vsel %vm1119, %v1106, 0.0
      %1178 = vadd.xlane.f32.xlu0 %v1177
      %v1179 = vpop.xlane.xlu0 %1178
      %v1180 = vsel %vm1119, %v1107, 0.0
      %1181 = vadd.xlane.f32.xlu0 %v1180
      %v1182 = vpop.xlane.xlu0 %1181
      %v1183 = vsel %vm1119, %v1108, 0.0
      %1184 = vadd.xlane.f32.xlu0 %v1183
      %v1185 = vpop.xlane.xlu0 %1184
      %v1186 = vsel %vm1119, %v1109, 0.0
      %1187 = vadd.xlane.f32.xlu0 %v1186
      %v1188 = vpop.xlane.xlu0 %1187
      %v1189 = vsel %vm1119, %v1110, 0.0
      %1190 = vadd.xlane.f32.xlu0 %v1189
      %v1191 = vpop.xlane.xlu0 %1190
      %v1192 = vsel %vm1119, %v1111, 0.0
      %1193 = vadd.xlane.f32.xlu0 %v1192
      %v1194 = vpop.xlane.xlu0 %1193
      %v1195 = vsel %vm1119, %v1112, 0.0
      %1196 = vadd.xlane.f32.xlu0 %v1195
      %v1197 = vpop.xlane.xlu0 %1196
      %v1198 = vsel %vm1119, %v1113, 0.0
      %1199 = vadd.xlane.f32.xlu0 %v1198
      %v1200 = vpop.xlane.xlu0 %1199
      %v1201 = vsel %vm1119, %v1114, 0.0
      %1202 = vadd.xlane.f32.xlu0 %v1201
      %v1203 = vpop.xlane.xlu0 %1202
      %v1204 = vsel %vm1119, %v1115, 0.0
      %1205 = vadd.xlane.f32.xlu0 %v1204
      %v1206 = vpop.xlane.xlu0 %1205
      %v1207 = vsel %vm1119, %v1116, 0.0
      %1208 = vadd.xlane.f32.xlu0 %v1207
      %v1209 = vpop.xlane.xlu0 %1208
      %v1210 = vsel %vm1119, %v1117, 0.0
      %1211 = vadd.xlane.f32.xlu0 %v1210
      %v1212 = vpop.xlane.xlu0 %1211
      %v1213 = vsel %vm1119, %v1118, 0.0
      %1214 = vadd.xlane.f32.xlu0 %v1213
      %v1215 = vpop.xlane.xlu0 %1214
      %v1216 = vmax.f32 %v1122, 1e-12
      %v1217 = vmax.f32 %v1125, 1e-12
      %v1218 = vmax.f32 %v1128, 1e-12
      %v1219 = vmax.f32 %v1131, 1e-12
      %v1220 = vmax.f32 %v1134, 1e-12
      %v1221 = vmax.f32 %v1137, 1e-12
      %v1222 = vmax.f32 %v1140, 1e-12
      %v1223 = vmax.f32 %v1143, 1e-12
      %v1224 = vmax.f32 %v1146, 1e-12
      %v1225 = vmax.f32 %v1149, 1e-12
      %v1226 = vmax.f32 %v1152, 1e-12
      %v1227 = vmax.f32 %v1155, 1e-12
      %v1228 = vmax.f32 %v1158, 1e-12
      %v1229 = vmax.f32 %v1161, 1e-12
      %v1230 = vmax.f32 %v1164, 1e-12
      %v1231 = vmax.f32 %v1167, 1e-12
      %v1232 = vmax.f32 %v1170, 1e-12
      %v1233 = vmax.f32 %v1173, 1e-12
      %v1234 = vmax.f32 %v1176, 1e-12
      %v1235 = vmax.f32 %v1179, 1e-12
      %v1236 = vmax.f32 %v1182, 1e-12
      %v1237 = vmax.f32 %v1185, 1e-12
      %v1238 = vmax.f32 %v1188, 1e-12
      %v1239 = vmax.f32 %v1191, 1e-12
      %v1240 = vmax.f32 %v1194, 1e-12
      %v1241 = vmax.f32 %v1197, 1e-12
      %v1242 = vmax.f32 %v1200, 1e-12
      %v1243 = vmax.f32 %v1203, 1e-12
      %v1244 = vmax.f32 %v1206, 1e-12
      %v1245 = vmax.f32 %v1209, 1e-12
      %v1246 = vmax.f32 %v1212, 1e-12
      %v1247 = vmax.f32 %v1215, 1e-12
      %v1248 = vrcp.pop %v1216
      %v1249 = vmul.f32 %v1216, %v1248
      %v1250 = vsub.f32 1.0, %v1249
      %v1251 = vmul.f32 %v1248, %v1250
      %v1252 = vadd.f32 %v1248, %v1251
      %vm1253 = vweird.f32 %v1216
      %vm1254 = vweird.f32 %v1248
      %vm1255 = vmor %vm1253, %vm1254
      %v1256 = vsel %vm1255, %v1248, %v1252
      %v1257 = vand.u32 2147483647, %v1216
      %vm1258 = vcmp.eq.f32.partialorder %v1257, 8.507059e+37
      %v1259 = vand.u32 %v1216, 2147483648
      %v1260 = vor.u32 1.1754944e-38, %v1259
      %v1261 = vsel %vm1258, %v1260, %v1256
      %v1262 = vmul.f32 1.0, %v1261
      %v1263 = vrcp.pop %v1217
      %v1264 = vmul.f32 %v1217, %v1263
      %v1265 = vsub.f32 1.0, %v1264
      %v1266 = vmul.f32 %v1263, %v1265
      %v1267 = vadd.f32 %v1263, %v1266
      %vm1268 = vweird.f32 %v1217
      %vm1269 = vweird.f32 %v1263
      %vm1270 = vmor %vm1268, %vm1269
      %v1271 = vsel %vm1270, %v1263, %v1267
      %v1272 = vand.u32 2147483647, %v1217
      %vm1273 = vcmp.eq.f32.partialorder %v1272, 8.507059e+37
      %v1274 = vand.u32 %v1217, 2147483648
      %v1275 = vor.u32 1.1754944e-38, %v1274
      %v1276 = vsel %vm1273, %v1275, %v1271
      %v1277 = vmul.f32 1.0, %v1276
      %v1278 = vrcp.pop %v1218
      %v1279 = vmul.f32 %v1218, %v1278
      %v1280 = vsub.f32 1.0, %v1279
      %v1281 = vmul.f32 %v1278, %v1280
      %v1282 = vadd.f32 %v1278, %v1281
      %vm1283 = vweird.f32 %v1218
      %vm1284 = vweird.f32 %v1278
      %vm1285 = vmor %vm1283, %vm1284
      %v1286 = vsel %vm1285, %v1278, %v1282
      %v1287 = vand.u32 2147483647, %v1218
      %vm1288 = vcmp.eq.f32.partialorder %v1287, 8.507059e+37
      %v1289 = vand.u32 %v1218, 2147483648
      %v1290 = vor.u32 1.1754944e-38, %v1289
      %v1291 = vsel %vm1288, %v1290, %v1286
      %v1292 = vmul.f32 1.0, %v1291
      %v1293 = vrcp.pop %v1219
      %v1294 = vmul.f32 %v1219, %v1293
      %v1295 = vsub.f32 1.0, %v1294
      %v1296 = vmul.f32 %v1293, %v1295
      %v1297 = vadd.f32 %v1293, %v1296
      %vm1298 = vweird.f32 %v1219
      %vm1299 = vweird.f32 %v1293
      %vm1300 = vmor %vm1298, %vm1299
      %v1301 = vsel %vm1300, %v1293, %v1297
      %v1302 = vand.u32 2147483647, %v1219
      %vm1303 = vcmp.eq.f32.partialorder %v1302, 8.507059e+37
      %v1304 = vand.u32 %v1219, 2147483648
      %v1305 = vor.u32 1.1754944e-38, %v1304
      %v1306 = vsel %vm1303, %v1305, %v1301
      %v1307 = vmul.f32 1.0, %v1306
      %v1308 = vrcp.pop %v1220
      %v1309 = vmul.f32 %v1220, %v1308
      %v1310 = vsub.f32 1.0, %v1309
      %v1311 = vmul.f32 %v1308, %v1310
      %v1312 = vadd.f32 %v1308, %v1311
      %vm1313 = vweird.f32 %v1220
      %vm1314 = vweird.f32 %v1308
      %vm1315 = vmor %vm1313, %vm1314
      %v1316 = vsel %vm1315, %v1308, %v1312
      %v1317 = vand.u32 2147483647, %v1220
      %vm1318 = vcmp.eq.f32.partialorder %v1317, 8.507059e+37
      %v1319 = vand.u32 %v1220, 2147483648
      %v1320 = vor.u32 1.1754944e-38, %v1319
      %v1321 = vsel %vm1318, %v1320, %v1316
      %v1322 = vmul.f32 1.0, %v1321
      %v1323 = vrcp.pop %v1221
      %v1324 = vmul.f32 %v1221, %v1323
      %v1325 = vsub.f32 1.0, %v1324
      %v1326 = vmul.f32 %v1323, %v1325
      %v1327 = vadd.f32 %v1323, %v1326
      %vm1328 = vweird.f32 %v1221
      %vm1329 = vweird.f32 %v1323
      %vm1330 = vmor %vm1328, %vm1329
      %v1331 = vsel %vm1330, %v1323, %v1327
      %v1332 = vand.u32 2147483647, %v1221
      %vm1333 = vcmp.eq.f32.partialorder %v1332, 8.507059e+37
      %v1334 = vand.u32 %v1221, 2147483648
      %v1335 = vor.u32 1.1754944e-38, %v1334
      %v1336 = vsel %vm1333, %v1335, %v1331
      %v1337 = vmul.f32 1.0, %v1336
      %v1338 = vrcp.pop %v1222
      %v1339 = vmul.f32 %v1222, %v1338
      %v1340 = vsub.f32 1.0, %v1339
      %v1341 = vmul.f32 %v1338, %v1340
      %v1342 = vadd.f32 %v1338, %v1341
      %vm1343 = vweird.f32 %v1222
      %vm1344 = vweird.f32 %v1338
      %vm1345 = vmor %vm1343, %vm1344
      %v1346 = vsel %vm1345, %v1338, %v1342
      %v1347 = vand.u32 2147483647, %v1222
      %vm1348 = vcmp.eq.f32.partialorder %v1347, 8.507059e+37
      %v1349 = vand.u32 %v1222, 2147483648
      %v1350 = vor.u32 1.1754944e-38, %v1349
      %v1351 = vsel %vm1348, %v1350, %v1346
      %v1352 = vmul.f32 1.0, %v1351
      %v1353 = vrcp.pop %v1223
      %v1354 = vmul.f32 %v1223, %v1353
      %v1355 = vsub.f32 1.0, %v1354
      %v1356 = vmul.f32 %v1353, %v1355
      %v1357 = vadd.f32 %v1353, %v1356
      %vm1358 = vweird.f32 %v1223
      %vm1359 = vweird.f32 %v1353
      %vm1360 = vmor %vm1358, %vm1359
      %v1361 = vsel %vm1360, %v1353, %v1357
      %v1362 = vand.u32 2147483647, %v1223
      %vm1363 = vcmp.eq.f32.partialorder %v1362, 8.507059e+37
      %v1364 = vand.u32 %v1223, 2147483648
      %v1365 = vor.u32 1.1754944e-38, %v1364
      %v1366 = vsel %vm1363, %v1365, %v1361
      %v1367 = vmul.f32 1.0, %v1366
      %v1368 = vrcp.pop %v1224
      %v1369 = vmul.f32 %v1224, %v1368
      %v1370 = vsub.f32 1.0, %v1369
      %v1371 = vmul.f32 %v1368, %v1370
      %v1372 = vadd.f32 %v1368, %v1371
      %vm1373 = vweird.f32 %v1224
      %vm1374 = vweird.f32 %v1368
      %vm1375 = vmor %vm1373, %vm1374
      %v1376 = vsel %vm1375, %v1368, %v1372
      %v1377 = vand.u32 2147483647, %v1224
      %vm1378 = vcmp.eq.f32.partialorder %v1377, 8.507059e+37
      %v1379 = vand.u32 %v1224, 2147483648
      %v1380 = vor.u32 1.1754944e-38, %v1379
      %v1381 = vsel %vm1378, %v1380, %v1376
      %v1382 = vmul.f32 1.0, %v1381
      %v1383 = vrcp.pop %v1225
      %v1384 = vmul.f32 %v1225, %v1383
      %v1385 = vsub.f32 1.0, %v1384
      %v1386 = vmul.f32 %v1383, %v1385
      %v1387 = vadd.f32 %v1383, %v1386
      %vm1388 = vweird.f32 %v1225
      %vm1389 = vweird.f32 %v1383
      %vm1390 = vmor %vm1388, %vm1389
      %v1391 = vsel %vm1390, %v1383, %v1387
      %v1392 = vand.u32 2147483647, %v1225
      %vm1393 = vcmp.eq.f32.partialorder %v1392, 8.507059e+37
      %v1394 = vand.u32 %v1225, 2147483648
      %v1395 = vor.u32 1.1754944e-38, %v1394
      %v1396 = vsel %vm1393, %v1395, %v1391
      %v1397 = vmul.f32 1.0, %v1396
      %v1398 = vrcp.pop %v1226
      %v1399 = vmul.f32 %v1226, %v1398
      %v1400 = vsub.f32 1.0, %v1399
      %v1401 = vmul.f32 %v1398, %v1400
      %v1402 = vadd.f32 %v1398, %v1401
      %vm1403 = vweird.f32 %v1226
      %vm1404 = vweird.f32 %v1398
      %vm1405 = vmor %vm1403, %vm1404
      %v1406 = vsel %vm1405, %v1398, %v1402
      %v1407 = vand.u32 2147483647, %v1226
      %vm1408 = vcmp.eq.f32.partialorder %v1407, 8.507059e+37
      %v1409 = vand.u32 %v1226, 2147483648
      %v1410 = vor.u32 1.1754944e-38, %v1409
      %v1411 = vsel %vm1408, %v1410, %v1406
      %v1412 = vmul.f32 1.0, %v1411
      %v1413 = vrcp.pop %v1227
      %v1414 = vmul.f32 %v1227, %v1413
      %v1415 = vsub.f32 1.0, %v1414
      %v1416 = vmul.f32 %v1413, %v1415
      %v1417 = vadd.f32 %v1413, %v1416
      %vm1418 = vweird.f32 %v1227
      %vm1419 = vweird.f32 %v1413
      %vm1420 = vmor %vm1418, %vm1419
      %v1421 = vsel %vm1420, %v1413, %v1417
      %v1422 = vand.u32 2147483647, %v1227
      %vm1423 = vcmp.eq.f32.partialorder %v1422, 8.507059e+37
      %v1424 = vand.u32 %v1227, 2147483648
      %v1425 = vor.u32 1.1754944e-38, %v1424
      %v1426 = vsel %vm1423, %v1425, %v1421
      %v1427 = vmul.f32 1.0, %v1426
      %v1428 = vrcp.pop %v1228
      %v1429 = vmul.f32 %v1228, %v1428
      %v1430 = vsub.f32 1.0, %v1429
      %v1431 = vmul.f32 %v1428, %v1430
      %v1432 = vadd.f32 %v1428, %v1431
      %vm1433 = vweird.f32 %v1228
      %vm1434 = vweird.f32 %v1428
      %vm1435 = vmor %vm1433, %vm1434
      %v1436 = vsel %vm1435, %v1428, %v1432
      %v1437 = vand.u32 2147483647, %v1228
      %vm1438 = vcmp.eq.f32.partialorder %v1437, 8.507059e+37
      %v1439 = vand.u32 %v1228, 2147483648
      %v1440 = vor.u32 1.1754944e-38, %v1439
      %v1441 = vsel %vm1438, %v1440, %v1436
      %v1442 = vmul.f32 1.0, %v1441
      %v1443 = vrcp.pop %v1229
      %v1444 = vmul.f32 %v1229, %v1443
      %v1445 = vsub.f32 1.0, %v1444
      %v1446 = vmul.f32 %v1443, %v1445
      %v1447 = vadd.f32 %v1443, %v1446
      %vm1448 = vweird.f32 %v1229
      %vm1449 = vweird.f32 %v1443
      %vm1450 = vmor %vm1448, %vm1449
      %v1451 = vsel %vm1450, %v1443, %v1447
      %v1452 = vand.u32 2147483647, %v1229
      %vm1453 = vcmp.eq.f32.partialorder %v1452, 8.507059e+37
      %v1454 = vand.u32 %v1229, 2147483648
      %v1455 = vor.u32 1.1754944e-38, %v1454
      %v1456 = vsel %vm1453, %v1455, %v1451
      %v1457 = vmul.f32 1.0, %v1456
      %v1458 = vrcp.pop %v1230
      %v1459 = vmul.f32 %v1230, %v1458
      %v1460 = vsub.f32 1.0, %v1459
      %v1461 = vmul.f32 %v1458, %v1460
      %v1462 = vadd.f32 %v1458, %v1461
      %vm1463 = vweird.f32 %v1230
      %vm1464 = vweird.f32 %v1458
      %vm1465 = vmor %vm1463, %vm1464
      %v1466 = vsel %vm1465, %v1458, %v1462
      %v1467 = vand.u32 2147483647, %v1230
      %vm1468 = vcmp.eq.f32.partialorder %v1467, 8.507059e+37
      %v1469 = vand.u32 %v1230, 2147483648
      %v1470 = vor.u32 1.1754944e-38, %v1469
      %v1471 = vsel %vm1468, %v1470, %v1466
      %v1472 = vmul.f32 1.0, %v1471
      %v1473 = vrcp.pop %v1231
      %v1474 = vmul.f32 %v1231, %v1473
      %v1475 = vsub.f32 1.0, %v1474
      %v1476 = vmul.f32 %v1473, %v1475
      %v1477 = vadd.f32 %v1473, %v1476
      %vm1478 = vweird.f32 %v1231
      %vm1479 = vweird.f32 %v1473
      %vm1480 = vmor %vm1478, %vm1479
      %v1481 = vsel %vm1480, %v1473, %v1477
      %v1482 = vand.u32 2147483647, %v1231
      %vm1483 = vcmp.eq.f32.partialorder %v1482, 8.507059e+37
      %v1484 = vand.u32 %v1231, 2147483648
      %v1485 = vor.u32 1.1754944e-38, %v1484
      %v1486 = vsel %vm1483, %v1485, %v1481
      %v1487 = vmul.f32 1.0, %v1486
      %v1488 = vrcp.pop %v1232
      %v1489 = vmul.f32 %v1232, %v1488
      %v1490 = vsub.f32 1.0, %v1489
      %v1491 = vmul.f32 %v1488, %v1490
      %v1492 = vadd.f32 %v1488, %v1491
      %vm1493 = vweird.f32 %v1232
      %vm1494 = vweird.f32 %v1488
      %vm1495 = vmor %vm1493, %vm1494
      %v1496 = vsel %vm1495, %v1488, %v1492
      %v1497 = vand.u32 2147483647, %v1232
      %vm1498 = vcmp.eq.f32.partialorder %v1497, 8.507059e+37
      %v1499 = vand.u32 %v1232, 2147483648
      %v1500 = vor.u32 1.1754944e-38, %v1499
      %v1501 = vsel %vm1498, %v1500, %v1496
      %v1502 = vmul.f32 1.0, %v1501
      %v1503 = vrcp.pop %v1233
      %v1504 = vmul.f32 %v1233, %v1503
      %v1505 = vsub.f32 1.0, %v1504
      %v1506 = vmul.f32 %v1503, %v1505
      %v1507 = vadd.f32 %v1503, %v1506
      %vm1508 = vweird.f32 %v1233
      %vm1509 = vweird.f32 %v1503
      %vm1510 = vmor %vm1508, %vm1509
      %v1511 = vsel %vm1510, %v1503, %v1507
      %v1512 = vand.u32 2147483647, %v1233
      %vm1513 = vcmp.eq.f32.partialorder %v1512, 8.507059e+37
      %v1514 = vand.u32 %v1233, 2147483648
      %v1515 = vor.u32 1.1754944e-38, %v1514
      %v1516 = vsel %vm1513, %v1515, %v1511
      %v1517 = vmul.f32 1.0, %v1516
      %v1518 = vrcp.pop %v1234
      %v1519 = vmul.f32 %v1234, %v1518
      %v1520 = vsub.f32 1.0, %v1519
      %v1521 = vmul.f32 %v1518, %v1520
      %v1522 = vadd.f32 %v1518, %v1521
      %vm1523 = vweird.f32 %v1234
      %vm1524 = vweird.f32 %v1518
      %vm1525 = vmor %vm1523, %vm1524
      %v1526 = vsel %vm1525, %v1518, %v1522
      %v1527 = vand.u32 2147483647, %v1234
      %vm1528 = vcmp.eq.f32.partialorder %v1527, 8.507059e+37
      %v1529 = vand.u32 %v1234, 2147483648
      %v1530 = vor.u32 1.1754944e-38, %v1529
      %v1531 = vsel %vm1528, %v1530, %v1526
      %v1532 = vmul.f32 1.0, %v1531
      %v1533 = vrcp.pop %v1235
      %v1534 = vmul.f32 %v1235, %v1533
      %v1535 = vsub.f32 1.0, %v1534
      %v1536 = vmul.f32 %v1533, %v1535
      %v1537 = vadd.f32 %v1533, %v1536
      %vm1538 = vweird.f32 %v1235
      %vm1539 = vweird.f32 %v1533
      %vm1540 = vmor %vm1538, %vm1539
      %v1541 = vsel %vm1540, %v1533, %v1537
      %v1542 = vand.u32 2147483647, %v1235
      %vm1543 = vcmp.eq.f32.partialorder %v1542, 8.507059e+37
      %v1544 = vand.u32 %v1235, 2147483648
      %v1545 = vor.u32 1.1754944e-38, %v1544
      %v1546 = vsel %vm1543, %v1545, %v1541
      %v1547 = vmul.f32 1.0, %v1546
      %v1548 = vrcp.pop %v1236
      %v1549 = vmul.f32 %v1236, %v1548
      %v1550 = vsub.f32 1.0, %v1549
      %v1551 = vmul.f32 %v1548, %v1550
      %v1552 = vadd.f32 %v1548, %v1551
      %vm1553 = vweird.f32 %v1236
      %vm1554 = vweird.f32 %v1548
      %vm1555 = vmor %vm1553, %vm1554
      %v1556 = vsel %vm1555, %v1548, %v1552
      %v1557 = vand.u32 2147483647, %v1236
      %vm1558 = vcmp.eq.f32.partialorder %v1557, 8.507059e+37
      %v1559 = vand.u32 %v1236, 2147483648
      %v1560 = vor.u32 1.1754944e-38, %v1559
      %v1561 = vsel %vm1558, %v1560, %v1556
      %v1562 = vmul.f32 1.0, %v1561
      %v1563 = vrcp.pop %v1237
      %v1564 = vmul.f32 %v1237, %v1563
      %v1565 = vsub.f32 1.0, %v1564
      %v1566 = vmul.f32 %v1563, %v1565
      %v1567 = vadd.f32 %v1563, %v1566
      %vm1568 = vweird.f32 %v1237
      %vm1569 = vweird.f32 %v1563
      %vm1570 = vmor %vm1568, %vm1569
      %v1571 = vsel %vm1570, %v1563, %v1567
      %v1572 = vand.u32 2147483647, %v1237
      %vm1573 = vcmp.eq.f32.partialorder %v1572, 8.507059e+37
      %v1574 = vand.u32 %v1237, 2147483648
      %v1575 = vor.u32 1.1754944e-38, %v1574
      %v1576 = vsel %vm1573, %v1575, %v1571
      %v1577 = vmul.f32 1.0, %v1576
      %v1578 = vrcp.pop %v1238
      %v1579 = vmul.f32 %v1238, %v1578
      %v1580 = vsub.f32 1.0, %v1579
      %v1581 = vmul.f32 %v1578, %v1580
      %v1582 = vadd.f32 %v1578, %v1581
      %vm1583 = vweird.f32 %v1238
      %vm1584 = vweird.f32 %v1578
      %vm1585 = vmor %vm1583, %vm1584
      %v1586 = vsel %vm1585, %v1578, %v1582
      %v1587 = vand.u32 2147483647, %v1238
      %vm1588 = vcmp.eq.f32.partialorder %v1587, 8.507059e+37
      %v1589 = vand.u32 %v1238, 2147483648
      %v1590 = vor.u32 1.1754944e-38, %v1589
      %v1591 = vsel %vm1588, %v1590, %v1586
      %v1592 = vmul.f32 1.0, %v1591
      %v1593 = vrcp.pop %v1239
      %v1594 = vmul.f32 %v1239, %v1593
      %v1595 = vsub.f32 1.0, %v1594
      %v1596 = vmul.f32 %v1593, %v1595
      %v1597 = vadd.f32 %v1593, %v1596
      %vm1598 = vweird.f32 %v1239
      %vm1599 = vweird.f32 %v1593
      %vm1600 = vmor %vm1598, %vm1599
      %v1601 = vsel %vm1600, %v1593, %v1597
      %v1602 = vand.u32 2147483647, %v1239
      %vm1603 = vcmp.eq.f32.partialorder %v1602, 8.507059e+37
      %v1604 = vand.u32 %v1239, 2147483648
      %v1605 = vor.u32 1.1754944e-38, %v1604
      %v1606 = vsel %vm1603, %v1605, %v1601
      %v1607 = vmul.f32 1.0, %v1606
      %v1608 = vrcp.pop %v1240
      %v1609 = vmul.f32 %v1240, %v1608
      %v1610 = vsub.f32 1.0, %v1609
      %v1611 = vmul.f32 %v1608, %v1610
      %v1612 = vadd.f32 %v1608, %v1611
      %vm1613 = vweird.f32 %v1240
      %vm1614 = vweird.f32 %v1608
      %vm1615 = vmor %vm1613, %vm1614
      %v1616 = vsel %vm1615, %v1608, %v1612
      %v1617 = vand.u32 2147483647, %v1240
      %vm1618 = vcmp.eq.f32.partialorder %v1617, 8.507059e+37
      %v1619 = vand.u32 %v1240, 2147483648
      %v1620 = vor.u32 1.1754944e-38, %v1619
      %v1621 = vsel %vm1618, %v1620, %v1616
      %v1622 = vmul.f32 1.0, %v1621
      %v1623 = vrcp.pop %v1241
      %v1624 = vmul.f32 %v1241, %v1623
      %v1625 = vsub.f32 1.0, %v1624
      %v1626 = vmul.f32 %v1623, %v1625
      %v1627 = vadd.f32 %v1623, %v1626
      %vm1628 = vweird.f32 %v1241
      %vm1629 = vweird.f32 %v1623
      %vm1630 = vmor %vm1628, %vm1629
      %v1631 = vsel %vm1630, %v1623, %v1627
      %v1632 = vand.u32 2147483647, %v1241
      %vm1633 = vcmp.eq.f32.partialorder %v1632, 8.507059e+37
      %v1634 = vand.u32 %v1241, 2147483648
      %v1635 = vor.u32 1.1754944e-38, %v1634
      %v1636 = vsel %vm1633, %v1635, %v1631
      %v1637 = vmul.f32 1.0, %v1636
      %v1638 = vrcp.pop %v1242
      %v1639 = vmul.f32 %v1242, %v1638
      %v1640 = vsub.f32 1.0, %v1639
      %v1641 = vmul.f32 %v1638, %v1640
      %v1642 = vadd.f32 %v1638, %v1641
      %vm1643 = vweird.f32 %v1242
      %vm1644 = vweird.f32 %v1638
      %vm1645 = vmor %vm1643, %vm1644
      %v1646 = vsel %vm1645, %v1638, %v1642
      %v1647 = vand.u32 2147483647, %v1242
      %vm1648 = vcmp.eq.f32.partialorder %v1647, 8.507059e+37
      %v1649 = vand.u32 %v1242, 2147483648
      %v1650 = vor.u32 1.1754944e-38, %v1649
      %v1651 = vsel %vm1648, %v1650, %v1646
      %v1652 = vmul.f32 1.0, %v1651
      %v1653 = vrcp.pop %v1243
      %v1654 = vmul.f32 %v1243, %v1653
      %v1655 = vsub.f32 1.0, %v1654
      %v1656 = vmul.f32 %v1653, %v1655
      %v1657 = vadd.f32 %v1653, %v1656
      %vm1658 = vweird.f32 %v1243
      %vm1659 = vweird.f32 %v1653
      %vm1660 = vmor %vm1658, %vm1659
      %v1661 = vsel %vm1660, %v1653, %v1657
      %v1662 = vand.u32 2147483647, %v1243
      %vm1663 = vcmp.eq.f32.partialorder %v1662, 8.507059e+37
      %v1664 = vand.u32 %v1243, 2147483648
      %v1665 = vor.u32 1.1754944e-38, %v1664
      %v1666 = vsel %vm1663, %v1665, %v1661
      %v1667 = vmul.f32 1.0, %v1666
      %v1668 = vrcp.pop %v1244
      %v1669 = vmul.f32 %v1244, %v1668
      %v1670 = vsub.f32 1.0, %v1669
      %v1671 = vmul.f32 %v1668, %v1670
      %v1672 = vadd.f32 %v1668, %v1671
      %vm1673 = vweird.f32 %v1244
      %vm1674 = vweird.f32 %v1668
      %vm1675 = vmor %vm1673, %vm1674
      %v1676 = vsel %vm1675, %v1668, %v1672
      %v1677 = vand.u32 2147483647, %v1244
      %vm1678 = vcmp.eq.f32.partialorder %v1677, 8.507059e+37
      %v1679 = vand.u32 %v1244, 2147483648
      %v1680 = vor.u32 1.1754944e-38, %v1679
      %v1681 = vsel %vm1678, %v1680, %v1676
      %v1682 = vmul.f32 1.0, %v1681
      %v1683 = vrcp.pop %v1245
      %v1684 = vmul.f32 %v1245, %v1683
      %v1685 = vsub.f32 1.0, %v1684
      %v1686 = vmul.f32 %v1683, %v1685
      %v1687 = vadd.f32 %v1683, %v1686
      %vm1688 = vweird.f32 %v1245
      %vm1689 = vweird.f32 %v1683
      %vm1690 = vmor %vm1688, %vm1689
      %v1691 = vsel %vm1690, %v1683, %v1687
      %v1692 = vand.u32 2147483647, %v1245
      %vm1693 = vcmp.eq.f32.partialorder %v1692, 8.507059e+37
      %v1694 = vand.u32 %v1245, 2147483648
      %v1695 = vor.u32 1.1754944e-38, %v1694
      %v1696 = vsel %vm1693, %v1695, %v1691
      %v1697 = vmul.f32 1.0, %v1696
      %v1698 = vrcp.pop %v1246
      %v1699 = vmul.f32 %v1246, %v1698
      %v1700 = vsub.f32 1.0, %v1699
      %v1701 = vmul.f32 %v1698, %v1700
      %v1702 = vadd.f32 %v1698, %v1701
      %vm1703 = vweird.f32 %v1246
      %vm1704 = vweird.f32 %v1698
      %vm1705 = vmor %vm1703, %vm1704
      %v1706 = vsel %vm1705, %v1698, %v1702
      %v1707 = vand.u32 2147483647, %v1246
      %vm1708 = vcmp.eq.f32.partialorder %v1707, 8.507059e+37
      %v1709 = vand.u32 %v1246, 2147483648
      %v1710 = vor.u32 1.1754944e-38, %v1709
      %v1711 = vsel %vm1708, %v1710, %v1706
      %v1712 = vmul.f32 1.0, %v1711
      %v1713 = vrcp.pop %v1247
      %v1714 = vmul.f32 %v1247, %v1713
      %v1715 = vsub.f32 1.0, %v1714
      %v1716 = vmul.f32 %v1713, %v1715
      %v1717 = vadd.f32 %v1713, %v1716
      %vm1718 = vweird.f32 %v1247
      %vm1719 = vweird.f32 %v1713
      %vm1720 = vmor %vm1718, %vm1719
      %v1721 = vsel %vm1720, %v1713, %v1717
      %v1722 = vand.u32 2147483647, %v1247
      %vm1723 = vcmp.eq.f32.partialorder %v1722, 8.507059e+37
      %v1724 = vand.u32 %v1247, 2147483648
      %v1725 = vor.u32 1.1754944e-38, %v1724
      %v1726 = vsel %vm1723, %v1725, %v1721
      %v1727 = vmul.f32 1.0, %v1726
      %v1728 = vmul.f32 %v1055, %v1262
      %v1729 = vmul.f32 %v1056, %v1277
      %v1730 = vmul.f32 %v1057, %v1292
      %v1731 = vmul.f32 %v1058, %v1307
      %v1732 = vmul.f32 %v1059, %v1322
      %v1733 = vmul.f32 %v1060, %v1337
      %v1734 = vmul.f32 %v1061, %v1352
      %v1735 = vmul.f32 %v1062, %v1367
      %v1736 = vmul.f32 %v1063, %v1382
      %v1737 = vmul.f32 %v1064, %v1397
      %v1738 = vmul.f32 %v1065, %v1412
      %v1739 = vmul.f32 %v1066, %v1427
      %v1740 = vmul.f32 %v1067, %v1442
      %v1741 = vmul.f32 %v1068, %v1457
      %v1742 = vmul.f32 %v1069, %v1472
      %v1743 = vmul.f32 %v1070, %v1487
      %v1744 = vmul.f32 %v1071, %v1502
      %v1745 = vmul.f32 %v1072, %v1517
      %v1746 = vmul.f32 %v1073, %v1532
      %v1747 = vmul.f32 %v1074, %v1547
      %v1748 = vmul.f32 %v1075, %v1562
      %v1749 = vmul.f32 %v1076, %v1577
      %v1750 = vmul.f32 %v1077, %v1592
      %v1751 = vmul.f32 %v1078, %v1607
      %v1752 = vmul.f32 %v1079, %v1622
      %v1753 = vmul.f32 %v1080, %v1637
      %v1754 = vmul.f32 %v1081, %v1652
      %v1755 = vmul.f32 %v1082, %v1667
      %v1756 = vmul.f32 %v1083, %v1682
      %v1757 = vmul.f32 %v1084, %v1697
      %v1758 = vmul.f32 %v1085, %v1712
      %v1759 = vmul.f32 %v1086, %v1727
      %p1760 = scmp.eq.s32.totalorder %s20, %s19
      // Predicated region
      $region33: #{tpu_custom_call.1} parent=27 // pred_check
        %p1761 = pneg %p1760
      $region34: #{tpu_custom_call.1} parent=27 // pred_check_branch
        %1763 = sbr.rel (%p1761) target = $region36
      $region35: #{tpu_custom_call.1} parent=27 // pred_region
        %v1764 = vld [vmem:[%s199] sm:$0xff]
        %v1765 = vld [vmem:[%s199 + $0x8] sm:$0xff]
        %v1766 = vld [vmem:[%s199 + $0x10] sm:$0xff]
        %v1767 = vld [vmem:[%s199 + $0x18] sm:$0xff]
        %v1768 = vld [vmem:[%s199 + $0x20] sm:$0xff]
        %v1769 = vld [vmem:[%s199 + $0x28] sm:$0xff]
        %v1770 = vld [vmem:[%s199 + $0x30] sm:$0xff]
        %v1771 = vld [vmem:[%s199 + $0x38] sm:$0xff]
        %v1772 = vld [vmem:[%s199 + $0x40] sm:$0xff]
        %v1773 = vld [vmem:[%s199 + $0x48] sm:$0xff]
        %v1774 = vld [vmem:[%s199 + $0x50] sm:$0xff]
        %v1775 = vld [vmem:[%s199 + $0x58] sm:$0xff]
        %v1776 = vld [vmem:[%s199 + $0x60] sm:$0xff]
        %v1777 = vld [vmem:[%s199 + $0x68] sm:$0xff]
        %v1778 = vld [vmem:[%s199 + $0x70] sm:$0xff]
        %v1779 = vld [vmem:[%s199 + $0x78] sm:$0xff]
        %v1780 = vld [vmem:[%s199 + $0x80] sm:$0xff]
        %v1781 = vld [vmem:[%s199 + $0x88] sm:$0xff]
        %v1782 = vld [vmem:[%s199 + $0x90] sm:$0xff]
        %v1783 = vld [vmem:[%s199 + $0x98] sm:$0xff]
        %v1784 = vld [vmem:[%s199 + $0xa0] sm:$0xff]
        %v1785 = vld [vmem:[%s199 + $0xa8] sm:$0xff]
        %v1786 = vld [vmem:[%s199 + $0xb0] sm:$0xff]
        %v1787 = vld [vmem:[%s199 + $0xb8] sm:$0xff]
        %v1788 = vld [vmem:[%s199 + $0xc0] sm:$0xff]
        %v1789 = vld [vmem:[%s199 + $0xc8] sm:$0xff]
        %v1790 = vld [vmem:[%s199 + $0xd0] sm:$0xff]
        %v1791 = vld [vmem:[%s199 + $0xd8] sm:$0xff]
        %v1792 = vld [vmem:[%s199 + $0xe0] sm:$0xff]
        %v1793 = vld [vmem:[%s199 + $0xe8] sm:$0xff]
        %v1794 = vld [vmem:[%s199 + $0xf0] sm:$0xff]
        %v1795 = vld [vmem:[%s199 + $0xf8] sm:$0xff]
        %v1796 = vand.u32 2147483647, %v1764
        %v1797 = vand.u32 2147483647, %v1765
        %v1798 = vand.u32 2147483647, %v1766
        %v1799 = vand.u32 2147483647, %v1767
        %v1800 = vand.u32 2147483647, %v1768
        %v1801 = vand.u32 2147483647, %v1769
        %v1802 = vand.u32 2147483647, %v1770
        %v1803 = vand.u32 2147483647, %v1771
        %v1804 = vand.u32 2147483647, %v1772
        %v1805 = vand.u32 2147483647, %v1773
        %v1806 = vand.u32 2147483647, %v1774
        %v1807 = vand.u32 2147483647, %v1775
        %v1808 = vand.u32 2147483647, %v1776
        %v1809 = vand.u32 2147483647, %v1777
        %v1810 = vand.u32 2147483647, %v1778
        %v1811 = vand.u32 2147483647, %v1779
        %v1812 = vand.u32 2147483647, %v1780
        %v1813 = vand.u32 2147483647, %v1781
        %v1814 = vand.u32 2147483647, %v1782
        %v1815 = vand.u32 2147483647, %v1783
        %v1816 = vand.u32 2147483647, %v1784
        %v1817 = vand.u32 2147483647, %v1785
        %v1818 = vand.u32 2147483647, %v1786
        %v1819 = vand.u32 2147483647, %v1787
        %v1820 = vand.u32 2147483647, %v1788
        %v1821 = vand.u32 2147483647, %v1789
        %v1822 = vand.u32 2147483647, %v1790
        %v1823 = vand.u32 2147483647, %v1791
        %v1824 = vand.u32 2147483647, %v1792
        %v1825 = vand.u32 2147483647, %v1793
        %v1826 = vand.u32 2147483647, %v1794
        %v1827 = vand.u32 2147483647, %v1795
        %v1828 = vsel %vm1119, %v1796, 0.0
        %1829 = vadd.xlane.f32.xlu0 %v1828
        %v1830 = vpop.xlane.xlu0 %1829
        %v1831 = vsel %vm1119, %v1797, 0.0
        %1832 = vadd.xlane.f32.xlu0 %v1831
        %v1833 = vpop.xlane.xlu0 %1832
        %v1834 = vsel %vm1119, %v1798, 0.0
        %1835 = vadd.xlane.f32.xlu0 %v1834
        %v1836 = vpop.xlane.xlu0 %1835
        %v1837 = vsel %vm1119, %v1799, 0.0
        %1838 = vadd.xlane.f32.xlu0 %v1837
        %v1839 = vpop.xlane.xlu0 %1838
        %v1840 = vsel %vm1119, %v1800, 0.0
        %1841 = vadd.xlane.f32.xlu0 %v1840
        %v1842 = vpop.xlane.xlu0 %1841
        %v1843 = vsel %vm1119, %v1801, 0.0
        %1844 = vadd.xlane.f32.xlu0 %v1843
        %v1845 = vpop.xlane.xlu0 %1844
        %v1846 = vsel %vm1119, %v1802, 0.0
        %1847 = vadd.xlane.f32.xlu0 %v1846
        %v1848 = vpop.xlane.xlu0 %1847
        %v1849 = vsel %vm1119, %v1803, 0.0
        %1850 = vadd.xlane.f32.xlu0 %v1849
        %v1851 = vpop.xlane.xlu0 %1850
        %v1852 = vsel %vm1119, %v1804, 0.0
        %1853 = vadd.xlane.f32.xlu0 %v1852
        %v1854 = vpop.xlane.xlu0 %1853
        %v1855 = vsel %vm1119, %v1805, 0.0
        %1856 = vadd.xlane.f32.xlu0 %v1855
        %v1857 = vpop.xlane.xlu0 %1856
        %v1858 = vsel %vm1119, %v1806, 0.0
        %1859 = vadd.xlane.f32.xlu0 %v1858
        %v1860 = vpop.xlane.xlu0 %1859
        %v1861 = vsel %vm1119, %v1807, 0.0
        %1862 = vadd.xlane.f32.xlu0 %v1861
        %v1863 = vpop.xlane.xlu0 %1862
        %v1864 = vsel %vm1119, %v1808, 0.0
        %1865 = vadd.xlane.f32.xlu0 %v1864
        %v1866 = vpop.xlane.xlu0 %1865
        %v1867 = vsel %vm1119, %v1809, 0.0
        %1868 = vadd.xlane.f32.xlu0 %v1867
        %v1869 = vpop.xlane.xlu0 %1868
        %v1870 = vsel %vm1119, %v1810, 0.0
        %1871 = vadd.xlane.f32.xlu0 %v1870
        %v1872 = vpop.xlane.xlu0 %1871
        %v1873 = vsel %vm1119, %v1811, 0.0
        %1874 = vadd.xlane.f32.xlu0 %v1873
        %v1875 = vpop.xlane.xlu0 %1874
        %v1876 = vsel %vm1119, %v1812, 0.0
        %1877 = vadd.xlane.f32.xlu0 %v1876
        %v1878 = vpop.xlane.xlu0 %1877
        %v1879 = vsel %vm1119, %v1813, 0.0
        %1880 = vadd.xlane.f32.xlu0 %v1879
        %v1881 = vpop.xlane.xlu0 %1880
        %v1882 = vsel %vm1119, %v1814, 0.0
        %1883 = vadd.xlane.f32.xlu0 %v1882
        %v1884 = vpop.xlane.xlu0 %1883
        %v1885 = vsel %vm1119, %v1815, 0.0
        %1886 = vadd.xlane.f32.xlu0 %v1885
        %v1887 = vpop.xlane.xlu0 %1886
        %v1888 = vsel %vm1119, %v1816, 0.0
        %1889 = vadd.xlane.f32.xlu0 %v1888
        %v1890 = vpop.xlane.xlu0 %1889
        %v1891 = vsel %vm1119, %v1817, 0.0
        %1892 = vadd.xlane.f32.xlu0 %v1891
        %v1893 = vpop.xlane.xlu0 %1892
        %v1894 = vsel %vm1119, %v1818, 0.0
        %1895 = vadd.xlane.f32.xlu0 %v1894
        %v1896 = vpop.xlane.xlu0 %1895
        %v1897 = vsel %vm1119, %v1819, 0.0
        %1898 = vadd.xlane.f32.xlu0 %v1897
        %v1899 = vpop.xlane.xlu0 %1898
        %v1900 = vsel %vm1119, %v1820, 0.0
        %1901 = vadd.xlane.f32.xlu0 %v1900
        %v1902 = vpop.xlane.xlu0 %1901
        %v1903 = vsel %vm1119, %v1821, 0.0
        %1904 = vadd.xlane.f32.xlu0 %v1903
        %v1905 = vpop.xlane.xlu0 %1904
        %v1906 = vsel %vm1119, %v1822, 0.0
        %1907 = vadd.xlane.f32.xlu0 %v1906
        %v1908 = vpop.xlane.xlu0 %1907
        %v1909 = vsel %vm1119, %v1823, 0.0
        %1910 = vadd.xlane.f32.xlu0 %v1909
        %v1911 = vpop.xlane.xlu0 %1910
        %v1912 = vsel %vm1119, %v1824, 0.0
        %1913 = vadd.xlane.f32.xlu0 %v1912
        %v1914 = vpop.xlane.xlu0 %1913
        %v1915 = vsel %vm1119, %v1825, 0.0
        %1916 = vadd.xlane.f32.xlu0 %v1915
        %v1917 = vpop.xlane.xlu0 %1916
        %v1918 = vsel %vm1119, %v1826, 0.0
        %1919 = vadd.xlane.f32.xlu0 %v1918
        %v1920 = vpop.xlane.xlu0 %1919
        %v1921 = vsel %vm1119, %v1827, 0.0
        %1922 = vadd.xlane.f32.xlu0 %v1921
        %v1923 = vpop.xlane.xlu0 %1922
        %v1924 = vmax.f32 %v1830, 1e-12
        %v1925 = vmax.f32 %v1833, 1e-12
        %v1926 = vmax.f32 %v1836, 1e-12
        %v1927 = vmax.f32 %v1839, 1e-12
        %v1928 = vmax.f32 %v1842, 1e-12
        %v1929 = vmax.f32 %v1845, 1e-12
        %v1930 = vmax.f32 %v1848, 1e-12
        %v1931 = vmax.f32 %v1851, 1e-12
        %v1932 = vmax.f32 %v1854, 1e-12
        %v1933 = vmax.f32 %v1857, 1e-12
        %v1934 = vmax.f32 %v1860, 1e-12
        %v1935 = vmax.f32 %v1863, 1e-12
        %v1936 = vmax.f32 %v1866, 1e-12
        %v1937 = vmax.f32 %v1869, 1e-12
        %v1938 = vmax.f32 %v1872, 1e-12
        %v1939 = vmax.f32 %v1875, 1e-12
        %v1940 = vmax.f32 %v1878, 1e-12
        %v1941 = vmax.f32 %v1881, 1e-12
        %v1942 = vmax.f32 %v1884, 1e-12
        %v1943 = vmax.f32 %v1887, 1e-12
        %v1944 = vmax.f32 %v1890, 1e-12
        %v1945 = vmax.f32 %v1893, 1e-12
        %v1946 = vmax.f32 %v1896, 1e-12
        %v1947 = vmax.f32 %v1899, 1e-12
        %v1948 = vmax.f32 %v1902, 1e-12
        %v1949 = vmax.f32 %v1905, 1e-12
        %v1950 = vmax.f32 %v1908, 1e-12
        %v1951 = vmax.f32 %v1911, 1e-12
        %v1952 = vmax.f32 %v1914, 1e-12
        %v1953 = vmax.f32 %v1917, 1e-12
        %v1954 = vmax.f32 %v1920, 1e-12
        %v1955 = vmax.f32 %v1923, 1e-12
        %v1956 = vrcp.pop %v1924
        %v1957 = vmul.f32 %v1924, %v1956
        %v1958 = vsub.f32 1.0, %v1957
        %v1959 = vmul.f32 %v1956, %v1958
        %v1960 = vadd.f32 %v1956, %v1959
        %vm1961 = vweird.f32 %v1924
        %vm1962 = vweird.f32 %v1956
        %vm1963 = vmor %vm1961, %vm1962
        %v1964 = vsel %vm1963, %v1956, %v1960
        %v1965 = vand.u32 2147483647, %v1924
        %vm1966 = vcmp.eq.f32.partialorder %v1965, 8.507059e+37
        %v1967 = vand.u32 %v1924, 2147483648
        %v1968 = vor.u32 1.1754944e-38, %v1967
        %v1969 = vsel %vm1966, %v1968, %v1964
        %v1970 = vmul.f32 14.285714, %v1969
        %v1971 = vrcp.pop %v1925
        %v1972 = vmul.f32 %v1925, %v1971
        %v1973 = vsub.f32 1.0, %v1972
        %v1974 = vmul.f32 %v1971, %v1973
        %v1975 = vadd.f32 %v1971, %v1974
        %vm1976 = vweird.f32 %v1925
        %vm1977 = vweird.f32 %v1971
        %vm1978 = vmor %vm1976, %vm1977
        %v1979 = vsel %vm1978, %v1971, %v1975
        %v1980 = vand.u32 2147483647, %v1925
        %vm1981 = vcmp.eq.f32.partialorder %v1980, 8.507059e+37
        %v1982 = vand.u32 %v1925, 2147483648
        %v1983 = vor.u32 1.1754944e-38, %v1982
        %v1984 = vsel %vm1981, %v1983, %v1979
        %v1985 = vmul.f32 14.285714, %v1984
        %v1986 = vrcp.pop %v1926
        %v1987 = vmul.f32 %v1926, %v1986
        %v1988 = vsub.f32 1.0, %v1987
        %v1989 = vmul.f32 %v1986, %v1988
        %v1990 = vadd.f32 %v1986, %v1989
        %vm1991 = vweird.f32 %v1926
        %vm1992 = vweird.f32 %v1986
        %vm1993 = vmor %vm1991, %vm1992
        %v1994 = vsel %vm1993, %v1986, %v1990
        %v1995 = vand.u32 2147483647, %v1926
        %vm1996 = vcmp.eq.f32.partialorder %v1995, 8.507059e+37
        %v1997 = vand.u32 %v1926, 2147483648
        %v1998 = vor.u32 1.1754944e-38, %v1997
        %v1999 = vsel %vm1996, %v1998, %v1994
        %v2000 = vmul.f32 14.285714, %v1999
        %v2001 = vrcp.pop %v1927
        %v2002 = vmul.f32 %v1927, %v2001
        %v2003 = vsub.f32 1.0, %v2002
        %v2004 = vmul.f32 %v2001, %v2003
        %v2005 = vadd.f32 %v2001, %v2004
        %vm2006 = vweird.f32 %v1927
        %vm2007 = vweird.f32 %v2001
        %vm2008 = vmor %vm2006, %vm2007
        %v2009 = vsel %vm2008, %v2001, %v2005
        %v2010 = vand.u32 2147483647, %v1927
        %vm2011 = vcmp.eq.f32.partialorder %v2010, 8.507059e+37
        %v2012 = vand.u32 %v1927, 2147483648
        %v2013 = vor.u32 1.1754944e-38, %v2012
        %v2014 = vsel %vm2011, %v2013, %v2009
        %v2015 = vmul.f32 14.285714, %v2014
        %v2016 = vrcp.pop %v1928
        %v2017 = vmul.f32 %v1928, %v2016
        %v2018 = vsub.f32 1.0, %v2017
        %v2019 = vmul.f32 %v2016, %v2018
        %v2020 = vadd.f32 %v2016, %v2019
        %vm2021 = vweird.f32 %v1928
        %vm2022 = vweird.f32 %v2016
        %vm2023 = vmor %vm2021, %vm2022
        %v2024 = vsel %vm2023, %v2016, %v2020
        %v2025 = vand.u32 2147483647, %v1928
        %vm2026 = vcmp.eq.f32.partialorder %v2025, 8.507059e+37
        %v2027 = vand.u32 %v1928, 2147483648
        %v2028 = vor.u32 1.1754944e-38, %v2027
        %v2029 = vsel %vm2026, %v2028, %v2024
        %v2030 = vmul.f32 14.285714, %v2029
        %v2031 = vrcp.pop %v1929
        %v2032 = vmul.f32 %v1929, %v2031
        %v2033 = vsub.f32 1.0, %v2032
        %v2034 = vmul.f32 %v2031, %v2033
        %v2035 = vadd.f32 %v2031, %v2034
        %vm2036 = vweird.f32 %v1929
        %vm2037 = vweird.f32 %v2031
        %vm2038 = vmor %vm2036, %vm2037
        %v2039 = vsel %vm2038, %v2031, %v2035
        %v2040 = vand.u32 2147483647, %v1929
        %vm2041 = vcmp.eq.f32.partialorder %v2040, 8.507059e+37
        %v2042 = vand.u32 %v1929, 2147483648
        %v2043 = vor.u32 1.1754944e-38, %v2042
        %v2044 = vsel %vm2041, %v2043, %v2039
        %v2045 = vmul.f32 14.285714, %v2044
        %v2046 = vrcp.pop %v1930
        %v2047 = vmul.f32 %v1930, %v2046
        %v2048 = vsub.f32 1.0, %v2047
        %v2049 = vmul.f32 %v2046, %v2048
        %v2050 = vadd.f32 %v2046, %v2049
        %vm2051 = vweird.f32 %v1930
        %vm2052 = vweird.f32 %v2046
        %vm2053 = vmor %vm2051, %vm2052
        %v2054 = vsel %vm2053, %v2046, %v2050
        %v2055 = vand.u32 2147483647, %v1930
        %vm2056 = vcmp.eq.f32.partialorder %v2055, 8.507059e+37
        %v2057 = vand.u32 %v1930, 2147483648
        %v2058 = vor.u32 1.1754944e-38, %v2057
        %v2059 = vsel %vm2056, %v2058, %v2054
        %v2060 = vmul.f32 14.285714, %v2059
        %v2061 = vrcp.pop %v1931
        %v2062 = vmul.f32 %v1931, %v2061
        %v2063 = vsub.f32 1.0, %v2062
        %v2064 = vmul.f32 %v2061, %v2063
        %v2065 = vadd.f32 %v2061, %v2064
        %vm2066 = vweird.f32 %v1931
        %vm2067 = vweird.f32 %v2061
        %vm2068 = vmor %vm2066, %vm2067
        %v2069 = vsel %vm2068, %v2061, %v2065
        %v2070 = vand.u32 2147483647, %v1931
        %vm2071 = vcmp.eq.f32.partialorder %v2070, 8.507059e+37
        %v2072 = vand.u32 %v1931, 2147483648
        %v2073 = vor.u32 1.1754944e-38, %v2072
        %v2074 = vsel %vm2071, %v2073, %v2069
        %v2075 = vmul.f32 14.285714, %v2074
        %v2076 = vrcp.pop %v1932
        %v2077 = vmul.f32 %v1932, %v2076
        %v2078 = vsub.f32 1.0, %v2077
        %v2079 = vmul.f32 %v2076, %v2078
        %v2080 = vadd.f32 %v2076, %v2079
        %vm2081 = vweird.f32 %v1932
        %vm2082 = vweird.f32 %v2076
        %vm2083 = vmor %vm2081, %vm2082
        %v2084 = vsel %vm2083, %v2076, %v2080
        %v2085 = vand.u32 2147483647, %v1932
        %vm2086 = vcmp.eq.f32.partialorder %v2085, 8.507059e+37
        %v2087 = vand.u32 %v1932, 2147483648
        %v2088 = vor.u32 1.1754944e-38, %v2087
        %v2089 = vsel %vm2086, %v2088, %v2084
        %v2090 = vmul.f32 14.285714, %v2089
        %v2091 = vrcp.pop %v1933
        %v2092 = vmul.f32 %v1933, %v2091
        %v2093 = vsub.f32 1.0, %v2092
        %v2094 = vmul.f32 %v2091, %v2093
        %v2095 = vadd.f32 %v2091, %v2094
        %vm2096 = vweird.f32 %v1933
        %vm2097 = vweird.f32 %v2091
        %vm2098 = vmor %vm2096, %vm2097
        %v2099 = vsel %vm2098, %v2091, %v2095
        %v2100 = vand.u32 2147483647, %v1933
        %vm2101 = vcmp.eq.f32.partialorder %v2100, 8.507059e+37
        %v2102 = vand.u32 %v1933, 2147483648
        %v2103 = vor.u32 1.1754944e-38, %v2102
        %v2104 = vsel %vm2101, %v2103, %v2099
        %v2105 = vmul.f32 14.285714, %v2104
        %v2106 = vrcp.pop %v1934
        %v2107 = vmul.f32 %v1934, %v2106
        %v2108 = vsub.f32 1.0, %v2107
        %v2109 = vmul.f32 %v2106, %v2108
        %v2110 = vadd.f32 %v2106, %v2109
        %vm2111 = vweird.f32 %v1934
        %vm2112 = vweird.f32 %v2106
        %vm2113 = vmor %vm2111, %vm2112
        %v2114 = vsel %vm2113, %v2106, %v2110
        %v2115 = vand.u32 2147483647, %v1934
        %vm2116 = vcmp.eq.f32.partialorder %v2115, 8.507059e+37
        %v2117 = vand.u32 %v1934, 2147483648
        %v2118 = vor.u32 1.1754944e-38, %v2117
        %v2119 = vsel %vm2116, %v2118, %v2114
        %v2120 = vmul.f32 14.285714, %v2119
        %v2121 = vrcp.pop %v1935
        %v2122 = vmul.f32 %v1935, %v2121
        %v2123 = vsub.f32 1.0, %v2122
        %v2124 = vmul.f32 %v2121, %v2123
        %v2125 = vadd.f32 %v2121, %v2124
        %vm2126 = vweird.f32 %v1935
        %vm2127 = vweird.f32 %v2121
        %vm2128 = vmor %vm2126, %vm2127
        %v2129 = vsel %vm2128, %v2121, %v2125
        %v2130 = vand.u32 2147483647, %v1935
        %vm2131 = vcmp.eq.f32.partialorder %v2130, 8.507059e+37
        %v2132 = vand.u32 %v1935, 2147483648
        %v2133 = vor.u32 1.1754944e-38, %v2132
        %v2134 = vsel %vm2131, %v2133, %v2129
        %v2135 = vmul.f32 14.285714, %v2134
        %v2136 = vrcp.pop %v1936
        %v2137 = vmul.f32 %v1936, %v2136
        %v2138 = vsub.f32 1.0, %v2137
        %v2139 = vmul.f32 %v2136, %v2138
        %v2140 = vadd.f32 %v2136, %v2139
        %vm2141 = vweird.f32 %v1936
        %vm2142 = vweird.f32 %v2136
        %vm2143 = vmor %vm2141, %vm2142
        %v2144 = vsel %vm2143, %v2136, %v2140
        %v2145 = vand.u32 2147483647, %v1936
        %vm2146 = vcmp.eq.f32.partialorder %v2145, 8.507059e+37
        %v2147 = vand.u32 %v1936, 2147483648
        %v2148 = vor.u32 1.1754944e-38, %v2147
        %v2149 = vsel %vm2146, %v2148, %v2144
        %v2150 = vmul.f32 14.285714, %v2149
        %v2151 = vrcp.pop %v1937
        %v2152 = vmul.f32 %v1937, %v2151
        %v2153 = vsub.f32 1.0, %v2152
        %v2154 = vmul.f32 %v2151, %v2153
        %v2155 = vadd.f32 %v2151, %v2154
        %vm2156 = vweird.f32 %v1937
        %vm2157 = vweird.f32 %v2151
        %vm2158 = vmor %vm2156, %vm2157
        %v2159 = vsel %vm2158, %v2151, %v2155
        %v2160 = vand.u32 2147483647, %v1937
        %vm2161 = vcmp.eq.f32.partialorder %v2160, 8.507059e+37
        %v2162 = vand.u32 %v1937, 2147483648
        %v2163 = vor.u32 1.1754944e-38, %v2162
        %v2164 = vsel %vm2161, %v2163, %v2159
        %v2165 = vmul.f32 14.285714, %v2164
        %v2166 = vrcp.pop %v1938
        %v2167 = vmul.f32 %v1938, %v2166
        %v2168 = vsub.f32 1.0, %v2167
        %v2169 = vmul.f32 %v2166, %v2168
        %v2170 = vadd.f32 %v2166, %v2169
        %vm2171 = vweird.f32 %v1938
        %vm2172 = vweird.f32 %v2166
        %vm2173 = vmor %vm2171, %vm2172
        %v2174 = vsel %vm2173, %v2166, %v2170
        %v2175 = vand.u32 2147483647, %v1938
        %vm2176 = vcmp.eq.f32.partialorder %v2175, 8.507059e+37
        %v2177 = vand.u32 %v1938, 2147483648
        %v2178 = vor.u32 1.1754944e-38, %v2177
        %v2179 = vsel %vm2176, %v2178, %v2174
        %v2180 = vmul.f32 14.285714, %v2179
        %v2181 = vrcp.pop %v1939
        %v2182 = vmul.f32 %v1939, %v2181
        %v2183 = vsub.f32 1.0, %v2182
        %v2184 = vmul.f32 %v2181, %v2183
        %v2185 = vadd.f32 %v2181, %v2184
        %vm2186 = vweird.f32 %v1939
        %vm2187 = vweird.f32 %v2181
        %vm2188 = vmor %vm2186, %vm2187
        %v2189 = vsel %vm2188, %v2181, %v2185
        %v2190 = vand.u32 2147483647, %v1939
        %vm2191 = vcmp.eq.f32.partialorder %v2190, 8.507059e+37
        %v2192 = vand.u32 %v1939, 2147483648
        %v2193 = vor.u32 1.1754944e-38, %v2192
        %v2194 = vsel %vm2191, %v2193, %v2189
        %v2195 = vmul.f32 14.285714, %v2194
        %v2196 = vrcp.pop %v1940
        %v2197 = vmul.f32 %v1940, %v2196
        %v2198 = vsub.f32 1.0, %v2197
        %v2199 = vmul.f32 %v2196, %v2198
        %v2200 = vadd.f32 %v2196, %v2199
        %vm2201 = vweird.f32 %v1940
        %vm2202 = vweird.f32 %v2196
        %vm2203 = vmor %vm2201, %vm2202
        %v2204 = vsel %vm2203, %v2196, %v2200
        %v2205 = vand.u32 2147483647, %v1940
        %vm2206 = vcmp.eq.f32.partialorder %v2205, 8.507059e+37
        %v2207 = vand.u32 %v1940, 2147483648
        %v2208 = vor.u32 1.1754944e-38, %v2207
        %v2209 = vsel %vm2206, %v2208, %v2204
        %v2210 = vmul.f32 14.285714, %v2209
        %v2211 = vrcp.pop %v1941
        %v2212 = vmul.f32 %v1941, %v2211
        %v2213 = vsub.f32 1.0, %v2212
        %v2214 = vmul.f32 %v2211, %v2213
        %v2215 = vadd.f32 %v2211, %v2214
        %vm2216 = vweird.f32 %v1941
        %vm2217 = vweird.f32 %v2211
        %vm2218 = vmor %vm2216, %vm2217
        %v2219 = vsel %vm2218, %v2211, %v2215
        %v2220 = vand.u32 2147483647, %v1941
        %vm2221 = vcmp.eq.f32.partialorder %v2220, 8.507059e+37
        %v2222 = vand.u32 %v1941, 2147483648
        %v2223 = vor.u32 1.1754944e-38, %v2222
        %v2224 = vsel %vm2221, %v2223, %v2219
        %v2225 = vmul.f32 14.285714, %v2224
        %v2226 = vrcp.pop %v1942
        %v2227 = vmul.f32 %v1942, %v2226
        %v2228 = vsub.f32 1.0, %v2227
        %v2229 = vmul.f32 %v2226, %v2228
        %v2230 = vadd.f32 %v2226, %v2229
        %vm2231 = vweird.f32 %v1942
        %vm2232 = vweird.f32 %v2226
        %vm2233 = vmor %vm2231, %vm2232
        %v2234 = vsel %vm2233, %v2226, %v2230
        %v2235 = vand.u32 2147483647, %v1942
        %vm2236 = vcmp.eq.f32.partialorder %v2235, 8.507059e+37
        %v2237 = vand.u32 %v1942, 2147483648
        %v2238 = vor.u32 1.1754944e-38, %v2237
        %v2239 = vsel %vm2236, %v2238, %v2234
        %v2240 = vmul.f32 14.285714, %v2239
        %v2241 = vrcp.pop %v1943
        %v2242 = vmul.f32 %v1943, %v2241
        %v2243 = vsub.f32 1.0, %v2242
        %v2244 = vmul.f32 %v2241, %v2243
        %v2245 = vadd.f32 %v2241, %v2244
        %vm2246 = vweird.f32 %v1943
        %vm2247 = vweird.f32 %v2241
        %vm2248 = vmor %vm2246, %vm2247
        %v2249 = vsel %vm2248, %v2241, %v2245
        %v2250 = vand.u32 2147483647, %v1943
        %vm2251 = vcmp.eq.f32.partialorder %v2250, 8.507059e+37
        %v2252 = vand.u32 %v1943, 2147483648
        %v2253 = vor.u32 1.1754944e-38, %v2252
        %v2254 = vsel %vm2251, %v2253, %v2249
        %v2255 = vmul.f32 14.285714, %v2254
        %v2256 = vrcp.pop %v1944
        %v2257 = vmul.f32 %v1944, %v2256
        %v2258 = vsub.f32 1.0, %v2257
        %v2259 = vmul.f32 %v2256, %v2258
        %v2260 = vadd.f32 %v2256, %v2259
        %vm2261 = vweird.f32 %v1944
        %vm2262 = vweird.f32 %v2256
        %vm2263 = vmor %vm2261, %vm2262
        %v2264 = vsel %vm2263, %v2256, %v2260
        %v2265 = vand.u32 2147483647, %v1944
        %vm2266 = vcmp.eq.f32.partialorder %v2265, 8.507059e+37
        %v2267 = vand.u32 %v1944, 2147483648
        %v2268 = vor.u32 1.1754944e-38, %v2267
        %v2269 = vsel %vm2266, %v2268, %v2264
        %v2270 = vmul.f32 14.285714, %v2269
        %v2271 = vrcp.pop %v1945
        %v2272 = vmul.f32 %v1945, %v2271
        %v2273 = vsub.f32 1.0, %v2272
        %v2274 = vmul.f32 %v2271, %v2273
        %v2275 = vadd.f32 %v2271, %v2274
        %vm2276 = vweird.f32 %v1945
        %vm2277 = vweird.f32 %v2271
        %vm2278 = vmor %vm2276, %vm2277
        %v2279 = vsel %vm2278, %v2271, %v2275
        %v2280 = vand.u32 2147483647, %v1945
        %vm2281 = vcmp.eq.f32.partialorder %v2280, 8.507059e+37
        %v2282 = vand.u32 %v1945, 2147483648
        %v2283 = vor.u32 1.1754944e-38, %v2282
        %v2284 = vsel %vm2281, %v2283, %v2279
        %v2285 = vmul.f32 14.285714, %v2284
        %v2286 = vrcp.pop %v1946
        %v2287 = vmul.f32 %v1946, %v2286
        %v2288 = vsub.f32 1.0, %v2287
        %v2289 = vmul.f32 %v2286, %v2288
        %v2290 = vadd.f32 %v2286, %v2289
        %vm2291 = vweird.f32 %v1946
        %vm2292 = vweird.f32 %v2286
        %vm2293 = vmor %vm2291, %vm2292
        %v2294 = vsel %vm2293, %v2286, %v2290
        %v2295 = vand.u32 2147483647, %v1946
        %vm2296 = vcmp.eq.f32.partialorder %v2295, 8.507059e+37
        %v2297 = vand.u32 %v1946, 2147483648
        %v2298 = vor.u32 1.1754944e-38, %v2297
        %v2299 = vsel %vm2296, %v2298, %v2294
        %v2300 = vmul.f32 14.285714, %v2299
        %v2301 = vrcp.pop %v1947
        %v2302 = vmul.f32 %v1947, %v2301
        %v2303 = vsub.f32 1.0, %v2302
        %v2304 = vmul.f32 %v2301, %v2303
        %v2305 = vadd.f32 %v2301, %v2304
        %vm2306 = vweird.f32 %v1947
        %vm2307 = vweird.f32 %v2301
        %vm2308 = vmor %vm2306, %vm2307
        %v2309 = vsel %vm2308, %v2301, %v2305
        %v2310 = vand.u32 2147483647, %v1947
        %vm2311 = vcmp.eq.f32.partialorder %v2310, 8.507059e+37
        %v2312 = vand.u32 %v1947, 2147483648
        %v2313 = vor.u32 1.1754944e-38, %v2312
        %v2314 = vsel %vm2311, %v2313, %v2309
        %v2315 = vmul.f32 14.285714, %v2314
        %v2316 = vrcp.pop %v1948
        %v2317 = vmul.f32 %v1948, %v2316
        %v2318 = vsub.f32 1.0, %v2317
        %v2319 = vmul.f32 %v2316, %v2318
        %v2320 = vadd.f32 %v2316, %v2319
        %vm2321 = vweird.f32 %v1948
        %vm2322 = vweird.f32 %v2316
        %vm2323 = vmor %vm2321, %vm2322
        %v2324 = vsel %vm2323, %v2316, %v2320
        %v2325 = vand.u32 2147483647, %v1948
        %vm2326 = vcmp.eq.f32.partialorder %v2325, 8.507059e+37
        %v2327 = vand.u32 %v1948, 2147483648
        %v2328 = vor.u32 1.1754944e-38, %v2327
        %v2329 = vsel %vm2326, %v2328, %v2324
        %v2330 = vmul.f32 14.285714, %v2329
        %v2331 = vrcp.pop %v1949
        %v2332 = vmul.f32 %v1949, %v2331
        %v2333 = vsub.f32 1.0, %v2332
        %v2334 = vmul.f32 %v2331, %v2333
        %v2335 = vadd.f32 %v2331, %v2334
        %vm2336 = vweird.f32 %v1949
        %vm2337 = vweird.f32 %v2331
        %vm2338 = vmor %vm2336, %vm2337
        %v2339 = vsel %vm2338, %v2331, %v2335
        %v2340 = vand.u32 2147483647, %v1949
        %vm2341 = vcmp.eq.f32.partialorder %v2340, 8.507059e+37
        %v2342 = vand.u32 %v1949, 2147483648
        %v2343 = vor.u32 1.1754944e-38, %v2342
        %v2344 = vsel %vm2341, %v2343, %v2339
        %v2345 = vmul.f32 14.285714, %v2344
        %v2346 = vrcp.pop %v1950
        %v2347 = vmul.f32 %v1950, %v2346
        %v2348 = vsub.f32 1.0, %v2347
        %v2349 = vmul.f32 %v2346, %v2348
        %v2350 = vadd.f32 %v2346, %v2349
        %vm2351 = vweird.f32 %v1950
        %vm2352 = vweird.f32 %v2346
        %vm2353 = vmor %vm2351, %vm2352
        %v2354 = vsel %vm2353, %v2346, %v2350
        %v2355 = vand.u32 2147483647, %v1950
        %vm2356 = vcmp.eq.f32.partialorder %v2355, 8.507059e+37
        %v2357 = vand.u32 %v1950, 2147483648
        %v2358 = vor.u32 1.1754944e-38, %v2357
        %v2359 = vsel %vm2356, %v2358, %v2354
        %v2360 = vmul.f32 14.285714, %v2359
        %v2361 = vrcp.pop %v1951
        %v2362 = vmul.f32 %v1951, %v2361
        %v2363 = vsub.f32 1.0, %v2362
        %v2364 = vmul.f32 %v2361, %v2363
        %v2365 = vadd.f32 %v2361, %v2364
        %vm2366 = vweird.f32 %v1951
        %vm2367 = vweird.f32 %v2361
        %vm2368 = vmor %vm2366, %vm2367
        %v2369 = vsel %vm2368, %v2361, %v2365
        %v2370 = vand.u32 2147483647, %v1951
        %vm2371 = vcmp.eq.f32.partialorder %v2370, 8.507059e+37
        %v2372 = vand.u32 %v1951, 2147483648
        %v2373 = vor.u32 1.1754944e-38, %v2372
        %v2374 = vsel %vm2371, %v2373, %v2369
        %v2375 = vmul.f32 14.285714, %v2374
        %v2376 = vrcp.pop %v1952
        %v2377 = vmul.f32 %v1952, %v2376
        %v2378 = vsub.f32 1.0, %v2377
        %v2379 = vmul.f32 %v2376, %v2378
        %v2380 = vadd.f32 %v2376, %v2379
        %vm2381 = vweird.f32 %v1952
        %vm2382 = vweird.f32 %v2376
        %vm2383 = vmor %vm2381, %vm2382
        %v2384 = vsel %vm2383, %v2376, %v2380
        %v2385 = vand.u32 2147483647, %v1952
        %vm2386 = vcmp.eq.f32.partialorder %v2385, 8.507059e+37
        %v2387 = vand.u32 %v1952, 2147483648
        %v2388 = vor.u32 1.1754944e-38, %v2387
        %v2389 = vsel %vm2386, %v2388, %v2384
        %v2390 = vmul.f32 14.285714, %v2389
        %v2391 = vrcp.pop %v1953
        %v2392 = vmul.f32 %v1953, %v2391
        %v2393 = vsub.f32 1.0, %v2392
        %v2394 = vmul.f32 %v2391, %v2393
        %v2395 = vadd.f32 %v2391, %v2394
        %vm2396 = vweird.f32 %v1953
        %vm2397 = vweird.f32 %v2391
        %vm2398 = vmor %vm2396, %vm2397
        %v2399 = vsel %vm2398, %v2391, %v2395
        %v2400 = vand.u32 2147483647, %v1953
        %vm2401 = vcmp.eq.f32.partialorder %v2400, 8.507059e+37
        %v2402 = vand.u32 %v1953, 2147483648
        %v2403 = vor.u32 1.1754944e-38, %v2402
        %v2404 = vsel %vm2401, %v2403, %v2399
        %v2405 = vmul.f32 14.285714, %v2404
        %v2406 = vrcp.pop %v1954
        %v2407 = vmul.f32 %v1954, %v2406
        %v2408 = vsub.f32 1.0, %v2407
        %v2409 = vmul.f32 %v2406, %v2408
        %v2410 = vadd.f32 %v2406, %v2409
        %vm2411 = vweird.f32 %v1954
        %vm2412 = vweird.f32 %v2406
        %vm2413 = vmor %vm2411, %vm2412
        %v2414 = vsel %vm2413, %v2406, %v2410
        %v2415 = vand.u32 2147483647, %v1954
        %vm2416 = vcmp.eq.f32.partialorder %v2415, 8.507059e+37
        %v2417 = vand.u32 %v1954, 2147483648
        %v2418 = vor.u32 1.1754944e-38, %v2417
        %v2419 = vsel %vm2416, %v2418, %v2414
        %v2420 = vmul.f32 14.285714, %v2419
        %v2421 = vrcp.pop %v1955
        %v2422 = vmul.f32 %v1955, %v2421
        %v2423 = vsub.f32 1.0, %v2422
        %v2424 = vmul.f32 %v2421, %v2423
        %v2425 = vadd.f32 %v2421, %v2424
        %vm2426 = vweird.f32 %v1955
        %vm2427 = vweird.f32 %v2421
        %vm2428 = vmor %vm2426, %vm2427
        %v2429 = vsel %vm2428, %v2421, %v2425
        %v2430 = vand.u32 2147483647, %v1955
        %vm2431 = vcmp.eq.f32.partialorder %v2430, 8.507059e+37
        %v2432 = vand.u32 %v1955, 2147483648
        %v2433 = vor.u32 1.1754944e-38, %v2432
        %v2434 = vsel %vm2431, %v2433, %v2429
        %v2435 = vmul.f32 14.285714, %v2434
        %v2436 = vmul.f32 %v1764, %v1970
        %v2437 = vmul.f32 %v1765, %v1985
        %v2438 = vmul.f32 %v1766, %v2000
        %v2439 = vmul.f32 %v1767, %v2015
        %v2440 = vmul.f32 %v1768, %v2030
        %v2441 = vmul.f32 %v1769, %v2045
        %v2442 = vmul.f32 %v1770, %v2060
        %v2443 = vmul.f32 %v1771, %v2075
        %v2444 = vmul.f32 %v1772, %v2090
        %v2445 = vmul.f32 %v1773, %v2105
        %v2446 = vmul.f32 %v1774, %v2120
        %v2447 = vmul.f32 %v1775, %v2135
        %v2448 = vmul.f32 %v1776, %v2150
        %v2449 = vmul.f32 %v1777, %v2165
        %v2450 = vmul.f32 %v1778, %v2180
        %v2451 = vmul.f32 %v1779, %v2195
        %v2452 = vmul.f32 %v1780, %v2210
        %v2453 = vmul.f32 %v1781, %v2225
        %v2454 = vmul.f32 %v1782, %v2240
        %v2455 = vmul.f32 %v1783, %v2255
        %v2456 = vmul.f32 %v1784, %v2270
        %v2457 = vmul.f32 %v1785, %v2285
        %v2458 = vmul.f32 %v1786, %v2300
        %v2459 = vmul.f32 %v1787, %v2315
        %v2460 = vmul.f32 %v1788, %v2330
        %v2461 = vmul.f32 %v1789, %v2345
        %v2462 = vmul.f32 %v1790, %v2360
        %v2463 = vmul.f32 %v1791, %v2375
        %v2464 = vmul.f32 %v1792, %v2390
        %v2465 = vmul.f32 %v1793, %v2405
        %v2466 = vmul.f32 %v1794, %v2420
        %v2467 = vmul.f32 %v1795, %v2435
        %v2468 = vmul.f32 %v2436, %v1728
        %v2469 = vmul.f32 %v2437, %v1729
        %v2470 = vmul.f32 %v2438, %v1730
        %v2471 = vmul.f32 %v2439, %v1731
        %v2472 = vmul.f32 %v2440, %v1732
        %v2473 = vmul.f32 %v2441, %v1733
        %v2474 = vmul.f32 %v2442, %v1734
        %v2475 = vmul.f32 %v2443, %v1735
        %v2476 = vmul.f32 %v2444, %v1736
        %v2477 = vmul.f32 %v2445, %v1737
        %v2478 = vmul.f32 %v2446, %v1738
        %v2479 = vmul.f32 %v2447, %v1739
        %v2480 = vmul.f32 %v2448, %v1740
        %v2481 = vmul.f32 %v2449, %v1741
        %v2482 = vmul.f32 %v2450, %v1742
        %v2483 = vmul.f32 %v2451, %v1743
        %v2484 = vmul.f32 %v2452, %v1744
        %v2485 = vmul.f32 %v2453, %v1745
        %v2486 = vmul.f32 %v2454, %v1746
        %v2487 = vmul.f32 %v2455, %v1747
        %v2488 = vmul.f32 %v2456, %v1748
        %v2489 = vmul.f32 %v2457, %v1749
        %v2490 = vmul.f32 %v2458, %v1750
        %v2491 = vmul.f32 %v2459, %v1751
        %v2492 = vmul.f32 %v2460, %v1752
        %v2493 = vmul.f32 %v2461, %v1753
        %v2494 = vmul.f32 %v2462, %v1754
        %v2495 = vmul.f32 %v2463, %v1755
        %v2496 = vmul.f32 %v2464, %v1756
        %v2497 = vmul.f32 %v2465, %v1757
        %v2498 = vmul.f32 %v2466, %v1758
        %v2499 = vmul.f32 %v2467, %v1759
        %v2500 = vsel %vm1119, %v2468, 0.0
        %2501 = vadd.xlane.f32.xlu0 %v2500
        %v2502 = vpop.xlane.xlu0 %2501
        %v2503 = vsel %vm1119, %v2469, 0.0
        %2504 = vadd.xlane.f32.xlu0 %v2503
        %v2505 = vpop.xlane.xlu0 %2504
        %v2506 = vsel %vm1119, %v2470, 0.0
        %2507 = vadd.xlane.f32.xlu0 %v2506
        %v2508 = vpop.xlane.xlu0 %2507
        %v2509 = vsel %vm1119, %v2471, 0.0
        %2510 = vadd.xlane.f32.xlu0 %v2509
        %v2511 = vpop.xlane.xlu0 %2510
        %v2512 = vsel %vm1119, %v2472, 0.0
        %2513 = vadd.xlane.f32.xlu0 %v2512
        %v2514 = vpop.xlane.xlu0 %2513
        %v2515 = vsel %vm1119, %v2473, 0.0
        %2516 = vadd.xlane.f32.xlu0 %v2515
        %v2517 = vpop.xlane.xlu0 %2516
        %v2518 = vsel %vm1119, %v2474, 0.0
        %2519 = vadd.xlane.f32.xlu0 %v2518
        %v2520 = vpop.xlane.xlu0 %2519
        %v2521 = vsel %vm1119, %v2475, 0.0
        %2522 = vadd.xlane.f32.xlu0 %v2521
        %v2523 = vpop.xlane.xlu0 %2522
        %v2524 = vsel %vm1119, %v2476, 0.0
        %2525 = vadd.xlane.f32.xlu0 %v2524
        %v2526 = vpop.xlane.xlu0 %2525
        %v2527 = vsel %vm1119, %v2477, 0.0
        %2528 = vadd.xlane.f32.xlu0 %v2527
        %v2529 = vpop.xlane.xlu0 %2528
        %v2530 = vsel %vm1119, %v2478, 0.0
        %2531 = vadd.xlane.f32.xlu0 %v2530
        %v2532 = vpop.xlane.xlu0 %2531
        %v2533 = vsel %vm1119, %v2479, 0.0
        %2534 = vadd.xlane.f32.xlu0 %v2533
        %v2535 = vpop.xlane.xlu0 %2534
        %v2536 = vsel %vm1119, %v2480, 0.0
        %2537 = vadd.xlane.f32.xlu0 %v2536
        %v2538 = vpop.xlane.xlu0 %2537
        %v2539 = vsel %vm1119, %v2481, 0.0
        %2540 = vadd.xlane.f32.xlu0 %v2539
        %v2541 = vpop.xlane.xlu0 %2540
        %v2542 = vsel %vm1119, %v2482, 0.0
        %2543 = vadd.xlane.f32.xlu0 %v2542
        %v2544 = vpop.xlane.xlu0 %2543
        %v2545 = vsel %vm1119, %v2483, 0.0
        %2546 = vadd.xlane.f32.xlu0 %v2545
        %v2547 = vpop.xlane.xlu0 %2546
        %v2548 = vsel %vm1119, %v2484, 0.0
        %2549 = vadd.xlane.f32.xlu0 %v2548
        %v2550 = vpop.xlane.xlu0 %2549
        %v2551 = vsel %vm1119, %v2485, 0.0
        %2552 = vadd.xlane.f32.xlu0 %v2551
        %v2553 = vpop.xlane.xlu0 %2552
        %v2554 = vsel %vm1119, %v2486, 0.0
        %2555 = vadd.xlane.f32.xlu0 %v2554
        %v2556 = vpop.xlane.xlu0 %2555
        %v2557 = vsel %vm1119, %v2487, 0.0
        %2558 = vadd.xlane.f32.xlu0 %v2557
        %v2559 = vpop.xlane.xlu0 %2558
        %v2560 = vsel %vm1119, %v2488, 0.0
        %2561 = vadd.xlane.f32.xlu0 %v2560
        %v2562 = vpop.xlane.xlu0 %2561
        %v2563 = vsel %vm1119, %v2489, 0.0
        %2564 = vadd.xlane.f32.xlu0 %v2563
        %v2565 = vpop.xlane.xlu0 %2564
        %v2566 = vsel %vm1119, %v2490, 0.0
        %2567 = vadd.xlane.f32.xlu0 %v2566
        %v2568 = vpop.xlane.xlu0 %2567
        %v2569 = vsel %vm1119, %v2491, 0.0
        %2570 = vadd.xlane.f32.xlu0 %v2569
        %v2571 = vpop.xlane.xlu0 %2570
        %v2572 = vsel %vm1119, %v2492, 0.0
        %2573 = vadd.xlane.f32.xlu0 %v2572
        %v2574 = vpop.xlane.xlu0 %2573
        %v2575 = vsel %vm1119, %v2493, 0.0
        %2576 = vadd.xlane.f32.xlu0 %v2575
        %v2577 = vpop.xlane.xlu0 %2576
        %v2578 = vsel %vm1119, %v2494, 0.0
        %2579 = vadd.xlane.f32.xlu0 %v2578
        %v2580 = vpop.xlane.xlu0 %2579
        %v2581 = vsel %vm1119, %v2495, 0.0
        %2582 = vadd.xlane.f32.xlu0 %v2581
        %v2583 = vpop.xlane.xlu0 %2582
        %v2584 = vsel %vm1119, %v2496, 0.0
        %2585 = vadd.xlane.f32.xlu0 %v2584
        %v2586 = vpop.xlane.xlu0 %2585
        %v2587 = vsel %vm1119, %v2497, 0.0
        %2588 = vadd.xlane.f32.xlu0 %v2587
        %v2589 = vpop.xlane.xlu0 %2588
        %v2590 = vsel %vm1119, %v2498, 0.0
        %2591 = vadd.xlane.f32.xlu0 %v2590
        %v2592 = vpop.xlane.xlu0 %2591
        %v2593 = vsel %vm1119, %v2499, 0.0
        %2594 = vadd.xlane.f32.xlu0 %v2593
        %v2595 = vpop.xlane.xlu0 %2594
        %vm2596 = vcmask 7168
        %2597 = vst.msk [vmem:[#allocation3] sm:$0xff] %vm2596, %v2502
        %2598 = vst.msk [vmem:[#allocation3 + $0x8] sm:$0xff] %vm2596, %v2505
        %2599 = vst.msk [vmem:[#allocation3 + $0x10] sm:$0xff] %vm2596, %v2508
        %2600 = vst.msk [vmem:[#allocation3 + $0x18] sm:$0xff] %vm2596, %v2511
        %2601 = vst.msk [vmem:[#allocation3 + $0x20] sm:$0xff] %vm2596, %v2514
        %2602 = vst.msk [vmem:[#allocation3 + $0x28] sm:$0xff] %vm2596, %v2517
        %2603 = vst.msk [vmem:[#allocation3 + $0x30] sm:$0xff] %vm2596, %v2520
        %2604 = vst.msk [vmem:[#allocation3 + $0x38] sm:$0xff] %vm2596, %v2523
        %2605 = vst.msk [vmem:[#allocation3 + $0x40] sm:$0xff] %vm2596, %v2526
        %2606 = vst.msk [vmem:[#allocation3 + $0x48] sm:$0xff] %vm2596, %v2529
        %2607 = vst.msk [vmem:[#allocation3 + $0x50] sm:$0xff] %vm2596, %v2532
        %2608 = vst.msk [vmem:[#allocation3 + $0x58] sm:$0xff] %vm2596, %v2535
        %2609 = vst.msk [vmem:[#allocation3 + $0x60] sm:$0xff] %vm2596, %v2538
        %2610 = vst.msk [vmem:[#allocation3 + $0x68] sm:$0xff] %vm2596, %v2541
        %2611 = vst.msk [vmem:[#allocation3 + $0x70] sm:$0xff] %vm2596, %v2544
        %2612 = vst.msk [vmem:[#allocation3 + $0x78] sm:$0xff] %vm2596, %v2547
        %2613 = vst.msk [vmem:[#allocation3 + $0x80] sm:$0xff] %vm2596, %v2550
        %2614 = vst.msk [vmem:[#allocation3 + $0x88] sm:$0xff] %vm2596, %v2553
        %2615 = vst.msk [vmem:[#allocation3 + $0x90] sm:$0xff] %vm2596, %v2556
        %2616 = vst.msk [vmem:[#allocation3 + $0x98] sm:$0xff] %vm2596, %v2559
        %2617 = vst.msk [vmem:[#allocation3 + $0xa0] sm:$0xff] %vm2596, %v2562
        %2618 = vst.msk [vmem:[#allocation3 + $0xa8] sm:$0xff] %vm2596, %v2565
        %2619 = vst.msk [vmem:[#allocation3 + $0xb0] sm:$0xff] %vm2596, %v2568
        %2620 = vst.msk [vmem:[#allocation3 + $0xb8] sm:$0xff] %vm2596, %v2571
        %2621 = vst.msk [vmem:[#allocation3 + $0xc0] sm:$0xff] %vm2596, %v2574
        %2622 = vst.msk [vmem:[#allocation3 + $0xc8] sm:$0xff] %vm2596, %v2577
        %2623 = vst.msk [vmem:[#allocation3 + $0xd0] sm:$0xff] %vm2596, %v2580
        %2624 = vst.msk [vmem:[#allocation3 + $0xd8] sm:$0xff] %vm2596, %v2583
        %2625 = vst.msk [vmem:[#allocation3 + $0xe0] sm:$0xff] %vm2596, %v2586
        %2626 = vst.msk [vmem:[#allocation3 + $0xe8] sm:$0xff] %vm2596, %v2589
        %2627 = vst.msk [vmem:[#allocation3 + $0xf0] sm:$0xff] %vm2596, %v2592
        %2628 = vst.msk [vmem:[#allocation3 + $0xf8] sm:$0xff] %vm2596, %v2595
      $region36: #{tpu_custom_call.1} parent=27 // pred_fallthru
        _
      %v2629 = vld [vmem:[#allocation2] sm:$0xf]
      %v2630 = vld [vmem:[#allocation2 + $0x4] sm:$0xf]
      %v2631 = vld [vmem:[#allocation2 + $0x8] sm:$0xf]
      %v2632 = vld [vmem:[#allocation2 + $0xc] sm:$0xf]
      %v2633 = vld [vmem:[#allocation2 + $0x10] sm:$0xf]
      %v2634 = vld [vmem:[#allocation2 + $0x14] sm:$0xf]
      %v2635 = vld [vmem:[#allocation2 + $0x18] sm:$0xf]
      %v2636 = vld [vmem:[#allocation2 + $0x1c] sm:$0xf]
      %v2637 = vld [vmem:[#allocation2 + $0x20] sm:$0xf]
      %v2638 = vld [vmem:[#allocation2 + $0x24] sm:$0xf]
      %v2639 = vld [vmem:[#allocation2 + $0x28] sm:$0xf]
      %v2640 = vld [vmem:[#allocation2 + $0x2c] sm:$0xf]
      %v2641 = vld [vmem:[#allocation2 + $0x30] sm:$0xf]
      %v2642 = vld [vmem:[#allocation2 + $0x34] sm:$0xf]
      %v2643 = vld [vmem:[#allocation2 + $0x38] sm:$0xf]
      %v2644 = vld [vmem:[#allocation2 + $0x3c] sm:$0xf]
      %v2645 = vld [vmem:[#allocation2 + $0x40] sm:$0xf]
      %v2646 = vld [vmem:[#allocation2 + $0x44] sm:$0xf]
      %v2647 = vld [vmem:[#allocation2 + $0x48] sm:$0xf]
      %v2648 = vld [vmem:[#allocation2 + $0x4c] sm:$0xf]
      %v2649 = vld [vmem:[#allocation2 + $0x50] sm:$0xf]
      %v2650 = vld [vmem:[#allocation2 + $0x54] sm:$0xf]
      %v2651 = vld [vmem:[#allocation2 + $0x58] sm:$0xf]
      %v2652 = vld [vmem:[#allocation2 + $0x5c] sm:$0xf]
      %v2653 = vld [vmem:[#allocation2 + $0x60] sm:$0xf]
      %v2654 = vld [vmem:[#allocation2 + $0x64] sm:$0xf]
      %v2655 = vld [vmem:[#allocation2 + $0x68] sm:$0xf]
      %v2656 = vld [vmem:[#allocation2 + $0x6c] sm:$0xf]
      %v2657 = vld [vmem:[#allocation2 + $0x70] sm:$0xf]
      %v2658 = vld [vmem:[#allocation2 + $0x74] sm:$0xf]
      %v2659 = vld [vmem:[#allocation2 + $0x78] sm:$0xf]
      %v2660 = vld [vmem:[#allocation2 + $0x7c] sm:$0xf]
      %v2661 = vpack.c.bf16 %v1729, %v1728
      %v2662 = vpack.c.bf16 %v1731, %v1730
      %v2663 = vpack.c.bf16 %v1733, %v1732
      %v2664 = vpack.c.bf16 %v1735, %v1734
      %v2665 = vpack.c.bf16 %v1737, %v1736
      %v2666 = vpack.c.bf16 %v1739, %v1738
      %v2667 = vpack.c.bf16 %v1741, %v1740
      %v2668 = vpack.c.bf16 %v1743, %v1742
      %v2669 = vpack.c.bf16 %v1745, %v1744
      %v2670 = vpack.c.bf16 %v1747, %v1746
      %v2671 = vpack.c.bf16 %v1749, %v1748
      %v2672 = vpack.c.bf16 %v1751, %v1750
      %v2673 = vpack.c.bf16 %v1753, %v1752
      %v2674 = vpack.c.bf16 %v1755, %v1754
      %v2675 = vpack.c.bf16 %v1757, %v1756
      %v2676 = vpack.c.bf16 %v1759, %v1758
      %v2709 = vunpack.c.l.b16 %v2629
      %v2710 = vunpack.c.l.b16 %v2630
      %v2711 = vunpack.c.l.b16 %v2631
      %v2712 = vunpack.c.l.b16 %v2632
      %v2713 = vunpack.c.l.b16 %v2633
      %v2714 = vunpack.c.l.b16 %v2634
      %v2715 = vunpack.c.l.b16 %v2635
      %v2716 = vunpack.c.l.b16 %v2636
      %v2717 = vunpack.c.l.b16 %v2637
      %v2718 = vunpack.c.l.b16 %v2638
      %v2719 = vunpack.c.l.b16 %v2639
      %v2720 = vunpack.c.l.b16 %v2640
      %v2721 = vunpack.c.l.b16 %v2641
      %v2722 = vunpack.c.l.b16 %v2642
      %v2723 = vunpack.c.l.b16 %v2643
      %v2724 = vunpack.c.l.b16 %v2644
      %v2725 = vunpack.c.l.b16 %v2645
      %v2726 = vunpack.c.l.b16 %v2646
      %v2727 = vunpack.c.l.b16 %v2647
      %v2728 = vunpack.c.l.b16 %v2648
      %v2729 = vunpack.c.l.b16 %v2649
      %v2730 = vunpack.c.l.b16 %v2650
      %v2731 = vunpack.c.l.b16 %v2651
      %v2732 = vunpack.c.l.b16 %v2652
      %v2733 = vunpack.c.l.b16 %v2653
      %v2734 = vunpack.c.l.b16 %v2654
      %v2735 = vunpack.c.l.b16 %v2655
      %v2736 = vunpack.c.l.b16 %v2656
      %v2737 = vunpack.c.l.b16 %v2657
      %v2738 = vunpack.c.l.b16 %v2658
      %v2739 = vunpack.c.l.b16 %v2659
      %v2740 = vunpack.c.l.b16 %v2660
      %v2741 = vpack.c.b16 %v2710, %v2709
      %v2742 = vpack.c.b16 %v2712, %v2711
      %v2743 = vpack.c.b16 %v2714, %v2713
      %v2744 = vpack.c.b16 %v2716, %v2715
      %v2745 = vpack.c.b16 %v2718, %v2717
      %v2746 = vpack.c.b16 %v2720, %v2719
      %v2747 = vpack.c.b16 %v2722, %v2721
      %v2748 = vpack.c.b16 %v2724, %v2723
      %v2749 = vpack.c.b16 %v2726, %v2725
      %v2750 = vpack.c.b16 %v2728, %v2727
      %v2751 = vpack.c.b16 %v2730, %v2729
      %v2752 = vpack.c.b16 %v2732, %v2731
      %v2753 = vpack.c.b16 %v2734, %v2733
      %v2754 = vpack.c.b16 %v2736, %v2735
      %v2755 = vpack.c.b16 %v2738, %v2737
      %v2756 = vpack.c.b16 %v2740, %v2739
      %v2758 = vsel %vm1119, %v2741, 0
      %v2761 = vsel %vm1119, %v2742, 0
      %v2764 = vsel %vm1119, %v2743, 0
      %v2767 = vsel %vm1119, %v2744, 0
      %v2770 = vsel %vm1119, %v2745, 0
      %v2773 = vsel %vm1119, %v2746, 0
      %v2776 = vsel %vm1119, %v2747, 0
      %v2779 = vsel %vm1119, %v2748, 0
      %v2782 = vsel %vm1119, %v2749, 0
      %v2785 = vsel %vm1119, %v2750, 0
      %v2788 = vsel %vm1119, %v2751, 0
      %v2791 = vsel %vm1119, %v2752, 0
      %v2794 = vsel %vm1119, %v2753, 0
      %v2797 = vsel %vm1119, %v2754, 0
      %v2800 = vsel %vm1119, %v2755, 0
      %v2803 = vsel %vm1119, %v2756, 0
      %v2806 = vsel %vm1119, %v2661, 0
      %v2809 = vsel %vm1119, %v2662, 0
      %v2812 = vsel %vm1119, %v2663, 0
      %v2815 = vsel %vm1119, %v2664, 0
      %v2818 = vsel %vm1119, %v2665, 0
      %v2821 = vsel %vm1119, %v2666, 0
      %v2824 = vsel %vm1119, %v2667, 0
      %v2827 = vsel %vm1119, %v2668, 0
      %v2830 = vsel %vm1119, %v2669, 0
      %v2833 = vsel %vm1119, %v2670, 0
      %v2836 = vsel %vm1119, %v2671, 0
      %v2839 = vsel %vm1119, %v2672, 0
      %v2842 = vsel %vm1119, %v2673, 0
      %v2845 = vsel %vm1119, %v2674, 0
      %v2848 = vsel %vm1119, %v2675, 0
      %v2851 = vsel %vm1119, %v2676, 0
      %2853 = vmatpush.bf16.xpose.msra.mxu0 %v2827
      %2854 = vmatpush.bf16.xpose.msra.mxu0 %v2824
      %2855 = vmatpush.bf16.xpose.msra.mxu0 %v2821
      %2856 = vmatpush.bf16.xpose.msra.mxu0 %v2818
      %2857 = vmatpush.bf16.xpose.msra.mxu0 %v2815
      %2858 = vmatpush.bf16.xpose.msra.mxu0 %v2812
      %2859 = vmatpush.bf16.xpose.msra.mxu0 %v2809
      %2860 = vmatpush.bf16.xpose.msra.mxu0 %v2806
      %2861 = vmatmul.bf16.gmra.mxu0 %v2758
      %v2862 = vpop.f32.mrf.mxu0
      %v2863 = vadd.f32 0.0, %v2862
      %v2864 = vpop.f32.mrf.mxu0
      %v2865 = vadd.f32 0.0, %v2864
      %2866 = vmatmul.bf16.gmra.mxu0 %v2761
      %v2867 = vpop.f32.mrf.mxu0
      %v2868 = vadd.f32 0.0, %v2867
      %v2869 = vpop.f32.mrf.mxu0
      %v2870 = vadd.f32 0.0, %v2869
      %2871 = vmatmul.bf16.gmra.mxu0 %v2764
      %v2872 = vpop.f32.mrf.mxu0
      %v2873 = vadd.f32 0.0, %v2872
      %v2874 = vpop.f32.mrf.mxu0
      %v2875 = vadd.f32 0.0, %v2874
      %2876 = vmatmul.bf16.gmra.mxu0 %v2767
      %v2877 = vpop.f32.mrf.mxu0
      %v2878 = vadd.f32 0.0, %v2877
      %v2879 = vpop.f32.mrf.mxu0
      %v2880 = vadd.f32 0.0, %v2879
      %2881 = vmatmul.bf16.gmra.mxu0 %v2770
      %v2882 = vpop.f32.mrf.mxu0
      %v2883 = vadd.f32 0.0, %v2882
      %v2884 = vpop.f32.mrf.mxu0
      %v2885 = vadd.f32 0.0, %v2884
      %2886 = vmatmul.bf16.gmra.mxu0 %v2773
      %v2887 = vpop.f32.mrf.mxu0
      %v2888 = vadd.f32 0.0, %v2887
      %v2889 = vpop.f32.mrf.mxu0
      %v2890 = vadd.f32 0.0, %v2889
      %2891 = vmatmul.bf16.gmra.mxu0 %v2776
      %v2892 = vpop.f32.mrf.mxu0
      %v2893 = vadd.f32 0.0, %v2892
      %v2894 = vpop.f32.mrf.mxu0
      %v2895 = vadd.f32 0.0, %v2894
      %2896 = vmatmul.bf16.gmra.mxu0 %v2779
      %v2897 = vpop.f32.mrf.mxu0
      %v2898 = vadd.f32 0.0, %v2897
      %v2899 = vpop.f32.mrf.mxu0
      %v2900 = vadd.f32 0.0, %v2899
      %2901 = vmatmul.bf16.gmra.mxu0 %v2782
      %v2902 = vpop.f32.mrf.mxu0
      %v2903 = vadd.f32 0.0, %v2902
      %v2904 = vpop.f32.mrf.mxu0
      %v2905 = vadd.f32 0.0, %v2904
      %2906 = vmatmul.bf16.gmra.mxu0 %v2785
      %v2907 = vpop.f32.mrf.mxu0
      %v2908 = vadd.f32 0.0, %v2907
      %v2909 = vpop.f32.mrf.mxu0
      %v2910 = vadd.f32 0.0, %v2909
      %2911 = vmatmul.bf16.gmra.mxu0 %v2788
      %v2912 = vpop.f32.mrf.mxu0
      %v2913 = vadd.f32 0.0, %v2912
      %v2914 = vpop.f32.mrf.mxu0
      %v2915 = vadd.f32 0.0, %v2914
      %2916 = vmatmul.bf16.gmra.mxu0 %v2791
      %v2917 = vpop.f32.mrf.mxu0
      %v2918 = vadd.f32 0.0, %v2917
      %v2919 = vpop.f32.mrf.mxu0
      %v2920 = vadd.f32 0.0, %v2919
      %2921 = vmatmul.bf16.gmra.mxu0 %v2794
      %v2922 = vpop.f32.mrf.mxu0
      %v2923 = vadd.f32 0.0, %v2922
      %v2924 = vpop.f32.mrf.mxu0
      %v2925 = vadd.f32 0.0, %v2924
      %2926 = vmatmul.bf16.gmra.mxu0 %v2797
      %v2927 = vpop.f32.mrf.mxu0
      %v2928 = vadd.f32 0.0, %v2927
      %v2929 = vpop.f32.mrf.mxu0
      %v2930 = vadd.f32 0.0, %v2929
      %2931 = vmatmul.bf16.gmra.mxu0 %v2800
      %v2932 = vpop.f32.mrf.mxu0
      %v2933 = vadd.f32 0.0, %v2932
      %v2934 = vpop.f32.mrf.mxu0
      %v2935 = vadd.f32 0.0, %v2934
      %2936 = vmatmul.bf16.gmra.mxu0 %v2803
      %v2937 = vpop.f32.mrf.mxu0
      %v2938 = vadd.f32 0.0, %v2937
      %v2939 = vpop.f32.mrf.mxu0
      %v2940 = vadd.f32 0.0, %v2939
      %2941 = vdwg.mxu0
      %2942 = vmatpush.bf16.xpose.msra.mxu0 %v2851
      %2943 = vmatpush.bf16.xpose.msra.mxu0 %v2848
      %2944 = vmatpush.bf16.xpose.msra.mxu0 %v2845
      %2945 = vmatpush.bf16.xpose.msra.mxu0 %v2842
      %2946 = vmatpush.bf16.xpose.msra.mxu0 %v2839
      %2947 = vmatpush.bf16.xpose.msra.mxu0 %v2836
      %2948 = vmatpush.bf16.xpose.msra.mxu0 %v2833
      %2949 = vmatpush.bf16.xpose.msra.mxu0 %v2830
      %2950 = vmatmul.bf16.gmra.mxu0 %v2758
      %v2951 = vpop.f32.mrf.mxu0
      %v2952 = vadd.f32 0.0, %v2951
      %v2953 = vpop.f32.mrf.mxu0
      %v2954 = vadd.f32 0.0, %v2953
      %2955 = vmatmul.bf16.gmra.mxu0 %v2761
      %v2956 = vpop.f32.mrf.mxu0
      %v2957 = vadd.f32 0.0, %v2956
      %v2958 = vpop.f32.mrf.mxu0
      %v2959 = vadd.f32 0.0, %v2958
      %2960 = vmatmul.bf16.gmra.mxu0 %v2764
      %v2961 = vpop.f32.mrf.mxu0
      %v2962 = vadd.f32 0.0, %v2961
      %v2963 = vpop.f32.mrf.mxu0
      %v2964 = vadd.f32 0.0, %v2963
      %2965 = vmatmul.bf16.gmra.mxu0 %v2767
      %v2966 = vpop.f32.mrf.mxu0
      %v2967 = vadd.f32 0.0, %v2966
      %v2968 = vpop.f32.mrf.mxu0
      %v2969 = vadd.f32 0.0, %v2968
      %2970 = vmatmul.bf16.gmra.mxu0 %v2770
      %v2971 = vpop.f32.mrf.mxu0
      %v2972 = vadd.f32 0.0, %v2971
      %v2973 = vpop.f32.mrf.mxu0
      %v2974 = vadd.f32 0.0, %v2973
      %2975 = vmatmul.bf16.gmra.mxu0 %v2773
      %v2976 = vpop.f32.mrf.mxu0
      %v2977 = vadd.f32 0.0, %v2976
      %v2978 = vpop.f32.mrf.mxu0
      %v2979 = vadd.f32 0.0, %v2978
      %2980 = vmatmul.bf16.gmra.mxu0 %v2776
      %v2981 = vpop.f32.mrf.mxu0
      %v2982 = vadd.f32 0.0, %v2981
      %v2983 = vpop.f32.mrf.mxu0
      %v2984 = vadd.f32 0.0, %v2983
      %2985 = vmatmul.bf16.gmra.mxu0 %v2779
      %v2986 = vpop.f32.mrf.mxu0
      %v2987 = vadd.f32 0.0, %v2986
      %v2988 = vpop.f32.mrf.mxu0
      %v2989 = vadd.f32 0.0, %v2988
      %2990 = vmatmul.bf16.gmra.mxu0 %v2782
      %v2991 = vpop.f32.mrf.mxu0
      %v2992 = vadd.f32 0.0, %v2991
      %v2993 = vpop.f32.mrf.mxu0
      %v2994 = vadd.f32 0.0, %v2993
      %2995 = vmatmul.bf16.gmra.mxu0 %v2785
      %v2996 = vpop.f32.mrf.mxu0
      %v2997 = vadd.f32 0.0, %v2996
      %v2998 = vpop.f32.mrf.mxu0
      %v2999 = vadd.f32 0.0, %v2998
      %3000 = vmatmul.bf16.gmra.mxu0 %v2788
      %v3001 = vpop.f32.mrf.mxu0
      %v3002 = vadd.f32 0.0, %v3001
      %v3003 = vpop.f32.mrf.mxu0
      %v3004 = vadd.f32 0.0, %v3003
      %3005 = vmatmul.bf16.gmra.mxu0 %v2791
      %v3006 = vpop.f32.mrf.mxu0
      %v3007 = vadd.f32 0.0, %v3006
      %v3008 = vpop.f32.mrf.mxu0
      %v3009 = vadd.f32 0.0, %v3008
      %3010 = vmatmul.bf16.gmra.mxu0 %v2794
      %v3011 = vpop.f32.mrf.mxu0
      %v3012 = vadd.f32 0.0, %v3011
      %v3013 = vpop.f32.mrf.mxu0
      %v3014 = vadd.f32 0.0, %v3013
      %3015 = vmatmul.bf16.gmra.mxu0 %v2797
      %v3016 = vpop.f32.mrf.mxu0
      %v3017 = vadd.f32 0.0, %v3016
      %v3018 = vpop.f32.mrf.mxu0
      %v3019 = vadd.f32 0.0, %v3018
      %3020 = vmatmul.bf16.gmra.mxu0 %v2800
      %v3021 = vpop.f32.mrf.mxu0
      %v3022 = vadd.f32 0.0, %v3021
      %v3023 = vpop.f32.mrf.mxu0
      %v3024 = vadd.f32 0.0, %v3023
      %3025 = vmatmul.bf16.gmra.mxu0 %v2803
      %v3026 = vpop.f32.mrf.mxu0
      %v3027 = vadd.f32 0.0, %v3026
      %v3028 = vpop.f32.mrf.mxu0
      %v3029 = vadd.f32 0.0, %v3028
      %3030 = vdwg.mxu0
      %v3031 = vld [vmem:[#allocation4] sm:$0xff]
      %v3032 = vld [vmem:[#allocation4 + $0x8] sm:$0xff]
      %v3033 = vld [vmem:[#allocation4 + $0x10] sm:$0xff]
      %v3034 = vld [vmem:[#allocation4 + $0x18] sm:$0xff]
      %v3035 = vld [vmem:[#allocation4 + $0x20] sm:$0xff]
      %v3036 = vld [vmem:[#allocation4 + $0x28] sm:$0xff]
      %v3037 = vld [vmem:[#allocation4 + $0x30] sm:$0xff]
      %v3038 = vld [vmem:[#allocation4 + $0x38] sm:$0xff]
      %v3039 = vld [vmem:[#allocation4 + $0x40] sm:$0xff]
      %v3040 = vld [vmem:[#allocation4 + $0x48] sm:$0xff]
      %v3041 = vld [vmem:[#allocation4 + $0x50] sm:$0xff]
      %v3042 = vld [vmem:[#allocation4 + $0x58] sm:$0xff]
      %v3043 = vld [vmem:[#allocation4 + $0x60] sm:$0xff]
      %v3044 = vld [vmem:[#allocation4 + $0x68] sm:$0xff]
      %v3045 = vld [vmem:[#allocation4 + $0x70] sm:$0xff]
      %v3046 = vld [vmem:[#allocation4 + $0x78] sm:$0xff]
      %v3047 = vld [vmem:[#allocation4 + $0x80] sm:$0xff]
      %v3048 = vld [vmem:[#allocation4 + $0x88] sm:$0xff]
      %v3049 = vld [vmem:[#allocation4 + $0x90] sm:$0xff]
      %v3050 = vld [vmem:[#allocation4 + $0x98] sm:$0xff]
      %v3051 = vld [vmem:[#allocation4 + $0xa0] sm:$0xff]
      %v3052 = vld [vmem:[#allocation4 + $0xa8] sm:$0xff]
      %v3053 = vld [vmem:[#allocation4 + $0xb0] sm:$0xff]
      %v3054 = vld [vmem:[#allocation4 + $0xb8] sm:$0xff]
      %v3055 = vld [vmem:[#allocation4 + $0xc0] sm:$0xff]
      %v3056 = vld [vmem:[#allocation4 + $0xc8] sm:$0xff]
      %v3057 = vld [vmem:[#allocation4 + $0xd0] sm:$0xff]
      %v3058 = vld [vmem:[#allocation4 + $0xd8] sm:$0xff]
      %v3059 = vld [vmem:[#allocation4 + $0xe0] sm:$0xff]
      %v3060 = vld [vmem:[#allocation4 + $0xe8] sm:$0xff]
      %v3061 = vld [vmem:[#allocation4 + $0xf0] sm:$0xff]
      %v3062 = vld [vmem:[#allocation4 + $0xf8] sm:$0xff]
      %v3063 = vsub.f32 %v2863, 14.285714
      %v3064 = vsub.f32 %v2952, 14.285714
      %v3065 = vsub.f32 %v2865, 14.285714
      %v3066 = vsub.f32 %v2954, 14.285714
      %v3067 = vsub.f32 %v2868, 14.285714
      %v3068 = vsub.f32 %v2957, 14.285714
      %v3069 = vsub.f32 %v2870, 14.285714
      %v3070 = vsub.f32 %v2959, 14.285714
      %v3071 = vsub.f32 %v2873, 14.285714
      %v3072 = vsub.f32 %v2962, 14.285714
      %v3073 = vsub.f32 %v2875, 14.285714
      %v3074 = vsub.f32 %v2964, 14.285714
      %v3075 = vsub.f32 %v2878, 14.285714
      %v3076 = vsub.f32 %v2967, 14.285714
      %v3077 = vsub.f32 %v2880, 14.285714
      %v3078 = vsub.f32 %v2969, 14.285714
      %v3079 = vsub.f32 %v2883, 14.285714
      %v3080 = vsub.f32 %v2972, 14.285714
      %v3081 = vsub.f32 %v2885, 14.285714
      %v3082 = vsub.f32 %v2974, 14.285714
      %v3083 = vsub.f32 %v2888, 14.285714
      %v3084 = vsub.f32 %v2977, 14.285714
      %v3085 = vsub.f32 %v2890, 14.285714
      %v3086 = vsub.f32 %v2979, 14.285714
      %v3087 = vsub.f32 %v2893, 14.285714
      %v3088 = vsub.f32 %v2982, 14.285714
      %v3089 = vsub.f32 %v2895, 14.285714
      %v3090 = vsub.f32 %v2984, 14.285714
      %v3091 = vsub.f32 %v2898, 14.285714
      %v3092 = vsub.f32 %v2987, 14.285714
      %v3093 = vsub.f32 %v2900, 14.285714
      %v3094 = vsub.f32 %v2989, 14.285714
      %v3095 = vsub.f32 %v2903, 14.285714
      %v3096 = vsub.f32 %v2992, 14.285714
      %v3097 = vsub.f32 %v2905, 14.285714
      %v3098 = vsub.f32 %v2994, 14.285714
      %v3099 = vsub.f32 %v2908, 14.285714
      %v3100 = vsub.f32 %v2997, 14.285714
      %v3101 = vsub.f32 %v2910, 14.285714
      %v3102 = vsub.f32 %v2999, 14.285714
      %v3103 = vsub.f32 %v2913, 14.285714
      %v3104 = vsub.f32 %v3002, 14.285714
      %v3105 = vsub.f32 %v2915, 14.285714
      %v3106 = vsub.f32 %v3004, 14.285714
      %v3107 = vsub.f32 %v2918, 14.285714
      %v3108 = vsub.f32 %v3007, 14.285714
      %v3109 = vsub.f32 %v2920, 14.285714
      %v3110 = vsub.f32 %v3009, 14.285714
      %v3111 = vsub.f32 %v2923, 14.285714
      %v3112 = vsub.f32 %v3012, 14.285714
      %v3113 = vsub.f32 %v2925, 14.285714
      %v3114 = vsub.f32 %v3014, 14.285714
      %v3115 = vsub.f32 %v2928, 14.285714
      %v3116 = vsub.f32 %v3017, 14.285714
      %v3117 = vsub.f32 %v2930, 14.285714
      %v3118 = vsub.f32 %v3019, 14.285714
      %v3119 = vsub.f32 %v2933, 14.285714
      %v3120 = vsub.f32 %v3022, 14.285714
      %v3121 = vsub.f32 %v2935, 14.285714
      %v3122 = vsub.f32 %v3024, 14.285714
      %v3123 = vsub.f32 %v2938, 14.285714
      %v3124 = vsub.f32 %v3027, 14.285714
      %v3125 = vsub.f32 %v2940, 14.285714
      %v3126 = vsub.f32 %v3029, 14.285714
      %v3127 = vmul.f32 %v3063, 1.442695
      %v3128 = vpow.pop %v3127
      %v3129 = vmul.f32 %v3064, 1.442695
      %v3130 = vpow.pop %v3129
      %v3131 = vmul.f32 %v3065, 1.442695
      %v3132 = vpow.pop %v3131
      %v3133 = vmul.f32 %v3066, 1.442695
      %v3134 = vpow.pop %v3133
      %v3135 = vmul.f32 %v3067, 1.442695
      %v3136 = vpow.pop %v3135
      %v3137 = vmul.f32 %v3068, 1.442695
      %v3138 = vpow.pop %v3137
      %v3139 = vmul.f32 %v3069, 1.442695
      %v3140 = vpow.pop %v3139
      %v3141 = vmul.f32 %v3070, 1.442695
      %v3142 = vpow.pop %v3141
      %v3143 = vmul.f32 %v3071, 1.442695
      %v3144 = vpow.pop %v3143
      %v3145 = vmul.f32 %v3072, 1.442695
      %v3146 = vpow.pop %v3145
      %v3147 = vmul.f32 %v3073, 1.442695
      %v3148 = vpow.pop %v3147
      %v3149 = vmul.f32 %v3074, 1.442695
      %v3150 = vpow.pop %v3149
      %v3151 = vmul.f32 %v3075, 1.442695
      %v3152 = vpow.pop %v3151
      %v3153 = vmul.f32 %v3076, 1.442695
      %v3154 = vpow.pop %v3153
      %v3155 = vmul.f32 %v3077, 1.442695
      %v3156 = vpow.pop %v3155
      %v3157 = vmul.f32 %v3078, 1.442695
      %v3158 = vpow.pop %v3157
      %v3159 = vmul.f32 %v3079, 1.442695
      %v3160 = vpow.pop %v3159
      %v3161 = vmul.f32 %v3080, 1.442695
      %v3162 = vpow.pop %v3161
      %v3163 = vmul.f32 %v3081, 1.442695
      %v3164 = vpow.pop %v3163
      %v3165 = vmul.f32 %v3082, 1.442695
      %v3166 = vpow.pop %v3165
      %v3167 = vmul.f32 %v3083, 1.442695
      %v3168 = vpow.pop %v3167
      %v3169 = vmul.f32 %v3084, 1.442695
      %v3170 = vpow.pop %v3169
      %v3171 = vmul.f32 %v3085, 1.442695
      %v3172 = vpow.pop %v3171
      %v3173 = vmul.f32 %v3086, 1.442695
      %v3174 = vpow.pop %v3173
      %v3175 = vmul.f32 %v3087, 1.442695
      %v3176 = vpow.pop %v3175
      %v3177 = vmul.f32 %v3088, 1.442695
      %v3178 = vpow.pop %v3177
      %v3179 = vmul.f32 %v3089, 1.442695
      %v3180 = vpow.pop %v3179
      %v3181 = vmul.f32 %v3090, 1.442695
      %v3182 = vpow.pop %v3181
      %v3183 = vmul.f32 %v3091, 1.442695
      %v3184 = vpow.pop %v3183
      %v3185 = vmul.f32 %v3092, 1.442695
      %v3186 = vpow.pop %v3185
      %v3187 = vmul.f32 %v3093, 1.442695
      %v3188 = vpow.pop %v3187
      %v3189 = vmul.f32 %v3094, 1.442695
      %v3190 = vpow.pop %v3189
      %v3191 = vmul.f32 %v3095, 1.442695
      %v3192 = vpow.pop %v3191
      %v3193 = vmul.f32 %v3096, 1.442695
      %v3194 = vpow.pop %v3193
      %v3195 = vmul.f32 %v3097, 1.442695
      %v3196 = vpow.pop %v3195
      %v3197 = vmul.f32 %v3098, 1.442695
      %v3198 = vpow.pop %v3197
      %v3199 = vmul.f32 %v3099, 1.442695
      %v3200 = vpow.pop %v3199
      %v3201 = vmul.f32 %v3100, 1.442695
      %v3202 = vpow.pop %v3201
      %v3203 = vmul.f32 %v3101, 1.442695
      %v3204 = vpow.pop %v3203
      %v3205 = vmul.f32 %v3102, 1.442695
      %v3206 = vpow.pop %v3205
      %v3207 = vmul.f32 %v3103, 1.442695
      %v3208 = vpow.pop %v3207
      %v3209 = vmul.f32 %v3104, 1.442695
      %v3210 = vpow.pop %v3209
      %v3211 = vmul.f32 %v3105, 1.442695
      %v3212 = vpow.pop %v3211
      %v3213 = vmul.f32 %v3106, 1.442695
      %v3214 = vpow.pop %v3213
      %v3215 = vmul.f32 %v3107, 1.442695
      %v3216 = vpow.pop %v3215
      %v3217 = vmul.f32 %v3108, 1.442695
      %v3218 = vpow.pop %v3217
      %v3219 = vmul.f32 %v3109, 1.442695
      %v3220 = vpow.pop %v3219
      %v3221 = vmul.f32 %v3110, 1.442695
      %v3222 = vpow.pop %v3221
      %v3223 = vmul.f32 %v3111, 1.442695
      %v3224 = vpow.pop %v3223
      %v3225 = vmul.f32 %v3112, 1.442695
      %v3226 = vpow.pop %v3225
      %v3227 = vmul.f32 %v3113, 1.442695
      %v3228 = vpow.pop %v3227
      %v3229 = vmul.f32 %v3114, 1.442695
      %v3230 = vpow.pop %v3229
      %v3231 = vmul.f32 %v3115, 1.442695
      %v3232 = vpow.pop %v3231
      %v3233 = vmul.f32 %v3116, 1.442695
      %v3234 = vpow.pop %v3233
      %v3235 = vmul.f32 %v3117, 1.442695
      %v3236 = vpow.pop %v3235
      %v3237 = vmul.f32 %v3118, 1.442695
      %v3238 = vpow.pop %v3237
      %v3239 = vmul.f32 %v3119, 1.442695
      %v3240 = vpow.pop %v3239
      %v3241 = vmul.f32 %v3120, 1.442695
      %v3242 = vpow.pop %v3241
      %v3243 = vmul.f32 %v3121, 1.442695
      %v3244 = vpow.pop %v3243
      %v3245 = vmul.f32 %v3122, 1.442695
      %v3246 = vpow.pop %v3245
      %v3247 = vmul.f32 %v3123, 1.442695
      %v3248 = vpow.pop %v3247
      %v3249 = vmul.f32 %v3124, 1.442695
      %v3250 = vpow.pop %v3249
      %v3251 = vmul.f32 %v3125, 1.442695
      %v3252 = vpow.pop %v3251
      %v3253 = vmul.f32 %v3126, 1.442695
      %v3254 = vpow.pop %v3253
      %v3255 = vadd.f32 %v3128, %v3130
      %3256 = vadd.xlane.f32.xlu0 %v3255
      %v3257 = vpop.xlane.xlu0 %3256
      %v3258 = vadd.f32 %v3132, %v3134
      %3259 = vadd.xlane.f32.xlu0 %v3258
      %v3260 = vpop.xlane.xlu0 %3259
      %v3261 = vadd.f32 %v3136, %v3138
      %3262 = vadd.xlane.f32.xlu0 %v3261
      %v3263 = vpop.xlane.xlu0 %3262
      %v3264 = vadd.f32 %v3140, %v3142
      %3265 = vadd.xlane.f32.xlu0 %v3264
      %v3266 = vpop.xlane.xlu0 %3265
      %v3267 = vadd.f32 %v3144, %v3146
      %3268 = vadd.xlane.f32.xlu0 %v3267
      %v3269 = vpop.xlane.xlu0 %3268
      %v3270 = vadd.f32 %v3148, %v3150
      %3271 = vadd.xlane.f32.xlu0 %v3270
      %v3272 = vpop.xlane.xlu0 %3271
      %v3273 = vadd.f32 %v3152, %v3154
      %3274 = vadd.xlane.f32.xlu0 %v3273
      %v3275 = vpop.xlane.xlu0 %3274
      %v3276 = vadd.f32 %v3156, %v3158
      %3277 = vadd.xlane.f32.xlu0 %v3276
      %v3278 = vpop.xlane.xlu0 %3277
      %v3279 = vadd.f32 %v3160, %v3162
      %3280 = vadd.xlane.f32.xlu0 %v3279
      %v3281 = vpop.xlane.xlu0 %3280
      %v3282 = vadd.f32 %v3164, %v3166
      %3283 = vadd.xlane.f32.xlu0 %v3282
      %v3284 = vpop.xlane.xlu0 %3283
      %v3285 = vadd.f32 %v3168, %v3170
      %3286 = vadd.xlane.f32.xlu0 %v3285
      %v3287 = vpop.xlane.xlu0 %3286
      %v3288 = vadd.f32 %v3172, %v3174
      %3289 = vadd.xlane.f32.xlu0 %v3288
      %v3290 = vpop.xlane.xlu0 %3289
      %v3291 = vadd.f32 %v3176, %v3178
      %3292 = vadd.xlane.f32.xlu0 %v3291
      %v3293 = vpop.xlane.xlu0 %3292
      %v3294 = vadd.f32 %v3180, %v3182
      %3295 = vadd.xlane.f32.xlu0 %v3294
      %v3296 = vpop.xlane.xlu0 %3295
      %v3297 = vadd.f32 %v3184, %v3186
      %3298 = vadd.xlane.f32.xlu0 %v3297
      %v3299 = vpop.xlane.xlu0 %3298
      %v3300 = vadd.f32 %v3188, %v3190
      %3301 = vadd.xlane.f32.xlu0 %v3300
      %v3302 = vpop.xlane.xlu0 %3301
      %v3303 = vadd.f32 %v3192, %v3194
      %3304 = vadd.xlane.f32.xlu0 %v3303
      %v3305 = vpop.xlane.xlu0 %3304
      %v3306 = vadd.f32 %v3196, %v3198
      %3307 = vadd.xlane.f32.xlu0 %v3306
      %v3308 = vpop.xlane.xlu0 %3307
      %v3309 = vadd.f32 %v3200, %v3202
      %3310 = vadd.xlane.f32.xlu0 %v3309
      %v3311 = vpop.xlane.xlu0 %3310
      %v3312 = vadd.f32 %v3204, %v3206
      %3313 = vadd.xlane.f32.xlu0 %v3312
      %v3314 = vpop.xlane.xlu0 %3313
      %v3315 = vadd.f32 %v3208, %v3210
      %3316 = vadd.xlane.f32.xlu0 %v3315
      %v3317 = vpop.xlane.xlu0 %3316
      %v3318 = vadd.f32 %v3212, %v3214
      %3319 = vadd.xlane.f32.xlu0 %v3318
      %v3320 = vpop.xlane.xlu0 %3319
      %v3321 = vadd.f32 %v3216, %v3218
      %3322 = vadd.xlane.f32.xlu0 %v3321
      %v3323 = vpop.xlane.xlu0 %3322
      %v3324 = vadd.f32 %v3220, %v3222
      %3325 = vadd.xlane.f32.xlu0 %v3324
      %v3326 = vpop.xlane.xlu0 %3325
      %v3327 = vadd.f32 %v3224, %v3226
      %3328 = vadd.xlane.f32.xlu0 %v3327
      %v3329 = vpop.xlane.xlu0 %3328
      %v3330 = vadd.f32 %v3228, %v3230
      %3331 = vadd.xlane.f32.xlu0 %v3330
      %v3332 = vpop.xlane.xlu0 %3331
      %v3333 = vadd.f32 %v3232, %v3234
      %3334 = vadd.xlane.f32.xlu0 %v3333
      %v3335 = vpop.xlane.xlu0 %3334
      %v3336 = vadd.f32 %v3236, %v3238
      %3337 = vadd.xlane.f32.xlu0 %v3336
      %v3338 = vpop.xlane.xlu0 %3337
      %v3339 = vadd.f32 %v3240, %v3242
      %3340 = vadd.xlane.f32.xlu0 %v3339
      %v3341 = vpop.xlane.xlu0 %3340
      %v3342 = vadd.f32 %v3244, %v3246
      %3343 = vadd.xlane.f32.xlu0 %v3342
      %v3344 = vpop.xlane.xlu0 %3343
      %v3345 = vadd.f32 %v3248, %v3250
      %3346 = vadd.xlane.f32.xlu0 %v3345
      %v3347 = vpop.xlane.xlu0 %3346
      %v3348 = vadd.f32 %v3252, %v3254
      %3349 = vadd.xlane.f32.xlu0 %v3348
      %v3350 = vpop.xlane.xlu0 %3349
      %v3351 = vadd.f32 %v3031, %v3257
      %v3352 = vadd.f32 %v3032, %v3260
      %v3353 = vadd.f32 %v3033, %v3263
      %v3354 = vadd.f32 %v3034, %v3266
      %v3355 = vadd.f32 %v3035, %v3269
      %v3356 = vadd.f32 %v3036, %v3272
      %v3357 = vadd.f32 %v3037, %v3275
      %v3358 = vadd.f32 %v3038, %v3278
      %v3359 = vadd.f32 %v3039, %v3281
      %v3360 = vadd.f32 %v3040, %v3284
      %v3361 = vadd.f32 %v3041, %v3287
      %v3362 = vadd.f32 %v3042, %v3290
      %v3363 = vadd.f32 %v3043, %v3293
      %v3364 = vadd.f32 %v3044, %v3296
      %v3365 = vadd.f32 %v3045, %v3299
      %v3366 = vadd.f32 %v3046, %v3302
      %v3367 = vadd.f32 %v3047, %v3305
      %v3368 = vadd.f32 %v3048, %v3308
      %v3369 = vadd.f32 %v3049, %v3311
      %v3370 = vadd.f32 %v3050, %v3314
      %v3371 = vadd.f32 %v3051, %v3317
      %v3372 = vadd.f32 %v3052, %v3320
      %v3373 = vadd.f32 %v3053, %v3323
      %v3374 = vadd.f32 %v3054, %v3326
      %v3375 = vadd.f32 %v3055, %v3329
      %v3376 = vadd.f32 %v3056, %v3332
      %v3377 = vadd.f32 %v3057, %v3335
      %v3378 = vadd.f32 %v3058, %v3338
      %v3379 = vadd.f32 %v3059, %v3341
      %v3380 = vadd.f32 %v3060, %v3344
      %v3381 = vadd.f32 %v3061, %v3347
      %v3382 = vadd.f32 %v3062, %v3350
      %vm3383 = vcmask 7168
      %3384 = vst.msk [vmem:[#allocation4] sm:$0xff] %vm3383, %v3351
      %3385 = vst.msk [vmem:[#allocation4 + $0x8] sm:$0xff] %vm3383, %v3352
      %3386 = vst.msk [vmem:[#allocation4 + $0x10] sm:$0xff] %vm3383, %v3353
      %3387 = vst.msk [vmem:[#allocation4 + $0x18] sm:$0xff] %vm3383, %v3354
      %3388 = vst.msk [vmem:[#allocation4 + $0x20] sm:$0xff] %vm3383, %v3355
      %3389 = vst.msk [vmem:[#allocation4 + $0x28] sm:$0xff] %vm3383, %v3356
      %3390 = vst.msk [vmem:[#allocation4 + $0x30] sm:$0xff] %vm3383, %v3357
      %3391 = vst.msk [vmem:[#allocation4 + $0x38] sm:$0xff] %vm3383, %v3358
      %3392 = vst.msk [vmem:[#allocation4 + $0x40] sm:$0xff] %vm3383, %v3359
      %3393 = vst.msk [vmem:[#allocation4 + $0x48] sm:$0xff] %vm3383, %v3360
      %3394 = vst.msk [vmem:[#allocation4 + $0x50] sm:$0xff] %vm3383, %v3361
      %3395 = vst.msk [vmem:[#allocation4 + $0x58] sm:$0xff] %vm3383, %v3362
      %3396 = vst.msk [vmem:[#allocation4 + $0x60] sm:$0xff] %vm3383, %v3363
      %3397 = vst.msk [vmem:[#allocation4 + $0x68] sm:$0xff] %vm3383, %v3364
      %3398 = vst.msk [vmem:[#allocation4 + $0x70] sm:$0xff] %vm3383, %v3365
      %3399 = vst.msk [vmem:[#allocation4 + $0x78] sm:$0xff] %vm3383, %v3366
      %3400 = vst.msk [vmem:[#allocation4 + $0x80] sm:$0xff] %vm3383, %v3367
      %3401 = vst.msk [vmem:[#allocation4 + $0x88] sm:$0xff] %vm3383, %v3368
      %3402 = vst.msk [vmem:[#allocation4 + $0x90] sm:$0xff] %vm3383, %v3369
      %3403 = vst.msk [vmem:[#allocation4 + $0x98] sm:$0xff] %vm3383, %v3370
      %3404 = vst.msk [vmem:[#allocation4 + $0xa0] sm:$0xff] %vm3383, %v3371
      %3405 = vst.msk [vmem:[#allocation4 + $0xa8] sm:$0xff] %vm3383, %v3372
      %3406 = vst.msk [vmem:[#allocation4 + $0xb0] sm:$0xff] %vm3383, %v3373
      %3407 = vst.msk [vmem:[#allocation4 + $0xb8] sm:$0xff] %vm3383, %v3374
      %3408 = vst.msk [vmem:[#allocation4 + $0xc0] sm:$0xff] %vm3383, %v3375
      %3409 = vst.msk [vmem:[#allocation4 + $0xc8] sm:$0xff] %vm3383, %v3376
      %3410 = vst.msk [vmem:[#allocation4 + $0xd0] sm:$0xff] %vm3383, %v3377
      %3411 = vst.msk [vmem:[#allocation4 + $0xd8] sm:$0xff] %vm3383, %v3378
      %3412 = vst.msk [vmem:[#allocation4 + $0xe0] sm:$0xff] %vm3383, %v3379
      %3413 = vst.msk [vmem:[#allocation4 + $0xe8] sm:$0xff] %vm3383, %v3380
      %3414 = vst.msk [vmem:[#allocation4 + $0xf0] sm:$0xff] %vm3383, %v3381
      %3415 = vst.msk [vmem:[#allocation4 + $0xf8] sm:$0xff] %vm3383, %v3382
      // Predicated region
      $region37: #{tpu_custom_call.1} parent=27 // pred_check
        %p3416 = pneg %p216
      $region38: #{tpu_custom_call.1} parent=27 // pred_check_branch
        %3418 = sbr.rel (%p3416) target = $region40
      $region39: #{tpu_custom_call.1} parent=27 // pred_region
        %v3419 = vld [vmem:[#allocation4] sm:$0xff]
        %v3420 = vld [vmem:[#allocation4 + $0x8] sm:$0xff]
        %v3421 = vld [vmem:[#allocation4 + $0x10] sm:$0xff]
        %v3422 = vld [vmem:[#allocation4 + $0x18] sm:$0xff]
        %v3423 = vld [vmem:[#allocation4 + $0x20] sm:$0xff]
        %v3424 = vld [vmem:[#allocation4 + $0x28] sm:$0xff]
        %v3425 = vld [vmem:[#allocation4 + $0x30] sm:$0xff]
        %v3426 = vld [vmem:[#allocation4 + $0x38] sm:$0xff]
        %v3427 = vld [vmem:[#allocation4 + $0x40] sm:$0xff]
        %v3428 = vld [vmem:[#allocation4 + $0x48] sm:$0xff]
        %v3429 = vld [vmem:[#allocation4 + $0x50] sm:$0xff]
        %v3430 = vld [vmem:[#allocation4 + $0x58] sm:$0xff]
        %v3431 = vld [vmem:[#allocation4 + $0x60] sm:$0xff]
        %v3432 = vld [vmem:[#allocation4 + $0x68] sm:$0xff]
        %v3433 = vld [vmem:[#allocation4 + $0x70] sm:$0xff]
        %v3434 = vld [vmem:[#allocation4 + $0x78] sm:$0xff]
        %v3435 = vld [vmem:[#allocation4 + $0x80] sm:$0xff]
        %v3436 = vld [vmem:[#allocation4 + $0x88] sm:$0xff]
        %v3437 = vld [vmem:[#allocation4 + $0x90] sm:$0xff]
        %v3438 = vld [vmem:[#allocation4 + $0x98] sm:$0xff]
        %v3439 = vld [vmem:[#allocation4 + $0xa0] sm:$0xff]
        %v3440 = vld [vmem:[#allocation4 + $0xa8] sm:$0xff]
        %v3441 = vld [vmem:[#allocation4 + $0xb0] sm:$0xff]
        %v3442 = vld [vmem:[#allocation4 + $0xb8] sm:$0xff]
        %v3443 = vld [vmem:[#allocation4 + $0xc0] sm:$0xff]
        %v3444 = vld [vmem:[#allocation4 + $0xc8] sm:$0xff]
        %v3445 = vld [vmem:[#allocation4 + $0xd0] sm:$0xff]
        %v3446 = vld [vmem:[#allocation4 + $0xd8] sm:$0xff]
        %v3447 = vld [vmem:[#allocation4 + $0xe0] sm:$0xff]
        %v3448 = vld [vmem:[#allocation4 + $0xe8] sm:$0xff]
        %v3449 = vld [vmem:[#allocation4 + $0xf0] sm:$0xff]
        %v3450 = vld [vmem:[#allocation4 + $0xf8] sm:$0xff]
        %v3451 = vadd.f32 %v3419, 0.0
        %v3452 = vadd.f32 %v3420, 0.0
        %v3453 = vadd.f32 %v3421, 0.0
        %v3454 = vadd.f32 %v3422, 0.0
        %v3455 = vadd.f32 %v3423, 0.0
        %v3456 = vadd.f32 %v3424, 0.0
        %v3457 = vadd.f32 %v3425, 0.0
        %v3458 = vadd.f32 %v3426, 0.0
        %v3459 = vadd.f32 %v3427, 0.0
        %v3460 = vadd.f32 %v3428, 0.0
        %v3461 = vadd.f32 %v3429, 0.0
        %v3462 = vadd.f32 %v3430, 0.0
        %v3463 = vadd.f32 %v3431, 0.0
        %v3464 = vadd.f32 %v3432, 0.0
        %v3465 = vadd.f32 %v3433, 0.0
        %v3466 = vadd.f32 %v3434, 0.0
        %v3467 = vadd.f32 %v3435, 0.0
        %v3468 = vadd.f32 %v3436, 0.0
        %v3469 = vadd.f32 %v3437, 0.0
        %v3470 = vadd.f32 %v3438, 0.0
        %v3471 = vadd.f32 %v3439, 0.0
        %v3472 = vadd.f32 %v3440, 0.0
        %v3473 = vadd.f32 %v3441, 0.0
        %v3474 = vadd.f32 %v3442, 0.0
        %v3475 = vadd.f32 %v3443, 0.0
        %v3476 = vadd.f32 %v3444, 0.0
        %v3477 = vadd.f32 %v3445, 0.0
        %v3478 = vadd.f32 %v3446, 0.0
        %v3479 = vadd.f32 %v3447, 0.0
        %v3480 = vadd.f32 %v3448, 0.0
        %v3481 = vadd.f32 %v3449, 0.0
        %v3482 = vadd.f32 %v3450, 0.0
        %v3483 = vlog2.pop %v3451
        %v3484 = vmul.f32 %v3483, 0.6931472
        %v3485 = vlog2.pop %v3452
        %v3486 = vmul.f32 %v3485, 0.6931472
        %v3487 = vlog2.pop %v3453
        %v3488 = vmul.f32 %v3487, 0.6931472
        %v3489 = vlog2.pop %v3454
        %v3490 = vmul.f32 %v3489, 0.6931472
        %v3491 = vlog2.pop %v3455
        %v3492 = vmul.f32 %v3491, 0.6931472
        %v3493 = vlog2.pop %v3456
        %v3494 = vmul.f32 %v3493, 0.6931472
        %v3495 = vlog2.pop %v3457
        %v3496 = vmul.f32 %v3495, 0.6931472
        %v3497 = vlog2.pop %v3458
        %v3498 = vmul.f32 %v3497, 0.6931472
        %v3499 = vlog2.pop %v3459
        %v3500 = vmul.f32 %v3499, 0.6931472
        %v3501 = vlog2.pop %v3460
        %v3502 = vmul.f32 %v3501, 0.6931472
        %v3503 = vlog2.pop %v3461
        %v3504 = vmul.f32 %v3503, 0.6931472
        %v3505 = vlog2.pop %v3462
        %v3506 = vmul.f32 %v3505, 0.6931472
        %v3507 = vlog2.pop %v3463
        %v3508 = vmul.f32 %v3507, 0.6931472
        %v3509 = vlog2.pop %v3464
        %v3510 = vmul.f32 %v3509, 0.6931472
        %v3511 = vlog2.pop %v3465
        %v3512 = vmul.f32 %v3511, 0.6931472
        %v3513 = vlog2.pop %v3466
        %v3514 = vmul.f32 %v3513, 0.6931472
        %v3515 = vlog2.pop %v3467
        %v3516 = vmul.f32 %v3515, 0.6931472
        %v3517 = vlog2.pop %v3468
        %v3518 = vmul.f32 %v3517, 0.6931472
        %v3519 = vlog2.pop %v3469
        %v3520 = vmul.f32 %v3519, 0.6931472
        %v3521 = vlog2.pop %v3470
        %v3522 = vmul.f32 %v3521, 0.6931472
        %v3523 = vlog2.pop %v3471
        %v3524 = vmul.f32 %v3523, 0.6931472
        %v3525 = vlog2.pop %v3472
        %v3526 = vmul.f32 %v3525, 0.6931472
        %v3527 = vlog2.pop %v3473
        %v3528 = vmul.f32 %v3527, 0.6931472
        %v3529 = vlog2.pop %v3474
        %v3530 = vmul.f32 %v3529, 0.6931472
        %v3531 = vlog2.pop %v3475
        %v3532 = vmul.f32 %v3531, 0.6931472
        %v3533 = vlog2.pop %v3476
        %v3534 = vmul.f32 %v3533, 0.6931472
        %v3535 = vlog2.pop %v3477
        %v3536 = vmul.f32 %v3535, 0.6931472
        %v3537 = vlog2.pop %v3478
        %v3538 = vmul.f32 %v3537, 0.6931472
        %v3539 = vlog2.pop %v3479
        %v3540 = vmul.f32 %v3539, 0.6931472
        %v3541 = vlog2.pop %v3480
        %v3542 = vmul.f32 %v3541, 0.6931472
        %v3543 = vlog2.pop %v3481
        %v3544 = vmul.f32 %v3543, 0.6931472
        %v3545 = vlog2.pop %v3482
        %v3546 = vmul.f32 %v3545, 0.6931472
        %v3547 = vadd.f32 %v3484, 14.285714
        %v3548 = vadd.f32 %v3486, 14.285714
        %v3549 = vadd.f32 %v3488, 14.285714
        %v3550 = vadd.f32 %v3490, 14.285714
        %v3551 = vadd.f32 %v3492, 14.285714
        %v3552 = vadd.f32 %v3494, 14.285714
        %v3553 = vadd.f32 %v3496, 14.285714
        %v3554 = vadd.f32 %v3498, 14.285714
        %v3555 = vadd.f32 %v3500, 14.285714
        %v3556 = vadd.f32 %v3502, 14.285714
        %v3557 = vadd.f32 %v3504, 14.285714
        %v3558 = vadd.f32 %v3506, 14.285714
        %v3559 = vadd.f32 %v3508, 14.285714
        %v3560 = vadd.f32 %v3510, 14.285714
        %v3561 = vadd.f32 %v3512, 14.285714
        %v3562 = vadd.f32 %v3514, 14.285714
        %v3563 = vadd.f32 %v3516, 14.285714
        %v3564 = vadd.f32 %v3518, 14.285714
        %v3565 = vadd.f32 %v3520, 14.285714
        %v3566 = vadd.f32 %v3522, 14.285714
        %v3567 = vadd.f32 %v3524, 14.285714
        %v3568 = vadd.f32 %v3526, 14.285714
        %v3569 = vadd.f32 %v3528, 14.285714
        %v3570 = vadd.f32 %v3530, 14.285714
        %v3571 = vadd.f32 %v3532, 14.285714
        %v3572 = vadd.f32 %v3534, 14.285714
        %v3573 = vadd.f32 %v3536, 14.285714
        %v3574 = vadd.f32 %v3538, 14.285714
        %v3575 = vadd.f32 %v3540, 14.285714
        %v3576 = vadd.f32 %v3542, 14.285714
        %v3577 = vadd.f32 %v3544, 14.285714
        %v3578 = vadd.f32 %v3546, 14.285714
        %v3579 = vld [vmem:[#allocation3] sm:$0xff]
        %v3580 = vld [vmem:[#allocation3 + $0x8] sm:$0xff]
        %v3581 = vld [vmem:[#allocation3 + $0x10] sm:$0xff]
        %v3582 = vld [vmem:[#allocation3 + $0x18] sm:$0xff]
        %v3583 = vld [vmem:[#allocation3 + $0x20] sm:$0xff]
        %v3584 = vld [vmem:[#allocation3 + $0x28] sm:$0xff]
        %v3585 = vld [vmem:[#allocation3 + $0x30] sm:$0xff]
        %v3586 = vld [vmem:[#allocation3 + $0x38] sm:$0xff]
        %v3587 = vld [vmem:[#allocation3 + $0x40] sm:$0xff]
        %v3588 = vld [vmem:[#allocation3 + $0x48] sm:$0xff]
        %v3589 = vld [vmem:[#allocation3 + $0x50] sm:$0xff]
        %v3590 = vld [vmem:[#allocation3 + $0x58] sm:$0xff]
        %v3591 = vld [vmem:[#allocation3 + $0x60] sm:$0xff]
        %v3592 = vld [vmem:[#allocation3 + $0x68] sm:$0xff]
        %v3593 = vld [vmem:[#allocation3 + $0x70] sm:$0xff]
        %v3594 = vld [vmem:[#allocation3 + $0x78] sm:$0xff]
        %v3595 = vld [vmem:[#allocation3 + $0x80] sm:$0xff]
        %v3596 = vld [vmem:[#allocation3 + $0x88] sm:$0xff]
        %v3597 = vld [vmem:[#allocation3 + $0x90] sm:$0xff]
        %v3598 = vld [vmem:[#allocation3 + $0x98] sm:$0xff]
        %v3599 = vld [vmem:[#allocation3 + $0xa0] sm:$0xff]
        %v3600 = vld [vmem:[#allocation3 + $0xa8] sm:$0xff]
        %v3601 = vld [vmem:[#allocation3 + $0xb0] sm:$0xff]
        %v3602 = vld [vmem:[#allocation3 + $0xb8] sm:$0xff]
        %v3603 = vld [vmem:[#allocation3 + $0xc0] sm:$0xff]
        %v3604 = vld [vmem:[#allocation3 + $0xc8] sm:$0xff]
        %v3605 = vld [vmem:[#allocation3 + $0xd0] sm:$0xff]
        %v3606 = vld [vmem:[#allocation3 + $0xd8] sm:$0xff]
        %v3607 = vld [vmem:[#allocation3 + $0xe0] sm:$0xff]
        %v3608 = vld [vmem:[#allocation3 + $0xe8] sm:$0xff]
        %v3609 = vld [vmem:[#allocation3 + $0xf0] sm:$0xff]
        %v3610 = vld [vmem:[#allocation3 + $0xf8] sm:$0xff]
        %v3611 = vsub.f32 %v3547, %v3579
        %v3612 = vsub.f32 %v3548, %v3580
        %v3613 = vsub.f32 %v3549, %v3581
        %v3614 = vsub.f32 %v3550, %v3582
        %v3615 = vsub.f32 %v3551, %v3583
        %v3616 = vsub.f32 %v3552, %v3584
        %v3617 = vsub.f32 %v3553, %v3585
        %v3618 = vsub.f32 %v3554, %v3586
        %v3619 = vsub.f32 %v3555, %v3587
        %v3620 = vsub.f32 %v3556, %v3588
        %v3621 = vsub.f32 %v3557, %v3589
        %v3622 = vsub.f32 %v3558, %v3590
        %v3623 = vsub.f32 %v3559, %v3591
        %v3624 = vsub.f32 %v3560, %v3592
        %v3625 = vsub.f32 %v3561, %v3593
        %v3626 = vsub.f32 %v3562, %v3594
        %v3627 = vsub.f32 %v3563, %v3595
        %v3628 = vsub.f32 %v3564, %v3596
        %v3629 = vsub.f32 %v3565, %v3597
        %v3630 = vsub.f32 %v3566, %v3598
        %v3631 = vsub.f32 %v3567, %v3599
        %v3632 = vsub.f32 %v3568, %v3600
        %v3633 = vsub.f32 %v3569, %v3601
        %v3634 = vsub.f32 %v3570, %v3602
        %v3635 = vsub.f32 %v3571, %v3603
        %v3636 = vsub.f32 %v3572, %v3604
        %v3637 = vsub.f32 %v3573, %v3605
        %v3638 = vsub.f32 %v3574, %v3606
        %v3639 = vsub.f32 %v3575, %v3607
        %v3640 = vsub.f32 %v3576, %v3608
        %v3641 = vsub.f32 %v3577, %v3609
        %v3642 = vsub.f32 %v3578, %v3610
        %v3643 = vsel %vm3383, %v3611, 0.0
        %v3644 = vsel %vm3383, %v3612, 0.0
        %v3645 = vadd.f32 %v3643, %v3644
        %v3646 = vsel %vm3383, %v3613, 0.0
        %v3647 = vadd.f32 %v3645, %v3646
        %v3648 = vsel %vm3383, %v3614, 0.0
        %v3649 = vadd.f32 %v3647, %v3648
        %v3650 = vsel %vm3383, %v3615, 0.0
        %v3651 = vadd.f32 %v3649, %v3650
        %v3652 = vsel %vm3383, %v3616, 0.0
        %v3653 = vadd.f32 %v3651, %v3652
        %v3654 = vsel %vm3383, %v3617, 0.0
        %v3655 = vadd.f32 %v3653, %v3654
        %v3656 = vsel %vm3383, %v3618, 0.0
        %v3657 = vadd.f32 %v3655, %v3656
        %v3658 = vsel %vm3383, %v3619, 0.0
        %v3659 = vadd.f32 %v3657, %v3658
        %v3660 = vsel %vm3383, %v3620, 0.0
        %v3661 = vadd.f32 %v3659, %v3660
        %v3662 = vsel %vm3383, %v3621, 0.0
        %v3663 = vadd.f32 %v3661, %v3662
        %v3664 = vsel %vm3383, %v3622, 0.0
        %v3665 = vadd.f32 %v3663, %v3664
        %v3666 = vsel %vm3383, %v3623, 0.0
        %v3667 = vadd.f32 %v3665, %v3666
        %v3668 = vsel %vm3383, %v3624, 0.0
        %v3669 = vadd.f32 %v3667, %v3668
        %v3670 = vsel %vm3383, %v3625, 0.0
        %v3671 = vadd.f32 %v3669, %v3670
        %v3672 = vsel %vm3383, %v3626, 0.0
        %v3673 = vadd.f32 %v3671, %v3672
        %v3674 = vsel %vm3383, %v3627, 0.0
        %v3675 = vadd.f32 %v3673, %v3674
        %v3676 = vsel %vm3383, %v3628, 0.0
        %v3677 = vadd.f32 %v3675, %v3676
        %v3678 = vsel %vm3383, %v3629, 0.0
        %v3679 = vadd.f32 %v3677, %v3678
        %v3680 = vsel %vm3383, %v3630, 0.0
        %v3681 = vadd.f32 %v3679, %v3680
        %v3682 = vsel %vm3383, %v3631, 0.0
        %v3683 = vadd.f32 %v3681, %v3682
        %v3684 = vsel %vm3383, %v3632, 0.0
        %v3685 = vadd.f32 %v3683, %v3684
        %v3686 = vsel %vm3383, %v3633, 0.0
        %v3687 = vadd.f32 %v3685, %v3686
        %v3688 = vsel %vm3383, %v3634, 0.0
        %v3689 = vadd.f32 %v3687, %v3688
        %v3690 = vsel %vm3383, %v3635, 0.0
        %v3691 = vadd.f32 %v3689, %v3690
        %v3692 = vsel %vm3383, %v3636, 0.0
        %v3693 = vadd.f32 %v3691, %v3692
        %v3694 = vsel %vm3383, %v3637, 0.0
        %v3695 = vadd.f32 %v3693, %v3694
        %v3696 = vsel %vm3383, %v3638, 0.0
        %v3697 = vadd.f32 %v3695, %v3696
        %v3698 = vsel %vm3383, %v3639, 0.0
        %v3699 = vadd.f32 %v3697, %v3698
        %v3700 = vsel %vm3383, %v3640, 0.0
        %v3701 = vadd.f32 %v3699, %v3700
        %v3702 = vsel %vm3383, %v3641, 0.0
        %v3703 = vadd.f32 %v3701, %v3702
        %v3704 = vsel %vm3383, %v3642, 0.0
        %v3705 = vadd.f32 %v3703, %v3704
        %3706 = vadd.xlane.f32.xlu0 %v3705
        %v3707 = vpop.xlane.xlu0 %3706
        %v3708 = vrot.slane %v3707, 4
        %v3709 = vadd.f32 %v3707, %v3708
        %v3710 = vrot.slane %v3709, 2
        %v3711 = vadd.f32 %v3709, %v3710
        %v3712 = vrot.slane %v3711, 1
        %v3713 = vadd.f32 %v3711, %v3712
        %s3714 = vtos %v3713
        %v3715 = vstv %s3714
        %vm3716 = vcmask 0
        %3717 = vst.msk [vmem:[%s214] sm:$0x1] %vm3716, %v3715
      $region40: #{tpu_custom_call.1} parent=27 // pred_fallthru
        _
      %s3718 = sadd.s32 %s18, %s19
      %p3719 = scmp.lt.s32.totalorder %s3718, 1
      %s3720 = scalar_select %p3719, %s3718, 1
      %s3721 = scalar_lea.vmem %s2, %s3720
      // Predicated region
      $region41: #{tpu_custom_call.1} parent=27 // pred_check
        %p3722 = pneg %p108
      $region42: #{tpu_custom_call.1} parent=27 // pred_check_branch
        %3724 = sbr.rel (%p3722) target = $region44
      $region43: #{tpu_custom_call.1} parent=27 // pred_region
        %s3725 = sadd.s32 %s18, %s19
      $region44: #{tpu_custom_call.1} parent=27 // pred_fallthru
        _
    $region28: #{tpu_custom_call.1} parent=5 // pred_fallthru
      _
    %p3726 = scmp.le.s32.totalorder 2, %s8
    // Predicated region
    $region45: #{tpu_custom_call.1} parent=5 // pred_check
      %p3727 = pneg %p3726
    $region46: #{tpu_custom_call.1} parent=5 // pred_check_branch
      %3729 = sbr.rel (%p3727) target = $region48
    $region47: #{tpu_custom_call.1} parent=5 // pred_region
      %s3730 = ssub.s32 %s8, 2
      // Predicated region
      $region49: #{tpu_custom_call.1} parent=47 // pred_check
        %p3731 = pneg %p114
      $region50: #{tpu_custom_call.1} parent=47 // pred_check_branch
        %3733 = sbr.rel (%p3731) target = $region52
      $region51: #{tpu_custom_call.1} parent=47 // pred_region
        %s3734 = sadd.s32 %s21, %s22
        %p3735 = scmp.lt.s32.totalorder %s3734, 1
        %s3736 = scalar_select %p3735, %s3734, 1
        %s3737 = scalar_lea.vmem %s2, %s3736
      $region52: #{tpu_custom_call.1} parent=47 // pred_fallthru
        _
    $region48: #{tpu_custom_call.1} parent=5 // pred_fallthru
      _
  $region6: #{tpu_custom_call.1} parent=0 // loop_footer
    %s12 = sadd.s32 1, %s8
  $region7: #{tpu_custom_call.1} parent=0 // loop_footer_branch
    %7 = sbr.rel target = $region3
  $region8: #{tpu_custom_call.1} parent=0 // loop_exit
    _

</llo_original>
